<compile_context>
chip_gen: v7x
topology: tpu7x:2x2x1
jax: 0.10.0
libtpu: 0.0.40
codegen_flags: <defaults>
</compile_context>

<pallas_src>
import math

import jax
import jax.numpy as jnp
from jax import lax
from jax.experimental import pallas as pl
from jax.experimental.pallas import tpu as pltpu


# ----------------------------------------------------------------------------
# Pallas kernels
# ----------------------------------------------------------------------------
def _proj_first_kernel(x_ref, w_ref, b_ref, gf_ref, gb_ref):
    """Layer-0 input projection over one row chunk.

    x_ref : (R, D)    flattened (time*batch, features) chunk
    w_ref : (D, 8H)   [Wih_fwd | Wih_bwd] (pre-transposed)
    b_ref : (1, 8H)   [(b_ih+b_hh)_fwd | (b_ih+b_hh)_bwd]
    gf_ref: (R, 4H)   forward-direction gate pre-activations
    gb_ref: (R, 4H)   backward-direction gate pre-activations
    """
    g4 = gf_ref.shape[-1]
    g = jnp.dot(x_ref[...], w_ref[...], preferred_element_type=jnp.float32) + b_ref[...]
    gf_ref[...] = g[:, :g4]
    gb_ref[...] = g[:, g4:]


def _proj_next_kernel(xf_ref, xb_ref, wf_ref, wb_ref, b_ref, gf_ref, gb_ref):
    """Layer >=1 input projection; input is (out_f, out_b) -> no HBM concat."""
    g4 = gf_ref.shape[-1]
    g = (jnp.dot(xf_ref[...], wf_ref[...], preferred_element_type=jnp.float32)
         + jnp.dot(xb_ref[...], wb_ref[...], preferred_element_type=jnp.float32)
         + b_ref[...])
    gf_ref[...] = g[:, :g4]
    gb_ref[...] = g[:, g4:]


def _cell(gates, h, c, whh, H):
    """One LSTM cell update.  gates already contain x@Wih + b."""
    g = gates + jnp.dot(h, whh, preferred_element_type=jnp.float32)
    i = jax.nn.sigmoid(g[:, 0 * H:1 * H])
    f = jax.nn.sigmoid(g[:, 1 * H:2 * H])
    gg = jnp.tanh(g[:, 2 * H:3 * H])
    o = jax.nn.sigmoid(g[:, 3 * H:4 * H])
    c_new = f * c + i * gg
    h_new = o * jnp.tanh(c_new)
    return h_new, c_new


def _unroll_factor(Tc):
    """Full unroll for short chunks; bounded unroll otherwise."""
    if Tc <= 32:
        return True
    for u in (8, 4, 2):
        if Tc % u == 0:
            return u
    return 1


def _recur_kernel(gf_ref, gb_ref, whhf_ref, whhb_ref, of_ref, ob_ref,
                  hf, cf, hb, cb):
    """Fused forward+backward recurrence over one time chunk.

    gf_ref : (Tc, B, 4H)  forward-time chunk  (grid chunk i)
    gb_ref : (Tc, B, 4H)  reverse-time chunk  (grid chunk nc-1-i)
    whh*   : (H, 4H)
    of_ref : (Tc, B, H)   chunk i        (forward hidden states)
    ob_ref : (Tc, B, H)   chunk nc-1-i   (backward hidden states, natural order)
    hf,cf,hb,cb : (B, H) VMEM scratch carried across the sequential T grid.
    """
    Tc = gf_ref.shape[0]
    H = whhf_ref.shape[0]

    @pl.when(pl.program_id(0) == 0)
    def _init():
        hf[...] = jnp.zeros_like(hf)
        cf[...] = jnp.zeros_like(cf)
        hb[...] = jnp.zeros_like(hb)
        cb[...] = jnp.zeros_like(cb)

    # Hoist weight loads out of the recurrent loop.
    whh_f = whhf_ref[...]
    whh_b = whhb_ref[...]

    def step(lt, carry):
        hf_v, cf_v, hb_v, cb_v = carry
        # Forward direction: local time lt (ascending global time).
        hf_n, cf_n = _cell(gf_ref[lt], hf_v, cf_v, whh_f, H)
        of_ref[lt] = hf_n
        # Backward direction: local time Tc-1-lt (descending global time).
        rt = Tc - 1 - lt
        hb_n, cb_n = _cell(gb_ref[rt], hb_v, cb_v, whh_b, H)
        ob_ref[rt] = hb_n
        return (hf_n, cf_n, hb_n, cb_n)

    hf_v, cf_v, hb_v, cb_v = lax.fori_loop(
        0, Tc, step, (hf[...], cf[...], hb[...], cb[...]),
        unroll=_unroll_factor(Tc))

    # One scratch write per chunk (carry to the next grid iteration).
    hf[...] = hf_v
    cf[...] = cf_v
    hb[...] = hb_v
    cb[...] = cb_v


def _recur_last_kernel(gf_ref, gbl_ref, whhf_ref, lwf_ref, lwb_ref, lb_ref,
                       out_ref, hf, cf):
    """Last layer: only out[:, -1, :] @ W_lin + b_lin is needed.

    The forward direction runs the full recurrence.  The backward direction's
    hidden state at t = T-1 is just one cell step from the zero state (it is the
    FIRST backward step), so the full backward recurrence and all per-timestep
    HBM writes of the last layer are skipped, and the Linear layer is fused in.

    gf_ref : (Tc, B, 4H)  forward-time chunk (grid chunk i)
    gbl_ref: (Tc, B, 4H)  the LAST time chunk (constant index map -> fetched once);
                          only its last row (t = T-1) is used.
    out_ref: (B, F_out)   single resident block, written at the last iteration.
    """
    Tc = gf_ref.shape[0]
    H = whhf_ref.shape[0]

    @pl.when(pl.program_id(0) == 0)
    def _init():
        hf[...] = jnp.zeros_like(hf)
        cf[...] = jnp.zeros_like(cf)

    whh_f = whhf_ref[...]

    def step(lt, carry):
        hf_v, cf_v = carry
        hf_n, cf_n = _cell(gf_ref[lt], hf_v, cf_v, whh_f, H)
        return (hf_n, cf_n)

    hf_v, cf_v = lax.fori_loop(0, Tc, step, (hf[...], cf[...]),
                               unroll=_unroll_factor(Tc))
    hf[...] = hf_v
    cf[...] = cf_v

    @pl.when(pl.program_id(0) == pl.num_programs(0) - 1)
    def _finish():
        # Backward hidden at t = T-1: one cell step from zero state
        # (c_prev = 0  =>  c = i * g;  h_prev = 0  =>  no Whh term).
        g = gbl_ref[Tc - 1]                                  # (B, 4H)
        i = jax.nn.sigmoid(g[:, 0 * H:1 * H])
        gg = jnp.tanh(g[:, 2 * H:3 * H])
        o = jax.nn.sigmoid(g[:, 3 * H:4 * H])
        hb_last = o * jnp.tanh(i * gg)                       # (B, H)
        out_ref[...] = (
            jnp.dot(hf_v, lwf_ref[...], preferred_element_type=jnp.float32)
            + jnp.dot(hb_last, lwb_ref[...], preferred_element_type=jnp.float32)
            + lb_ref[...]
        )


# ----------------------------------------------------------------------------
# Wrappers (grids / BlockSpecs)
# ----------------------------------------------------------------------------
def _pick_time_chunk(T, B, H, target=256, vmem_budget=24 << 20):
    """Largest time chunk that divides T, keeps projection row blocks 8-aligned,
    and keeps the recurrence's pipelined VMEM footprint under budget."""
    # Per-timestep bytes resident in the recurrence kernel (double-buffered
    # gf/gb inputs + of/ob outputs, f32).
    per_t = (2 * B * 4 * H + 2 * B * H) * 4 * 2
    cap = max(1, min(target, vmem_budget // max(per_t, 1)))
    if T <= cap:
        return T
    for tc in range(min(cap, T), 0, -1):
        if T % tc == 0 and (tc * B) % 8 == 0:
            return tc
    for tc in range(min(cap, T), 0, -1):        # relax 8-alignment (still legal
        if T % tc == 0:                         # when tc*B == full row extent)
            return tc
    return T


def _project_first(x2d, w, b, tc, B):
    R, D = x2d.shape
    G8 = w.shape[1]
    G4 = G8 // 2
    rows = tc * B
    nc = R // rows
    return pl.pallas_call(
        _proj_first_kernel,
        grid=(nc,),
        in_specs=[
            pl.BlockSpec((rows, D), lambda i: (i, 0)),
            pl.BlockSpec((D, G8), lambda i: (0, 0)),
            pl.BlockSpec((1, G8), lambda i: (0, 0)),
        ],
        out_specs=(
            pl.BlockSpec((rows, G4), lambda i: (i, 0)),
            pl.BlockSpec((rows, G4), lambda i: (i, 0)),
        ),
        out_shape=(
            jax.ShapeDtypeStruct((R, G4), jnp.float32),
            jax.ShapeDtypeStruct((R, G4), jnp.float32),
        ),
        compiler_params=pltpu.CompilerParams(dimension_semantics=("parallel",)),
    )(x2d, w, b)


def _project_next(xf2d, xb2d, wf, wb, b, tc, B):
    R, H = xf2d.shape
    G8 = wf.shape[1]
    G4 = G8 // 2
    rows = tc * B
    nc = R // rows
    return pl.pallas_call(
        _proj_next_kernel,
        grid=(nc,),
        in_specs=[
            pl.BlockSpec((rows, H), lambda i: (i, 0)),
            pl.BlockSpec((rows, H), lambda i: (i, 0)),
            pl.BlockSpec((H, G8), lambda i: (0, 0)),
            pl.BlockSpec((H, G8), lambda i: (0, 0)),
            pl.BlockSpec((1, G8), lambda i: (0, 0)),
        ],
        out_specs=(
            pl.BlockSpec((rows, G4), lambda i: (i, 0)),
            pl.BlockSpec((rows, G4), lambda i: (i, 0)),
        ),
        out_shape=(
            jax.ShapeDtypeStruct((R, G4), jnp.float32),
            jax.ShapeDtypeStruct((R, G4), jnp.float32),
        ),
        compiler_params=pltpu.CompilerParams(dimension_semantics=("parallel",)),
    )(xf2d, xb2d, wf, wb, b)


def _recurrence(gf, gb, whh_f, whh_b, tc):
    T, B, G4 = gf.shape
    H = whh_f.shape[0]
    nc = T // tc
    return pl.pallas_call(
        _recur_kernel,
        grid=(nc,),
        in_specs=[
            pl.BlockSpec((tc, B, G4), lambda i: (i, 0, 0)),
            pl.BlockSpec((tc, B, G4), lambda i: (nc - 1 - i, 0, 0)),
            pl.BlockSpec((H, G4), lambda i: (0, 0)),
            pl.BlockSpec((H, G4), lambda i: (0, 0)),
        ],
        out_specs=(
            pl.BlockSpec((tc, B, H), lambda i: (i, 0, 0)),
            pl.BlockSpec((tc, B, H), lambda i: (nc - 1 - i, 0, 0)),
        ),
        out_shape=(
            jax.ShapeDtypeStruct((T, B, H), jnp.float32),
            jax.ShapeDtypeStruct((T, B, H), jnp.float32),
        ),
        scratch_shapes=[
            pltpu.VMEM((B, H), jnp.float32),
            pltpu.VMEM((B, H), jnp.float32),
            pltpu.VMEM((B, H), jnp.float32),
            pltpu.VMEM((B, H), jnp.float32),
        ],
        compiler_params=pltpu.CompilerParams(dimension_semantics=("arbitrary",)),
    )(gf, gb, whh_f, whh_b)


def _recurrence_last(gf, gb, whh_f, lin_wf, lin_wb, lin_b, tc):
    T, B, G4 = gf.shape
    H = whh_f.shape[0]
    F = lin_wf.shape[1]
    nc = T // tc
    return pl.pallas_call(
        _recur_last_kernel,
        grid=(nc,),
        in_specs=[
            pl.BlockSpec((tc, B, G4), lambda i: (i, 0, 0)),
            pl.BlockSpec((tc, B, G4), lambda i: (nc - 1, 0, 0)),
            pl.BlockSpec((H, G4), lambda i: (0, 0)),
            pl.BlockSpec((H, F), lambda i: (0, 0)),
            pl.BlockSpec((H, F), lambda i: (0, 0)),
            pl.BlockSpec((1, F), lambda i: (0, 0)),
        ],
        out_specs=pl.BlockSpec((B, F), lambda i: (0, 0)),
        out_shape=jax.ShapeDtypeStruct((B, F), jnp.float32),
        scratch_shapes=[
            pltpu.VMEM((B, H), jnp.float32),
            pltpu.VMEM((B, H), jnp.float32),
        ],
        compiler_params=pltpu.CompilerParams(dimension_semantics=("arbitrary",)),
    )(gf, gb, whh_f, lin_wf, lin_wb, lin_b)


def bilstm_forward(x, params):
    """x: (B, T, F) batch_first; returns (B, forecast_length)."""
    x = x.astype(jnp.float32)
    B, T, _ = x.shape
    layers = params["layers"]
    n_layers = len(layers)
    H = layers[0]["whh_f"].shape[0]
    tc = _pick_time_chunk(T, B, H)

    xt = jnp.transpose(x, (1, 0, 2))                   # (T, B, F) time-major
    xf_rows = xt.reshape(T * B, -1)                    # flattened rows for projection
    xb_rows = None
    y = None
    for li, lp in enumerate(layers):
        # Phase 1: hoisted input projection (one big matmul over the sequence).
        if li == 0:
            gf2, gb2 = _project_first(xf_rows, lp["w_in"], lp["b"], tc, B)
        else:
            gf2, gb2 = _project_next(xf_rows, xb_rows, lp["w_in_f"], lp["w_in_b"],
                                     lp["b"], tc, B)
        gf = gf2.reshape(T, B, 4 * H)
        gb = gb2.reshape(T, B, 4 * H)

        # Phase 2: fused bidirectional recurrence.
        if li < n_layers - 1:
            # TODO(synk): inter-layer dropout (0.3) is train-only; identity here.
            of, ob = _recurrence(gf, gb, lp["whh_f"], lp["whh_b"], tc)
            xf_rows = of.reshape(T * B, H)
            xb_rows = ob.reshape(T * B, H)
        else:
            y = _recurrence_last(gf, gb, lp["whh_f"],
                                 params["lin_wf"], params["lin_wb"],
                                 params["lin_b"], tc)
    return y


# ----------------------------------------------------------------------------
# Parameter init (PyTorch-style U(-1/sqrt(H), 1/sqrt(H))) and prep
# ----------------------------------------------------------------------------
def init_raw_params(key, features, hidden, n_layers, forecast):
    k = 1.0 / math.sqrt(hidden)
    raw_layers = []
    for layer in range(n_layers):
        d_in = features if layer == 0 else 2 * hidden
        dirs = []
        for _ in range(2):                       # forward, backward
            key, k1, k2, k3, k4 = jax.random.split(key, 5)
            w_ih = jax.random.uniform(k1, (4 * hidden, d_in), jnp.float32, -k, k)
            w_hh = jax.random.uniform(k2, (4 * hidden, hidden), jnp.float32, -k, k)
            b_ih = jax.random.uniform(k3, (4 * hidden,), jnp.float32, -k, k)
            b_hh = jax.random.uniform(k4, (4 * hidden,), jnp.float32, -k, k)
            dirs.append((w_ih, w_hh, b_ih, b_hh))
        raw_layers.append(dirs)
    klin = 1.0 / math.sqrt(2 * hidden)
    key, k1, k2 = jax.random.split(key, 3)
    lin_w = jax.random.uniform(k1, (forecast, 2 * hidden), jnp.float32, -klin, klin)
    lin_b = jax.random.uniform(k2, (forecast,), jnp.float32, -klin, klin)
    return raw_layers, lin_w, lin_b


def prep_kernel_params(raw_layers, lin_w, lin_b, hidden):
    H = hidden
    layers = []
    for li, dirs in enumerate(raw_layers):
        (wif, whf, bif, bhf), (wib, whb, bib, bhb) = dirs
        w_in_cat = jnp.concatenate([wif.T, wib.T], axis=1)          # (D_in, 8H)
        b_cat = jnp.concatenate([bif + bhf, bib + bhb])[None, :]    # (1, 8H)
        lp = {"b": b_cat, "whh_f": whf.T, "whh_b": whb.T}
        if li == 0:
            lp["w_in"] = w_in_cat
        else:  # input of later layers is [out_f | out_b]; split rows to skip concat
            lp["w_in_f"] = w_in_cat[:H]
            lp["w_in_b"] = w_in_cat[H:]
        layers.append(lp)
    return {
        "layers": layers,
        "lin_wf": lin_w.T[:H],
        "lin_wb": lin_w.T[H:],
        "lin_b": lin_b[None, :],
    }


# ----------------------------------------------------------------------------
# Pure-JAX reference (for correctness check)
# ----------------------------------------------------------------------------
def _ref_lstm_dir(x_tbd, wih, whh, bias):
    H = whh.shape[0]
    B = x_tbd.shape[1]

    def step(carry, xt):
        h, c = carry
        g = xt @ wih + h @ whh + bias
        i = jax.nn.sigmoid(g[:, 0 * H:1 * H])
        f = jax.nn.sigmoid(g[:, 1 * H:2 * H])
        gg = jnp.tanh(g[:, 2 * H:3 * H])
        o = jax.nn.sigmoid(g[:, 3 * H:4 * H])
        c = f * c + i * gg
        h = o * jnp.tanh(c)
        return (h, c), h

    init = (jnp.zeros((B, H), jnp.float32), jnp.zeros((B, H), jnp.float32))
    _, hs = lax.scan(step, init, x_tbd)
    return hs


def bilstm_ref(x, raw_layers, lin_w, lin_b):
    h = jnp.transpose(x, (1, 0, 2)).astype(jnp.float32)
    for dirs in raw_layers:
        (wif, whf, bif, bhf), (wib, whb, bib, bhb) = dirs
        out_f = _ref_lstm_dir(h, wif.T, whf.T, (bif + bhf)[None, :])
        out_b = _ref_lstm_dir(h[::-1], wib.T, whb.T, (bib + bhb)[None, :])[::-1]
        h = jnp.concatenate([out_f, out_b], axis=-1)
    return h[-1] @ lin_w.T + lin_b[None, :]


# ----------------------------------------------------------------------------
if __name__ == "__main__":
    # small shapes consistent with the module's forward (batch_first sequences)
    B, T = 2, 8
    FEATURES, HIDDEN, N_LAYERS, FORECAST = 8, 32, 2, 8

    key = jax.random.PRNGKey(0)
    key, kx = jax.random.split(key)
    x = jax.random.normal(kx, (B, T, FEATURES), jnp.float32)

    raw_layers, lin_w, lin_b = init_raw_params(key, FEATURES, HIDDEN, N_LAYERS, FORECAST)
    params = prep_kernel_params(raw_layers, lin_w, lin_b, HIDDEN)

    out = jax.jit(bilstm_forward)(x, params)
    out = jax.block_until_ready(out)
    assert out.shape == (B, FORECAST), out.shape

    ref = jax.block_until_ready(bilstm_ref(x, raw_layers, lin_w, lin_b))
    assert jnp.allclose(out, ref, atol=1e-4, rtol=1e-4), (out, ref)

    print("KERNEL_OK")
</pallas_src>

<mosaic_0001>
module attributes {stable_mosaic.version = 11 : i64} {
  func.func @_proj_next_kernel(%arg0: i32, %arg1: memref<16x32xf32, #tpu.memory_space<vmem>>, %arg2: memref<16x32xf32, #tpu.memory_space<vmem>>, %arg3: memref<32x256xf32, #tpu.memory_space<vmem>>, %arg4: memref<32x256xf32, #tpu.memory_space<vmem>>, %arg5: memref<1x256xf32, #tpu.memory_space<vmem>>, %arg6: memref<16x128xf32, #tpu.memory_space<vmem>>, %arg7: memref<16x128xf32, #tpu.memory_space<vmem>>) attributes {dimension_semantics = [#tpu.dimension_semantics<parallel>], iteration_bounds = array<i64: 1>, scalar_prefetch = 0 : i64, scratch_operands = 0 : i64, tpu.core_type = #tpu.core_type<tc>, window_params = [{transform_indices = @transform_0, window_bounds = array<i64: 16, 32>}, {transform_indices = @transform_1, window_bounds = array<i64: 16, 32>}, {pipeline_mode = #tpu.pipeline_mode<synchronous>, transform_indices = @transform_2, window_bounds = array<i64: 32, 256>}, {pipeline_mode = #tpu.pipeline_mode<synchronous>, transform_indices = @transform_3, window_bounds = array<i64: 32, 256>}, {pipeline_mode = #tpu.pipeline_mode<synchronous>, transform_indices = @transform_4, window_bounds = array<i64: 1, 256>}, {transform_indices = @transform_5, window_bounds = array<i64: 16, 128>}, {transform_indices = @transform_6, window_bounds = array<i64: 16, 128>}]} {
    %c0 = arith.constant 0 : index
    %c0_0 = arith.constant 0 : index
    %0 = vector.load %arg1[%c0, %c0_0] : memref<16x32xf32, #tpu.memory_space<vmem>>, vector<16x32xf32>
    %c0_1 = arith.constant 0 : index
    %c0_2 = arith.constant 0 : index
    %1 = vector.load %arg3[%c0_1, %c0_2] : memref<32x256xf32, #tpu.memory_space<vmem>>, vector<32x256xf32>
    %cst = arith.constant dense<0.000000e+00> : vector<16x256xf32>
    %2 = tpu.matmul %0, %1, %cst {dimension_numbers = #tpu.dot_dimension_numbers<[1], [0], [0], [1], [0, 0, 1, 1], [], []>} : vector<16x32xf32>, vector<32x256xf32>, vector<16x256xf32> -> vector<16x256xf32>
    %c0_3 = arith.constant 0 : index
    %c0_4 = arith.constant 0 : index
    %3 = vector.load %arg2[%c0_3, %c0_4] : memref<16x32xf32, #tpu.memory_space<vmem>>, vector<16x32xf32>
    %c0_5 = arith.constant 0 : index
    %c0_6 = arith.constant 0 : index
    %4 = vector.load %arg4[%c0_5, %c0_6] : memref<32x256xf32, #tpu.memory_space<vmem>>, vector<32x256xf32>
    %cst_7 = arith.constant dense<0.000000e+00> : vector<16x256xf32>
    %5 = tpu.matmul %3, %4, %cst_7 {dimension_numbers = #tpu.dot_dimension_numbers<[1], [0], [0], [1], [0, 0, 1, 1], [], []>} : vector<16x32xf32>, vector<32x256xf32>, vector<16x256xf32> -> vector<16x256xf32>
    %6 = arith.addf %2, %5 : vector<16x256xf32>
    %c0_8 = arith.constant 0 : index
    %c0_9 = arith.constant 0 : index
    %7 = vector.load %arg5[%c0_8, %c0_9] : memref<1x256xf32, #tpu.memory_space<vmem>>, vector<1x256xf32>
    %8 = vector.broadcast %7 : vector<1x256xf32> to vector<16x256xf32>
    %9 = arith.addf %6, %8 : vector<16x256xf32>
    %10 = vector.extract_strided_slice %9 {offsets = [0, 0], sizes = [16, 128], strides = [1, 1]} : vector<16x256xf32> to vector<16x128xf32>
    %c0_10 = arith.constant 0 : index
    %c0_11 = arith.constant 0 : index
    %11 = vector.load %arg6[%c0_10, %c0_11] : memref<16x128xf32, #tpu.memory_space<vmem>>, vector<16x128xf32>
    tpu.vector_store %arg6[%c0_10, %c0_11], %10 {strides = array<i32>} : memref<16x128xf32, #tpu.memory_space<vmem>>, vector<16x128xf32>,
    %12 = vector.extract_strided_slice %9 {offsets = [0, 128], sizes = [16, 128], strides = [1, 1]} : vector<16x256xf32> to vector<16x128xf32>
    %c0_12 = arith.constant 0 : index
    %c0_13 = arith.constant 0 : index
    %13 = vector.load %arg7[%c0_12, %c0_13] : memref<16x128xf32, #tpu.memory_space<vmem>>, vector<16x128xf32>
    tpu.vector_store %arg7[%c0_12, %c0_13], %12 {strides = array<i32>} : memref<16x128xf32, #tpu.memory_space<vmem>>, vector<16x128xf32>,
    return
  }
  func.func @transform_0(%arg0: i32) -> (i32, i32) {
    %c0_i32 = arith.constant 0 : i32
    %c0_i32_0 = arith.constant 0 : i32
    return %arg0, %c0_i32 : i32, i32
  }
  func.func @transform_1(%arg0: i32) -> (i32, i32) {
    %c0_i32 = arith.constant 0 : i32
    %c0_i32_0 = arith.constant 0 : i32
    return %arg0, %c0_i32 : i32, i32
  }
  func.func @transform_2(%arg0: i32) -> (i32, i32) {
    %c0_i32 = arith.constant 0 : i32
    %c0_i32_0 = arith.constant 0 : i32
    %c0_i32_1 = arith.constant 0 : i32
    return %c0_i32, %c0_i32_0 : i32, i32
  }
  func.func @transform_3(%arg0: i32) -> (i32, i32) {
    %c0_i32 = arith.constant 0 : i32
    %c0_i32_0 = arith.constant 0 : i32
    %c0_i32_1 = arith.constant 0 : i32
    return %c0_i32, %c0_i32_0 : i32, i32
  }
  func.func @transform_4(%arg0: i32) -> (i32, i32) {
    %c0_i32 = arith.constant 0 : i32
    %c0_i32_0 = arith.constant 0 : i32
    %c0_i32_1 = arith.constant 0 : i32
    return %c0_i32, %c0_i32_0 : i32, i32
  }
  func.func @transform_5(%arg0: i32) -> (i32, i32) {
    %c0_i32 = arith.constant 0 : i32
    %c0_i32_0 = arith.constant 0 : i32
    return %arg0, %c0_i32 : i32, i32
  }
  func.func @transform_6(%arg0: i32) -> (i32, i32) {
    %c0_i32 = arith.constant 0 : i32
    %c0_i32_0 = arith.constant 0 : i32
    return %arg0, %c0_i32 : i32, i32
  }
}

module attributes {stable_mosaic.version = 11 : i64} {
  func.func @_recur_kernel(%arg0: i32, %arg1: memref<8x2x128xf32, #tpu.memory_space<vmem>>, %arg2: memref<8x2x128xf32, #tpu.memory_space<vmem>>, %arg3: memref<32x128xf32, #tpu.memory_space<vmem>>, %arg4: memref<32x128xf32, #tpu.memory_space<vmem>>, %arg5: memref<8x2x32xf32, #tpu.memory_space<vmem>>, %arg6: memref<8x2x32xf32, #tpu.memory_space<vmem>>, %arg7: memref<2x32xf32, #tpu.memory_space<vmem>>, %arg8: memref<2x32xf32, #tpu.memory_space<vmem>>, %arg9: memref<2x32xf32, #tpu.memory_space<vmem>>, %arg10: memref<2x32xf32, #tpu.memory_space<vmem>>) attributes {dimension_semantics = [#tpu.dimension_semantics<arbitrary>], iteration_bounds = array<i64: 1>, scalar_prefetch = 0 : i64, scratch_operands = 4 : i64, tpu.core_type = #tpu.core_type<tc>, window_params = [{transform_indices = @transform_0, window_bounds = array<i64: 8, 2, 128>}, {transform_indices = @transform_1, window_bounds = array<i64: 8, 2, 128>}, {pipeline_mode = #tpu.pipeline_mode<synchronous>, transform_indices = @transform_2, window_bounds = array<i64: 32, 128>}, {pipeline_mode = #tpu.pipeline_mode<synchronous>, transform_indices = @transform_3, window_bounds = array<i64: 32, 128>}, {transform_indices = @transform_4, window_bounds = array<i64: 8, 2, 32>}, {transform_indices = @transform_5, window_bounds = array<i64: 8, 2, 32>}]} {
    %c0_i32 = arith.constant 0 : i32
    %0 = arith.cmpi eq, %arg0, %c0_i32 : i32
    %1 = arith.extui %0 : i1 to i32
    %c0_i32_0 = arith.constant 0 : i32
    %2 = arith.cmpi ne, %1, %c0_i32_0 : i32
    scf.if %2 {
      %cst_156 = arith.constant 0.000000e+00 : f32
      %565 = vector.broadcast %cst_156 : f32 to vector<2x32xf32>
      %c0_157 = arith.constant 0 : index
      %c0_158 = arith.constant 0 : index
      %566 = vector.load %arg7[%c0_157, %c0_158] : memref<2x32xf32, #tpu.memory_space<vmem>>, vector<2x32xf32>
      tpu.vector_store %arg7[%c0_157, %c0_158], %565 {strides = array<i32>} : memref<2x32xf32, #tpu.memory_space<vmem>>, vector<2x32xf32>,
      %cst_159 = arith.constant 0.000000e+00 : f32
      %567 = vector.broadcast %cst_159 : f32 to vector<2x32xf32>
      %c0_160 = arith.constant 0 : index
      %c0_161 = arith.constant 0 : index
      %568 = vector.load %arg8[%c0_160, %c0_161] : memref<2x32xf32, #tpu.memory_space<vmem>>, vector<2x32xf32>
      tpu.vector_store %arg8[%c0_160, %c0_161], %567 {strides = array<i32>} : memref<2x32xf32, #tpu.memory_space<vmem>>, vector<2x32xf32>,
      %cst_162 = arith.constant 0.000000e+00 : f32
      %569 = vector.broadcast %cst_162 : f32 to vector<2x32xf32>
      %c0_163 = arith.constant 0 : index
      %c0_164 = arith.constant 0 : index
      %570 = vector.load %arg9[%c0_163, %c0_164] : memref<2x32xf32, #tpu.memory_space<vmem>>, vector<2x32xf32>
      tpu.vector_store %arg9[%c0_163, %c0_164], %569 {strides = array<i32>} : memref<2x32xf32, #tpu.memory_space<vmem>>, vector<2x32xf32>,
      %cst_165 = arith.constant 0.000000e+00 : f32
      %571 = vector.broadcast %cst_165 : f32 to vector<2x32xf32>
      %c0_166 = arith.constant 0 : index
      %c0_167 = arith.constant 0 : index
      %572 = vector.load %arg10[%c0_166, %c0_167] : memref<2x32xf32, #tpu.memory_space<vmem>>, vector<2x32xf32>
      tpu.vector_store %arg10[%c0_166, %c0_167], %571 {strides = array<i32>} : memref<2x32xf32, #tpu.memory_space<vmem>>, vector<2x32xf32>,
    } else {
    }
    %c0 = arith.constant 0 : index
    %c0_1 = arith.constant 0 : index
    %3 = vector.load %arg3[%c0, %c0_1] : memref<32x128xf32, #tpu.memory_space<vmem>>, vector<32x128xf32>
    %c0_2 = arith.constant 0 : index
    %c0_3 = arith.constant 0 : index
    %4 = vector.load %arg4[%c0_2, %c0_3] : memref<32x128xf32, #tpu.memory_space<vmem>>, vector<32x128xf32>
    %c0_4 = arith.constant 0 : index
    %c0_5 = arith.constant 0 : index
    %5 = vector.load %arg7[%c0_4, %c0_5] : memref<2x32xf32, #tpu.memory_space<vmem>>, vector<2x32xf32>
    %c0_6 = arith.constant 0 : index
    %c0_7 = arith.constant 0 : index
    %6 = vector.load %arg8[%c0_6, %c0_7] : memref<2x32xf32, #tpu.memory_space<vmem>>, vector<2x32xf32>
    %c0_8 = arith.constant 0 : index
    %c0_9 = arith.constant 0 : index
    %7 = vector.load %arg9[%c0_8, %c0_9] : memref<2x32xf32, #tpu.memory_space<vmem>>, vector<2x32xf32>
    %c0_10 = arith.constant 0 : index
    %c0_11 = arith.constant 0 : index
    %8 = vector.load %arg10[%c0_10, %c0_11] : memref<2x32xf32, #tpu.memory_space<vmem>>, vector<2x32xf32>
    %c0_i32_12 = arith.constant 0 : i32
    %9 = arith.index_cast %c0_i32_12 : i32 to index
    %c0_13 = arith.constant 0 : index
    %c0_14 = arith.constant 0 : index
    %10 = vector.load %arg1[%9, %c0_13, %c0_14] : memref<8x2x128xf32, #tpu.memory_space<vmem>>, vector<1x2x128xf32>
    %11 = vector.shape_cast %10 : vector<1x2x128xf32> to vector<2x128xf32>
    %cst = arith.constant dense<0.000000e+00> : vector<2x128xf32>
    %12 = tpu.matmul %5, %3, %cst {dimension_numbers = #tpu.dot_dimension_numbers<[1], [0], [0], [1], [0, 0, 1, 1], [], []>} : vector<2x32xf32>, vector<32x128xf32>, vector<2x128xf32> -> vector<2x128xf32>
    %13 = arith.addf %11, %12 : vector<2x128xf32>
    %14 = vector.extract_strided_slice %13 {offsets = [0, 0], sizes = [2, 32], strides = [1, 1]} : vector<2x128xf32> to vector<2x32xf32>
    %15 = arith.negf %14 : vector<2x32xf32>
    %16 = math.exp %15 : vector<2x32xf32>
    %cst_15 = arith.constant 1.000000e+00 : f32
    %17 = vector.broadcast %cst_15 : f32 to vector<2x32xf32>
    %18 = arith.addf %17, %16 : vector<2x32xf32>
    %19 = arith.divf %17, %18 : vector<2x32xf32>
    %20 = vector.extract_strided_slice %13 {offsets = [0, 32], sizes = [2, 32], strides = [1, 1]} : vector<2x128xf32> to vector<2x32xf32>
    %21 = arith.negf %20 : vector<2x32xf32>
    %22 = math.exp %21 : vector<2x32xf32>
    %cst_16 = arith.constant 1.000000e+00 : f32
    %23 = vector.broadcast %cst_16 : f32 to vector<2x32xf32>
    %24 = arith.addf %23, %22 : vector<2x32xf32>
    %25 = arith.divf %23, %24 : vector<2x32xf32>
    %26 = vector.extract_strided_slice %13 {offsets = [0, 64], sizes = [2, 32], strides = [1, 1]} : vector<2x128xf32> to vector<2x32xf32>
    %27 = math.tanh %26 : vector<2x32xf32>
    %28 = vector.extract_strided_slice %13 {offsets = [0, 96], sizes = [2, 32], strides = [1, 1]} : vector<2x128xf32> to vector<2x32xf32>
    %29 = arith.negf %28 : vector<2x32xf32>
    %30 = math.exp %29 : vector<2x32xf32>
    %cst_17 = arith.constant 1.000000e+00 : f32
    %31 = vector.broadcast %cst_17 : f32 to vector<2x32xf32>
    %32 = arith.addf %31, %30 : vector<2x32xf32>
    %33 = arith.divf %31, %32 : vector<2x32xf32>
    %34 = arith.mulf %25, %6 : vector<2x32xf32>
    %35 = arith.mulf %19, %27 : vector<2x32xf32>
    %36 = arith.addf %34, %35 : vector<2x32xf32>
    %37 = math.tanh %36 : vector<2x32xf32>
    %38 = arith.mulf %33, %37 : vector<2x32xf32>
    %39 = arith.index_cast %c0_i32_12 : i32 to index
    %c0_18 = arith.constant 0 : index
    %c0_19 = arith.constant 0 : index
    %40 = vector.load %arg5[%39, %c0_18, %c0_19] : memref<8x2x32xf32, #tpu.memory_space<vmem>>, vector<1x2x32xf32>
    %41 = vector.shape_cast %40 : vector<1x2x32xf32> to vector<2x32xf32>
    %42 = vector.shape_cast %38 : vector<2x32xf32> to vector<1x2x32xf32>
    tpu.vector_store %arg5[%39, %c0_18, %c0_19], %42 {strides = array<i32>} : memref<8x2x32xf32, #tpu.memory_space<vmem>>, vector<1x2x32xf32>,
    %c7_i32 = arith.constant 7 : i32
    %43 = arith.subi %c7_i32, %c0_i32_12 : i32
    %44 = arith.index_cast %43 : i32 to index
    %c0_20 = arith.constant 0 : index
    %c0_21 = arith.constant 0 : index
    %45 = vector.load %arg2[%44, %c0_20, %c0_21] : memref<8x2x128xf32, #tpu.memory_space<vmem>>, vector<1x2x128xf32>
    %46 = vector.shape_cast %45 : vector<1x2x128xf32> to vector<2x128xf32>
    %cst_22 = arith.constant dense<0.000000e+00> : vector<2x128xf32>
    %47 = tpu.matmul %7, %4, %cst_22 {dimension_numbers = #tpu.dot_dimension_numbers<[1], [0], [0], [1], [0, 0, 1, 1], [], []>} : vector<2x32xf32>, vector<32x128xf32>, vector<2x128xf32> -> vector<2x128xf32>
    %48 = arith.addf %46, %47 : vector<2x128xf32>
    %49 = vector.extract_strided_slice %48 {offsets = [0, 0], sizes = [2, 32], strides = [1, 1]} : vector<2x128xf32> to vector<2x32xf32>
    %50 = arith.negf %49 : vector<2x32xf32>
    %51 = math.exp %50 : vector<2x32xf32>
    %cst_23 = arith.constant 1.000000e+00 : f32
    %52 = vector.broadcast %cst_23 : f32 to vector<2x32xf32>
    %53 = arith.addf %52, %51 : vector<2x32xf32>
    %54 = arith.divf %52, %53 : vector<2x32xf32>
    %55 = vector.extract_strided_slice %48 {offsets = [0, 32], sizes = [2, 32], strides = [1, 1]} : vector<2x128xf32> to vector<2x32xf32>
    %56 = arith.negf %55 : vector<2x32xf32>
    %57 = math.exp %56 : vector<2x32xf32>
    %cst_24 = arith.constant 1.000000e+00 : f32
    %58 = vector.broadcast %cst_24 : f32 to vector<2x32xf32>
    %59 = arith.addf %58, %57 : vector<2x32xf32>
    %60 = arith.divf %58, %59 : vector<2x32xf32>
    %61 = vector.extract_strided_slice %48 {offsets = [0, 64], sizes = [2, 32], strides = [1, 1]} : vector<2x128xf32> to vector<2x32xf32>
    %62 = math.tanh %61 : vector<2x32xf32>
    %63 = vector.extract_strided_slice %48 {offsets = [0, 96], sizes = [2, 32], strides = [1, 1]} : vector<2x128xf32> to vector<2x32xf32>
    %64 = arith.negf %63 : vector<2x32xf32>
    %65 = math.exp %64 : vector<2x32xf32>
    %cst_25 = arith.constant 1.000000e+00 : f32
    %66 = vector.broadcast %cst_25 : f32 to vector<2x32xf32>
    %67 = arith.addf %66, %65 : vector<2x32xf32>
    %68 = arith.divf %66, %67 : vector<2x32xf32>
    %69 = arith.mulf %60, %8 : vector<2x32xf32>
    %70 = arith.mulf %54, %62 : vector<2x32xf32>
    %71 = arith.addf %69, %70 : vector<2x32xf32>
    %72 = math.tanh %71 : vector<2x32xf32>
    %73 = arith.mulf %68, %72 : vector<2x32xf32>
    %74 = arith.index_cast %43 : i32 to index
    %c0_26 = arith.constant 0 : index
    %c0_27 = arith.constant 0 : index
    %75 = vector.load %arg6[%74, %c0_26, %c0_27] : memref<8x2x32xf32, #tpu.memory_space<vmem>>, vector<1x2x32xf32>
    %76 = vector.shape_cast %75 : vector<1x2x32xf32> to vector<2x32xf32>
    %77 = vector.shape_cast %73 : vector<2x32xf32> to vector<1x2x32xf32>
    tpu.vector_store %arg6[%74, %c0_26, %c0_27], %77 {strides = array<i32>} : memref<8x2x32xf32, #tpu.memory_space<vmem>>, vector<1x2x32xf32>,
    %c1_i32 = arith.constant 1 : i32
    %78 = arith.index_cast %c1_i32 : i32 to index
    %c0_28 = arith.constant 0 : index
    %c0_29 = arith.constant 0 : index
    %79 = vector.load %arg1[%78, %c0_28, %c0_29] : memref<8x2x128xf32, #tpu.memory_space<vmem>>, vector<1x2x128xf32>
    %80 = vector.shape_cast %79 : vector<1x2x128xf32> to vector<2x128xf32>
    %cst_30 = arith.constant dense<0.000000e+00> : vector<2x128xf32>
    %81 = tpu.matmul %38, %3, %cst_30 {dimension_numbers = #tpu.dot_dimension_numbers<[1], [0], [0], [1], [0, 0, 1, 1], [], []>} : vector<2x32xf32>, vector<32x128xf32>, vector<2x128xf32> -> vector<2x128xf32>
    %82 = arith.addf %80, %81 : vector<2x128xf32>
    %83 = vector.extract_strided_slice %82 {offsets = [0, 0], sizes = [2, 32], strides = [1, 1]} : vector<2x128xf32> to vector<2x32xf32>
    %84 = arith.negf %83 : vector<2x32xf32>
    %85 = math.exp %84 : vector<2x32xf32>
    %cst_31 = arith.constant 1.000000e+00 : f32
    %86 = vector.broadcast %cst_31 : f32 to vector<2x32xf32>
    %87 = arith.addf %86, %85 : vector<2x32xf32>
    %88 = arith.divf %86, %87 : vector<2x32xf32>
    %89 = vector.extract_strided_slice %82 {offsets = [0, 32], sizes = [2, 32], strides = [1, 1]} : vector<2x128xf32> to vector<2x32xf32>
    %90 = arith.negf %89 : vector<2x32xf32>
    %91 = math.exp %90 : vector<2x32xf32>
    %cst_32 = arith.constant 1.000000e+00 : f32
    %92 = vector.broadcast %cst_32 : f32 to vector<2x32xf32>
    %93 = arith.addf %92, %91 : vector<2x32xf32>
    %94 = arith.divf %92, %93 : vector<2x32xf32>
    %95 = vector.extract_strided_slice %82 {offsets = [0, 64], sizes = [2, 32], strides = [1, 1]} : vector<2x128xf32> to vector<2x32xf32>
    %96 = math.tanh %95 : vector<2x32xf32>
    %97 = vector.extract_strided_slice %82 {offsets = [0, 96], sizes = [2, 32], strides = [1, 1]} : vector<2x128xf32> to vector<2x32xf32>
    %98 = arith.negf %97 : vector<2x32xf32>
    %99 = math.exp %98 : vector<2x32xf32>
    %cst_33 = arith.constant 1.000000e+00 : f32
    %100 = vector.broadcast %cst_33 : f32 to vector<2x32xf32>
    %101 = arith.addf %100, %99 : vector<2x32xf32>
    %102 = arith.divf %100, %101 : vector<2x32xf32>
    %103 = arith.mulf %94, %36 : vector<2x32xf32>
    %104 = arith.mulf %88, %96 : vector<2x32xf32>
    %105 = arith.addf %103, %104 : vector<2x32xf32>
    %106 = math.tanh %105 : vector<2x32xf32>
    %107 = arith.mulf %102, %106 : vector<2x32xf32>
    %108 = arith.index_cast %c1_i32 : i32 to index
    %c0_34 = arith.constant 0 : index
    %c0_35 = arith.constant 0 : index
    %109 = vector.load %arg5[%108, %c0_34, %c0_35] : memref<8x2x32xf32, #tpu.memory_space<vmem>>, vector<1x2x32xf32>
    %110 = vector.shape_cast %109 : vector<1x2x32xf32> to vector<2x32xf32>
    %111 = vector.shape_cast %107 : vector<2x32xf32> to vector<1x2x32xf32>
    tpu.vector_store %arg5[%108, %c0_34, %c0_35], %111 {strides = array<i32>} : memref<8x2x32xf32, #tpu.memory_space<vmem>>, vector<1x2x32xf32>,
    %c7_i32_36 = arith.constant 7 : i32
    %112 = arith.subi %c7_i32_36, %c1_i32 : i32
    %113 = arith.index_cast %112 : i32 to index
    %c0_37 = arith.constant 0 : index
    %c0_38 = arith.constant 0 : index
    %114 = vector.load %arg2[%113, %c0_37, %c0_38] : memref<8x2x128xf32, #tpu.memory_space<vmem>>, vector<1x2x128xf32>
    %115 = vector.shape_cast %114 : vector<1x2x128xf32> to vector<2x128xf32>
    %cst_39 = arith.constant dense<0.000000e+00> : vector<2x128xf32>
    %116 = tpu.matmul %73, %4, %cst_39 {dimension_numbers = #tpu.dot_dimension_numbers<[1], [0], [0], [1], [0, 0, 1, 1], [], []>} : vector<2x32xf32>, vector<32x128xf32>, vector<2x128xf32> -> vector<2x128xf32>
    %117 = arith.addf %115, %116 : vector<2x128xf32>
    %118 = vector.extract_strided_slice %117 {offsets = [0, 0], sizes = [2, 32], strides = [1, 1]} : vector<2x128xf32> to vector<2x32xf32>
    %119 = arith.negf %118 : vector<2x32xf32>
    %120 = math.exp %119 : vector<2x32xf32>
    %cst_40 = arith.constant 1.000000e+00 : f32
    %121 = vector.broadcast %cst_40 : f32 to vector<2x32xf32>
    %122 = arith.addf %121, %120 : vector<2x32xf32>
    %123 = arith.divf %121, %122 : vector<2x32xf32>
    %124 = vector.extract_strided_slice %117 {offsets = [0, 32], sizes = [2, 32], strides = [1, 1]} : vector<2x128xf32> to vector<2x32xf32>
    %125 = arith.negf %124 : vector<2x32xf32>
    %126 = math.exp %125 : vector<2x32xf32>
    %cst_41 = arith.constant 1.000000e+00 : f32
    %127 = vector.broadcast %cst_41 : f32 to vector<2x32xf32>
    %128 = arith.addf %127, %126 : vector<2x32xf32>
    %129 = arith.divf %127, %128 : vector<2x32xf32>
    %130 = vector.extract_strided_slice %117 {offsets = [0, 64], sizes = [2, 32], strides = [1, 1]} : vector<2x128xf32> to vector<2x32xf32>
    %131 = math.tanh %130 : vector<2x32xf32>
    %132 = vector.extract_strided_slice %117 {offsets = [0, 96], sizes = [2, 32], strides = [1, 1]} : vector<2x128xf32> to vector<2x32xf32>
    %133 = arith.negf %132 : vector<2x32xf32>
    %134 = math.exp %133 : vector<2x32xf32>
    %cst_42 = arith.constant 1.000000e+00 : f32
    %135 = vector.broadcast %cst_42 : f32 to vector<2x32xf32>
    %136 = arith.addf %135, %134 : vector<2x32xf32>
    %137 = arith.divf %135, %136 : vector<2x32xf32>
    %138 = arith.mulf %129, %71 : vector<2x32xf32>
    %139 = arith.mulf %123, %131 : vector<2x32xf32>
    %140 = arith.addf %138, %139 : vector<2x32xf32>
    %141 = math.tanh %140 : vector<2x32xf32>
    %142 = arith.mulf %137, %141 : vector<2x32xf32>
    %143 = arith.index_cast %112 : i32 to index
    %c0_43 = arith.constant 0 : index
    %c0_44 = arith.constant 0 : index
    %144 = vector.load %arg6[%143, %c0_43, %c0_44] : memref<8x2x32xf32, #tpu.memory_space<vmem>>, vector<1x2x32xf32>
    %145 = vector.shape_cast %144 : vector<1x2x32xf32> to vector<2x32xf32>
    %146 = vector.shape_cast %142 : vector<2x32xf32> to vector<1x2x32xf32>
    tpu.vector_store %arg6[%143, %c0_43, %c0_44], %146 {strides = array<i32>} : memref<8x2x32xf32, #tpu.memory_space<vmem>>, vector<1x2x32xf32>,
    %c2_i32 = arith.constant 2 : i32
    %147 = arith.index_cast %c2_i32 : i32 to index
    %c0_45 = arith.constant 0 : index
    %c0_46 = arith.constant 0 : index
    %148 = vector.load %arg1[%147, %c0_45, %c0_46] : memref<8x2x128xf32, #tpu.memory_space<vmem>>, vector<1x2x128xf32>
    %149 = vector.shape_cast %148 : vector<1x2x128xf32> to vector<2x128xf32>
    %cst_47 = arith.constant dense<0.000000e+00> : vector<2x128xf32>
    %150 = tpu.matmul %107, %3, %cst_47 {dimension_numbers = #tpu.dot_dimension_numbers<[1], [0], [0], [1], [0, 0, 1, 1], [], []>} : vector<2x32xf32>, vector<32x128xf32>, vector<2x128xf32> -> vector<2x128xf32>
    %151 = arith.addf %149, %150 : vector<2x128xf32>
    %152 = vector.extract_strided_slice %151 {offsets = [0, 0], sizes = [2, 32], strides = [1, 1]} : vector<2x128xf32> to vector<2x32xf32>
    %153 = arith.negf %152 : vector<2x32xf32>
    %154 = math.exp %153 : vector<2x32xf32>
    %cst_48 = arith.constant 1.000000e+00 : f32
    %155 = vector.broadcast %cst_48 : f32 to vector<2x32xf32>
    %156 = arith.addf %155, %154 : vector<2x32xf32>
    %157 = arith.divf %155, %156 : vector<2x32xf32>
    %158 = vector.extract_strided_slice %151 {offsets = [0, 32], sizes = [2, 32], strides = [1, 1]} : vector<2x128xf32> to vector<2x32xf32>
    %159 = arith.negf %158 : vector<2x32xf32>
    %160 = math.exp %159 : vector<2x32xf32>
    %cst_49 = arith.constant 1.000000e+00 : f32
    %161 = vector.broadcast %cst_49 : f32 to vector<2x32xf32>
    %162 = arith.addf %161, %160 : vector<2x32xf32>
    %163 = arith.divf %161, %162 : vector<2x32xf32>
    %164 = vector.extract_strided_slice %151 {offsets = [0, 64], sizes = [2, 32], strides = [1, 1]} : vector<2x128xf32> to vector<2x32xf32>
    %165 = math.tanh %164 : vector<2x32xf32>
    %166 = vector.extract_strided_slice %151 {offsets = [0, 96], sizes = [2, 32], strides = [1, 1]} : vector<2x128xf32> to vector<2x32xf32>
    %167 = arith.negf %166 : vector<2x32xf32>
    %168 = math.exp %167 : vector<2x32xf32>
    %cst_50 = arith.constant 1.000000e+00 : f32
    %169 = vector.broadcast %cst_50 : f32 to vector<2x32xf32>
    %170 = arith.addf %169, %168 : vector<2x32xf32>
    %171 = arith.divf %169, %170 : vector<2x32xf32>
    %172 = arith.mulf %163, %105 : vector<2x32xf32>
    %173 = arith.mulf %157, %165 : vector<2x32xf32>
    %174 = arith.addf %172, %173 : vector<2x32xf32>
    %175 = math.tanh %174 : vector<2x32xf32>
    %176 = arith.mulf %171, %175 : vector<2x32xf32>
    %177 = arith.index_cast %c2_i32 : i32 to index
    %c0_51 = arith.constant 0 : index
    %c0_52 = arith.constant 0 : index
    %178 = vector.load %arg5[%177, %c0_51, %c0_52] : memref<8x2x32xf32, #tpu.memory_space<vmem>>, vector<1x2x32xf32>
    %179 = vector.shape_cast %178 : vector<1x2x32xf32> to vector<2x32xf32>
    %180 = vector.shape_cast %176 : vector<2x32xf32> to vector<1x2x32xf32>
    tpu.vector_store %arg5[%177, %c0_51, %c0_52], %180 {strides = array<i32>} : memref<8x2x32xf32, #tpu.memory_space<vmem>>, vector<1x2x32xf32>,
    %c7_i32_53 = arith.constant 7 : i32
    %181 = arith.subi %c7_i32_53, %c2_i32 : i32
    %182 = arith.index_cast %181 : i32 to index
    %c0_54 = arith.constant 0 : index
    %c0_55 = arith.constant 0 : index
    %183 = vector.load %arg2[%182, %c0_54, %c0_55] : memref<8x2x128xf32, #tpu.memory_space<vmem>>, vector<1x2x128xf32>
    %184 = vector.shape_cast %183 : vector<1x2x128xf32> to vector<2x128xf32>
    %cst_56 = arith.constant dense<0.000000e+00> : vector<2x128xf32>
    %185 = tpu.matmul %142, %4, %cst_56 {dimension_numbers = #tpu.dot_dimension_numbers<[1], [0], [0], [1], [0, 0, 1, 1], [], []>} : vector<2x32xf32>, vector<32x128xf32>, vector<2x128xf32> -> vector<2x128xf32>
    %186 = arith.addf %184, %185 : vector<2x128xf32>
    %187 = vector.extract_strided_slice %186 {offsets = [0, 0], sizes = [2, 32], strides = [1, 1]} : vector<2x128xf32> to vector<2x32xf32>
    %188 = arith.negf %187 : vector<2x32xf32>
    %189 = math.exp %188 : vector<2x32xf32>
    %cst_57 = arith.constant 1.000000e+00 : f32
    %190 = vector.broadcast %cst_57 : f32 to vector<2x32xf32>
    %191 = arith.addf %190, %189 : vector<2x32xf32>
    %192 = arith.divf %190, %191 : vector<2x32xf32>
    %193 = vector.extract_strided_slice %186 {offsets = [0, 32], sizes = [2, 32], strides = [1, 1]} : vector<2x128xf32> to vector<2x32xf32>
    %194 = arith.negf %193 : vector<2x32xf32>
    %195 = math.exp %194 : vector<2x32xf32>
    %cst_58 = arith.constant 1.000000e+00 : f32
    %196 = vector.broadcast %cst_58 : f32 to vector<2x32xf32>
    %197 = arith.addf %196, %195 : vector<2x32xf32>
    %198 = arith.divf %196, %197 : vector<2x32xf32>
    %199 = vector.extract_strided_slice %186 {offsets = [0, 64], sizes = [2, 32], strides = [1, 1]} : vector<2x128xf32> to vector<2x32xf32>
    %200 = math.tanh %199 : vector<2x32xf32>
    %201 = vector.extract_strided_slice %186 {offsets = [0, 96], sizes = [2, 32], strides = [1, 1]} : vector<2x128xf32> to vector<2x32xf32>
    %202 = arith.negf %201 : vector<2x32xf32>
    %203 = math.exp %202 : vector<2x32xf32>
    %cst_59 = arith.constant 1.000000e+00 : f32
    %204 = vector.broadcast %cst_59 : f32 to vector<2x32xf32>
    %205 = arith.addf %204, %203 : vector<2x32xf32>
    %206 = arith.divf %204, %205 : vector<2x32xf32>
    %207 = arith.mulf %198, %140 : vector<2x32xf32>
    %208 = arith.mulf %192, %200 : vector<2x32xf32>
    %209 = arith.addf %207, %208 : vector<2x32xf32>
    %210 = math.tanh %209 : vector<2x32xf32>
    %211 = arith.mulf %206, %210 : vector<2x32xf32>
    %212 = arith.index_cast %181 : i32 to index
    %c0_60 = arith.constant 0 : index
    %c0_61 = arith.constant 0 : index
    %213 = vector.load %arg6[%212, %c0_60, %c0_61] : memref<8x2x32xf32, #tpu.memory_space<vmem>>, vector<1x2x32xf32>
    %214 = vector.shape_cast %213 : vector<1x2x32xf32> to vector<2x32xf32>
    %215 = vector.shape_cast %211 : vector<2x32xf32> to vector<1x2x32xf32>
    tpu.vector_store %arg6[%212, %c0_60, %c0_61], %215 {strides = array<i32>} : memref<8x2x32xf32, #tpu.memory_space<vmem>>, vector<1x2x32xf32>,
    %c3_i32 = arith.constant 3 : i32
    %216 = arith.index_cast %c3_i32 : i32 to index
    %c0_62 = arith.constant 0 : index
    %c0_63 = arith.constant 0 : index
    %217 = vector.load %arg1[%216, %c0_62, %c0_63] : memref<8x2x128xf32, #tpu.memory_space<vmem>>, vector<1x2x128xf32>
    %218 = vector.shape_cast %217 : vector<1x2x128xf32> to vector<2x128xf32>
    %cst_64 = arith.constant dense<0.000000e+00> : vector<2x128xf32>
    %219 = tpu.matmul %176, %3, %cst_64 {dimension_numbers = #tpu.dot_dimension_numbers<[1], [0], [0], [1], [0, 0, 1, 1], [], []>} : vector<2x32xf32>, vector<32x128xf32>, vector<2x128xf32> -> vector<2x128xf32>
    %220 = arith.addf %218, %219 : vector<2x128xf32>
    %221 = vector.extract_strided_slice %220 {offsets = [0, 0], sizes = [2, 32], strides = [1, 1]} : vector<2x128xf32> to vector<2x32xf32>
    %222 = arith.negf %221 : vector<2x32xf32>
    %223 = math.exp %222 : vector<2x32xf32>
    %cst_65 = arith.constant 1.000000e+00 : f32
    %224 = vector.broadcast %cst_65 : f32 to vector<2x32xf32>
    %225 = arith.addf %224, %223 : vector<2x32xf32>
    %226 = arith.divf %224, %225 : vector<2x32xf32>
    %227 = vector.extract_strided_slice %220 {offsets = [0, 32], sizes = [2, 32], strides = [1, 1]} : vector<2x128xf32> to vector<2x32xf32>
    %228 = arith.negf %227 : vector<2x32xf32>
    %229 = math.exp %228 : vector<2x32xf32>
    %cst_66 = arith.constant 1.000000e+00 : f32
    %230 = vector.broadcast %cst_66 : f32 to vector<2x32xf32>
    %231 = arith.addf %230, %229 : vector<2x32xf32>
    %232 = arith.divf %230, %231 : vector<2x32xf32>
    %233 = vector.extract_strided_slice %220 {offsets = [0, 64], sizes = [2, 32], strides = [1, 1]} : vector<2x128xf32> to vector<2x32xf32>
    %234 = math.tanh %233 : vector<2x32xf32>
    %235 = vector.extract_strided_slice %220 {offsets = [0, 96], sizes = [2, 32], strides = [1, 1]} : vector<2x128xf32> to vector<2x32xf32>
    %236 = arith.negf %235 : vector<2x32xf32>
    %237 = math.exp %236 : vector<2x32xf32>
    %cst_67 = arith.constant 1.000000e+00 : f32
    %238 = vector.broadcast %cst_67 : f32 to vector<2x32xf32>
    %239 = arith.addf %238, %237 : vector<2x32xf32>
    %240 = arith.divf %238, %239 : vector<2x32xf32>
    %241 = arith.mulf %232, %174 : vector<2x32xf32>
    %242 = arith.mulf %226, %234 : vector<2x32xf32>
    %243 = arith.addf %241, %242 : vector<2x32xf32>
    %244 = math.tanh %243 : vector<2x32xf32>
    %245 = arith.mulf %240, %244 : vector<2x32xf32>
    %246 = arith.index_cast %c3_i32 : i32 to index
    %c0_68 = arith.constant 0 : index
    %c0_69 = arith.constant 0 : index
    %247 = vector.load %arg5[%246, %c0_68, %c0_69] : memref<8x2x32xf32, #tpu.memory_space<vmem>>, vector<1x2x32xf32>
    %248 = vector.shape_cast %247 : vector<1x2x32xf32> to vector<2x32xf32>
    %249 = vector.shape_cast %245 : vector<2x32xf32> to vector<1x2x32xf32>
    tpu.vector_store %arg5[%246, %c0_68, %c0_69], %249 {strides = array<i32>} : memref<8x2x32xf32, #tpu.memory_space<vmem>>, vector<1x2x32xf32>,
    %c7_i32_70 = arith.constant 7 : i32
    %250 = arith.subi %c7_i32_70, %c3_i32 : i32
    %251 = arith.index_cast %250 : i32 to index
    %c0_71 = arith.constant 0 : index
    %c0_72 = arith.constant 0 : index
    %252 = vector.load %arg2[%251, %c0_71, %c0_72] : memref<8x2x128xf32, #tpu.memory_space<vmem>>, vector<1x2x128xf32>
    %253 = vector.shape_cast %252 : vector<1x2x128xf32> to vector<2x128xf32>
    %cst_73 = arith.constant dense<0.000000e+00> : vector<2x128xf32>
    %254 = tpu.matmul %211, %4, %cst_73 {dimension_numbers = #tpu.dot_dimension_numbers<[1], [0], [0], [1], [0, 0, 1, 1], [], []>} : vector<2x32xf32>, vector<32x128xf32>, vector<2x128xf32> -> vector<2x128xf32>
    %255 = arith.addf %253, %254 : vector<2x128xf32>
    %256 = vector.extract_strided_slice %255 {offsets = [0, 0], sizes = [2, 32], strides = [1, 1]} : vector<2x128xf32> to vector<2x32xf32>
    %257 = arith.negf %256 : vector<2x32xf32>
    %258 = math.exp %257 : vector<2x32xf32>
    %cst_74 = arith.constant 1.000000e+00 : f32
    %259 = vector.broadcast %cst_74 : f32 to vector<2x32xf32>
    %260 = arith.addf %259, %258 : vector<2x32xf32>
    %261 = arith.divf %259, %260 : vector<2x32xf32>
    %262 = vector.extract_strided_slice %255 {offsets = [0, 32], sizes = [2, 32], strides = [1, 1]} : vector<2x128xf32> to vector<2x32xf32>
    %263 = arith.negf %262 : vector<2x32xf32>
    %264 = math.exp %263 : vector<2x32xf32>
    %cst_75 = arith.constant 1.000000e+00 : f32
    %265 = vector.broadcast %cst_75 : f32 to vector<2x32xf32>
    %266 = arith.addf %265, %264 : vector<2x32xf32>
    %267 = arith.divf %265, %266 : vector<2x32xf32>
    %268 = vector.extract_strided_slice %255 {offsets = [0, 64], sizes = [2, 32], strides = [1, 1]} : vector<2x128xf32> to vector<2x32xf32>
    %269 = math.tanh %268 : vector<2x32xf32>
    %270 = vector.extract_strided_slice %255 {offsets = [0, 96], sizes = [2, 32], strides = [1, 1]} : vector<2x128xf32> to vector<2x32xf32>
    %271 = arith.negf %270 : vector<2x32xf32>
    %272 = math.exp %271 : vector<2x32xf32>
    %cst_76 = arith.constant 1.000000e+00 : f32
    %273 = vector.broadcast %cst_76 : f32 to vector<2x32xf32>
    %274 = arith.addf %273, %272 : vector<2x32xf32>
    %275 = arith.divf %273, %274 : vector<2x32xf32>
    %276 = arith.mulf %267, %209 : vector<2x32xf32>
    %277 = arith.mulf %261, %269 : vector<2x32xf32>
    %278 = arith.addf %276, %277 : vector<2x32xf32>
    %279 = math.tanh %278 : vector<2x32xf32>
    %280 = arith.mulf %275, %279 : vector<2x32xf32>
    %281 = arith.index_cast %250 : i32 to index
    %c0_77 = arith.constant 0 : index
    %c0_78 = arith.constant 0 : index
    %282 = vector.load %arg6[%281, %c0_77, %c0_78] : memref<8x2x32xf32, #tpu.memory_space<vmem>>, vector<1x2x32xf32>
    %283 = vector.shape_cast %282 : vector<1x2x32xf32> to vector<2x32xf32>
    %284 = vector.shape_cast %280 : vector<2x32xf32> to vector<1x2x32xf32>
    tpu.vector_store %arg6[%281, %c0_77, %c0_78], %284 {strides = array<i32>} : memref<8x2x32xf32, #tpu.memory_space<vmem>>, vector<1x2x32xf32>,
    %c4_i32 = arith.constant 4 : i32
    %285 = arith.index_cast %c4_i32 : i32 to index
    %c0_79 = arith.constant 0 : index
    %c0_80 = arith.constant 0 : index
    %286 = vector.load %arg1[%285, %c0_79, %c0_80] : memref<8x2x128xf32, #tpu.memory_space<vmem>>, vector<1x2x128xf32>
    %287 = vector.shape_cast %286 : vector<1x2x128xf32> to vector<2x128xf32>
    %cst_81 = arith.constant dense<0.000000e+00> : vector<2x128xf32>
    %288 = tpu.matmul %245, %3, %cst_81 {dimension_numbers = #tpu.dot_dimension_numbers<[1], [0], [0], [1], [0, 0, 1, 1], [], []>} : vector<2x32xf32>, vector<32x128xf32>, vector<2x128xf32> -> vector<2x128xf32>
    %289 = arith.addf %287, %288 : vector<2x128xf32>
    %290 = vector.extract_strided_slice %289 {offsets = [0, 0], sizes = [2, 32], strides = [1, 1]} : vector<2x128xf32> to vector<2x32xf32>
    %291 = arith.negf %290 : vector<2x32xf32>
    %292 = math.exp %291 : vector<2x32xf32>
    %cst_82 = arith.constant 1.000000e+00 : f32
    %293 = vector.broadcast %cst_82 : f32 to vector<2x32xf32>
    %294 = arith.addf %293, %292 : vector<2x32xf32>
    %295 = arith.divf %293, %294 : vector<2x32xf32>
    %296 = vector.extract_strided_slice %289 {offsets = [0, 32], sizes = [2, 32], strides = [1, 1]} : vector<2x128xf32> to vector<2x32xf32>
    %297 = arith.negf %296 : vector<2x32xf32>
    %298 = math.exp %297 : vector<2x32xf32>
    %cst_83 = arith.constant 1.000000e+00 : f32
    %299 = vector.broadcast %cst_83 : f32 to vector<2x32xf32>
    %300 = arith.addf %299, %298 : vector<2x32xf32>
    %301 = arith.divf %299, %300 : vector<2x32xf32>
    %302 = vector.extract_strided_slice %289 {offsets = [0, 64], sizes = [2, 32], strides = [1, 1]} : vector<2x128xf32> to vector<2x32xf32>
    %303 = math.tanh %302 : vector<2x32xf32>
    %304 = vector.extract_strided_slice %289 {offsets = [0, 96], sizes = [2, 32], strides = [1, 1]} : vector<2x128xf32> to vector<2x32xf32>
    %305 = arith.negf %304 : vector<2x32xf32>
    %306 = math.exp %305 : vector<2x32xf32>
    %cst_84 = arith.constant 1.000000e+00 : f32
    %307 = vector.broadcast %cst_84 : f32 to vector<2x32xf32>
    %308 = arith.addf %307, %306 : vector<2x32xf32>
    %309 = arith.divf %307, %308 : vector<2x32xf32>
    %310 = arith.mulf %301, %243 : vector<2x32xf32>
    %311 = arith.mulf %295, %303 : vector<2x32xf32>
    %312 = arith.addf %310, %311 : vector<2x32xf32>
    %313 = math.tanh %312 : vector<2x32xf32>
    %314 = arith.mulf %309, %313 : vector<2x32xf32>
    %315 = arith.index_cast %c4_i32 : i32 to index
    %c0_85 = arith.constant 0 : index
    %c0_86 = arith.constant 0 : index
    %316 = vector.load %arg5[%315, %c0_85, %c0_86] : memref<8x2x32xf32, #tpu.memory_space<vmem>>, vector<1x2x32xf32>
    %317 = vector.shape_cast %316 : vector<1x2x32xf32> to vector<2x32xf32>
    %318 = vector.shape_cast %314 : vector<2x32xf32> to vector<1x2x32xf32>
    tpu.vector_store %arg5[%315, %c0_85, %c0_86], %318 {strides = array<i32>} : memref<8x2x32xf32, #tpu.memory_space<vmem>>, vector<1x2x32xf32>,
    %c7_i32_87 = arith.constant 7 : i32
    %319 = arith.subi %c7_i32_87, %c4_i32 : i32
    %320 = arith.index_cast %319 : i32 to index
    %c0_88 = arith.constant 0 : index
    %c0_89 = arith.constant 0 : index
    %321 = vector.load %arg2[%320, %c0_88, %c0_89] : memref<8x2x128xf32, #tpu.memory_space<vmem>>, vector<1x2x128xf32>
    %322 = vector.shape_cast %321 : vector<1x2x128xf32> to vector<2x128xf32>
    %cst_90 = arith.constant dense<0.000000e+00> : vector<2x128xf32>
    %323 = tpu.matmul %280, %4, %cst_90 {dimension_numbers = #tpu.dot_dimension_numbers<[1], [0], [0], [1], [0, 0, 1, 1], [], []>} : vector<2x32xf32>, vector<32x128xf32>, vector<2x128xf32> -> vector<2x128xf32>
    %324 = arith.addf %322, %323 : vector<2x128xf32>
    %325 = vector.extract_strided_slice %324 {offsets = [0, 0], sizes = [2, 32], strides = [1, 1]} : vector<2x128xf32> to vector<2x32xf32>
    %326 = arith.negf %325 : vector<2x32xf32>
    %327 = math.exp %326 : vector<2x32xf32>
    %cst_91 = arith.constant 1.000000e+00 : f32
    %328 = vector.broadcast %cst_91 : f32 to vector<2x32xf32>
    %329 = arith.addf %328, %327 : vector<2x32xf32>
    %330 = arith.divf %328, %329 : vector<2x32xf32>
    %331 = vector.extract_strided_slice %324 {offsets = [0, 32], sizes = [2, 32], strides = [1, 1]} : vector<2x128xf32> to vector<2x32xf32>
    %332 = arith.negf %331 : vector<2x32xf32>
    %333 = math.exp %332 : vector<2x32xf32>
    %cst_92 = arith.constant 1.000000e+00 : f32
    %334 = vector.broadcast %cst_92 : f32 to vector<2x32xf32>
    %335 = arith.addf %334, %333 : vector<2x32xf32>
    %336 = arith.divf %334, %335 : vector<2x32xf32>
    %337 = vector.extract_strided_slice %324 {offsets = [0, 64], sizes = [2, 32], strides = [1, 1]} : vector<2x128xf32> to vector<2x32xf32>
    %338 = math.tanh %337 : vector<2x32xf32>
    %339 = vector.extract_strided_slice %324 {offsets = [0, 96], sizes = [2, 32], strides = [1, 1]} : vector<2x128xf32> to vector<2x32xf32>
    %340 = arith.negf %339 : vector<2x32xf32>
    %341 = math.exp %340 : vector<2x32xf32>
    %cst_93 = arith.constant 1.000000e+00 : f32
    %342 = vector.broadcast %cst_93 : f32 to vector<2x32xf32>
    %343 = arith.addf %342, %341 : vector<2x32xf32>
    %344 = arith.divf %342, %343 : vector<2x32xf32>
    %345 = arith.mulf %336, %278 : vector<2x32xf32>
    %346 = arith.mulf %330, %338 : vector<2x32xf32>
    %347 = arith.addf %345, %346 : vector<2x32xf32>
    %348 = math.tanh %347 : vector<2x32xf32>
    %349 = arith.mulf %344, %348 : vector<2x32xf32>
    %350 = arith.index_cast %319 : i32 to index
    %c0_94 = arith.constant 0 : index
    %c0_95 = arith.constant 0 : index
    %351 = vector.load %arg6[%350, %c0_94, %c0_95] : memref<8x2x32xf32, #tpu.memory_space<vmem>>, vector<1x2x32xf32>
    %352 = vector.shape_cast %351 : vector<1x2x32xf32> to vector<2x32xf32>
    %353 = vector.shape_cast %349 : vector<2x32xf32> to vector<1x2x32xf32>
    tpu.vector_store %arg6[%350, %c0_94, %c0_95], %353 {strides = array<i32>} : memref<8x2x32xf32, #tpu.memory_space<vmem>>, vector<1x2x32xf32>,
    %c5_i32 = arith.constant 5 : i32
    %354 = arith.index_cast %c5_i32 : i32 to index
    %c0_96 = arith.constant 0 : index
    %c0_97 = arith.constant 0 : index
    %355 = vector.load %arg1[%354, %c0_96, %c0_97] : memref<8x2x128xf32, #tpu.memory_space<vmem>>, vector<1x2x128xf32>
    %356 = vector.shape_cast %355 : vector<1x2x128xf32> to vector<2x128xf32>
    %cst_98 = arith.constant dense<0.000000e+00> : vector<2x128xf32>
    %357 = tpu.matmul %314, %3, %cst_98 {dimension_numbers = #tpu.dot_dimension_numbers<[1], [0], [0], [1], [0, 0, 1, 1], [], []>} : vector<2x32xf32>, vector<32x128xf32>, vector<2x128xf32> -> vector<2x128xf32>
    %358 = arith.addf %356, %357 : vector<2x128xf32>
    %359 = vector.extract_strided_slice %358 {offsets = [0, 0], sizes = [2, 32], strides = [1, 1]} : vector<2x128xf32> to vector<2x32xf32>
    %360 = arith.negf %359 : vector<2x32xf32>
    %361 = math.exp %360 : vector<2x32xf32>
    %cst_99 = arith.constant 1.000000e+00 : f32
    %362 = vector.broadcast %cst_99 : f32 to vector<2x32xf32>
    %363 = arith.addf %362, %361 : vector<2x32xf32>
    %364 = arith.divf %362, %363 : vector<2x32xf32>
    %365 = vector.extract_strided_slice %358 {offsets = [0, 32], sizes = [2, 32], strides = [1, 1]} : vector<2x128xf32> to vector<2x32xf32>
    %366 = arith.negf %365 : vector<2x32xf32>
    %367 = math.exp %366 : vector<2x32xf32>
    %cst_100 = arith.constant 1.000000e+00 : f32
    %368 = vector.broadcast %cst_100 : f32 to vector<2x32xf32>
    %369 = arith.addf %368, %367 : vector<2x32xf32>
    %370 = arith.divf %368, %369 : vector<2x32xf32>
    %371 = vector.extract_strided_slice %358 {offsets = [0, 64], sizes = [2, 32], strides = [1, 1]} : vector<2x128xf32> to vector<2x32xf32>
    %372 = math.tanh %371 : vector<2x32xf32>
    %373 = vector.extract_strided_slice %358 {offsets = [0, 96], sizes = [2, 32], strides = [1, 1]} : vector<2x128xf32> to vector<2x32xf32>
    %374 = arith.negf %373 : vector<2x32xf32>
    %375 = math.exp %374 : vector<2x32xf32>
    %cst_101 = arith.constant 1.000000e+00 : f32
    %376 = vector.broadcast %cst_101 : f32 to vector<2x32xf32>
    %377 = arith.addf %376, %375 : vector<2x32xf32>
    %378 = arith.divf %376, %377 : vector<2x32xf32>
    %379 = arith.mulf %370, %312 : vector<2x32xf32>
    %380 = arith.mulf %364, %372 : vector<2x32xf32>
    %381 = arith.addf %379, %380 : vector<2x32xf32>
    %382 = math.tanh %381 : vector<2x32xf32>
    %383 = arith.mulf %378, %382 : vector<2x32xf32>
    %384 = arith.index_cast %c5_i32 : i32 to index
    %c0_102 = arith.constant 0 : index
    %c0_103 = arith.constant 0 : index
    %385 = vector.load %arg5[%384, %c0_102, %c0_103] : memref<8x2x32xf32, #tpu.memory_space<vmem>>, vector<1x2x32xf32>
    %386 = vector.shape_cast %385 : vector<1x2x32xf32> to vector<2x32xf32>
    %387 = vector.shape_cast %383 : vector<2x32xf32> to vector<1x2x32xf32>
    tpu.vector_store %arg5[%384, %c0_102, %c0_103], %387 {strides = array<i32>} : memref<8x2x32xf32, #tpu.memory_space<vmem>>, vector<1x2x32xf32>,
    %c7_i32_104 = arith.constant 7 : i32
    %388 = arith.subi %c7_i32_104, %c5_i32 : i32
    %389 = arith.index_cast %388 : i32 to index
    %c0_105 = arith.constant 0 : index
    %c0_106 = arith.constant 0 : index
    %390 = vector.load %arg2[%389, %c0_105, %c0_106] : memref<8x2x128xf32, #tpu.memory_space<vmem>>, vector<1x2x128xf32>
    %391 = vector.shape_cast %390 : vector<1x2x128xf32> to vector<2x128xf32>
    %cst_107 = arith.constant dense<0.000000e+00> : vector<2x128xf32>
    %392 = tpu.matmul %349, %4, %cst_107 {dimension_numbers = #tpu.dot_dimension_numbers<[1], [0], [0], [1], [0, 0, 1, 1], [], []>} : vector<2x32xf32>, vector<32x128xf32>, vector<2x128xf32> -> vector<2x128xf32>
    %393 = arith.addf %391, %392 : vector<2x128xf32>
    %394 = vector.extract_strided_slice %393 {offsets = [0, 0], sizes = [2, 32], strides = [1, 1]} : vector<2x128xf32> to vector<2x32xf32>
    %395 = arith.negf %394 : vector<2x32xf32>
    %396 = math.exp %395 : vector<2x32xf32>
    %cst_108 = arith.constant 1.000000e+00 : f32
    %397 = vector.broadcast %cst_108 : f32 to vector<2x32xf32>
    %398 = arith.addf %397, %396 : vector<2x32xf32>
    %399 = arith.divf %397, %398 : vector<2x32xf32>
    %400 = vector.extract_strided_slice %393 {offsets = [0, 32], sizes = [2, 32], strides = [1, 1]} : vector<2x128xf32> to vector<2x32xf32>
    %401 = arith.negf %400 : vector<2x32xf32>
    %402 = math.exp %401 : vector<2x32xf32>
    %cst_109 = arith.constant 1.000000e+00 : f32
    %403 = vector.broadcast %cst_109 : f32 to vector<2x32xf32>
    %404 = arith.addf %403, %402 : vector<2x32xf32>
    %405 = arith.divf %403, %404 : vector<2x32xf32>
    %406 = vector.extract_strided_slice %393 {offsets = [0, 64], sizes = [2, 32], strides = [1, 1]} : vector<2x128xf32> to vector<2x32xf32>
    %407 = math.tanh %406 : vector<2x32xf32>
    %408 = vector.extract_strided_slice %393 {offsets = [0, 96], sizes = [2, 32], strides = [1, 1]} : vector<2x128xf32> to vector<2x32xf32>
    %409 = arith.negf %408 : vector<2x32xf32>
    %410 = math.exp %409 : vector<2x32xf32>
    %cst_110 = arith.constant 1.000000e+00 : f32
    %411 = vector.broadcast %cst_110 : f32 to vector<2x32xf32>
    %412 = arith.addf %411, %410 : vector<2x32xf32>
    %413 = arith.divf %411, %412 : vector<2x32xf32>
    %414 = arith.mulf %405, %347 : vector<2x32xf32>
    %415 = arith.mulf %399, %407 : vector<2x32xf32>
    %416 = arith.addf %414, %415 : vector<2x32xf32>
    %417 = math.tanh %416 : vector<2x32xf32>
    %418 = arith.mulf %413, %417 : vector<2x32xf32>
    %419 = arith.index_cast %388 : i32 to index
    %c0_111 = arith.constant 0 : index
    %c0_112 = arith.constant 0 : index
    %420 = vector.load %arg6[%419, %c0_111, %c0_112] : memref<8x2x32xf32, #tpu.memory_space<vmem>>, vector<1x2x32xf32>
    %421 = vector.shape_cast %420 : vector<1x2x32xf32> to vector<2x32xf32>
    %422 = vector.shape_cast %418 : vector<2x32xf32> to vector<1x2x32xf32>
    tpu.vector_store %arg6[%419, %c0_111, %c0_112], %422 {strides = array<i32>} : memref<8x2x32xf32, #tpu.memory_space<vmem>>, vector<1x2x32xf32>,
    %c6_i32 = arith.constant 6 : i32
    %423 = arith.index_cast %c6_i32 : i32 to index
    %c0_113 = arith.constant 0 : index
    %c0_114 = arith.constant 0 : index
    %424 = vector.load %arg1[%423, %c0_113, %c0_114] : memref<8x2x128xf32, #tpu.memory_space<vmem>>, vector<1x2x128xf32>
    %425 = vector.shape_cast %424 : vector<1x2x128xf32> to vector<2x128xf32>
    %cst_115 = arith.constant dense<0.000000e+00> : vector<2x128xf32>
    %426 = tpu.matmul %383, %3, %cst_115 {dimension_numbers = #tpu.dot_dimension_numbers<[1], [0], [0], [1], [0, 0, 1, 1], [], []>} : vector<2x32xf32>, vector<32x128xf32>, vector<2x128xf32> -> vector<2x128xf32>
    %427 = arith.addf %425, %426 : vector<2x128xf32>
    %428 = vector.extract_strided_slice %427 {offsets = [0, 0], sizes = [2, 32], strides = [1, 1]} : vector<2x128xf32> to vector<2x32xf32>
    %429 = arith.negf %428 : vector<2x32xf32>
    %430 = math.exp %429 : vector<2x32xf32>
    %cst_116 = arith.constant 1.000000e+00 : f32
    %431 = vector.broadcast %cst_116 : f32 to vector<2x32xf32>
    %432 = arith.addf %431, %430 : vector<2x32xf32>
    %433 = arith.divf %431, %432 : vector<2x32xf32>
    %434 = vector.extract_strided_slice %427 {offsets = [0, 32], sizes = [2, 32], strides = [1, 1]} : vector<2x128xf32> to vector<2x32xf32>
    %435 = arith.negf %434 : vector<2x32xf32>
    %436 = math.exp %435 : vector<2x32xf32>
    %cst_117 = arith.constant 1.000000e+00 : f32
    %437 = vector.broadcast %cst_117 : f32 to vector<2x32xf32>
    %438 = arith.addf %437, %436 : vector<2x32xf32>
    %439 = arith.divf %437, %438 : vector<2x32xf32>
    %440 = vector.extract_strided_slice %427 {offsets = [0, 64], sizes = [2, 32], strides = [1, 1]} : vector<2x128xf32> to vector<2x32xf32>
    %441 = math.tanh %440 : vector<2x32xf32>
    %442 = vector.extract_strided_slice %427 {offsets = [0, 96], sizes = [2, 32], strides = [1, 1]} : vector<2x128xf32> to vector<2x32xf32>
    %443 = arith.negf %442 : vector<2x32xf32>
    %444 = math.exp %443 : vector<2x32xf32>
    %cst_118 = arith.constant 1.000000e+00 : f32
    %445 = vector.broadcast %cst_118 : f32 to vector<2x32xf32>
    %446 = arith.addf %445, %444 : vector<2x32xf32>
    %447 = arith.divf %445, %446 : vector<2x32xf32>
    %448 = arith.mulf %439, %381 : vector<2x32xf32>
    %449 = arith.mulf %433, %441 : vector<2x32xf32>
    %450 = arith.addf %448, %449 : vector<2x32xf32>
    %451 = math.tanh %450 : vector<2x32xf32>
    %452 = arith.mulf %447, %451 : vector<2x32xf32>
    %453 = arith.index_cast %c6_i32 : i32 to index
    %c0_119 = arith.constant 0 : index
    %c0_120 = arith.constant 0 : index
    %454 = vector.load %arg5[%453, %c0_119, %c0_120] : memref<8x2x32xf32, #tpu.memory_space<vmem>>, vector<1x2x32xf32>
    %455 = vector.shape_cast %454 : vector<1x2x32xf32> to vector<2x32xf32>
    %456 = vector.shape_cast %452 : vector<2x32xf32> to vector<1x2x32xf32>
    tpu.vector_store %arg5[%453, %c0_119, %c0_120], %456 {strides = array<i32>} : memref<8x2x32xf32, #tpu.memory_space<vmem>>, vector<1x2x32xf32>,
    %c7_i32_121 = arith.constant 7 : i32
    %457 = arith.subi %c7_i32_121, %c6_i32 : i32
    %458 = arith.index_cast %457 : i32 to index
    %c0_122 = arith.constant 0 : index
    %c0_123 = arith.constant 0 : index
    %459 = vector.load %arg2[%458, %c0_122, %c0_123] : memref<8x2x128xf32, #tpu.memory_space<vmem>>, vector<1x2x128xf32>
    %460 = vector.shape_cast %459 : vector<1x2x128xf32> to vector<2x128xf32>
    %cst_124 = arith.constant dense<0.000000e+00> : vector<2x128xf32>
    %461 = tpu.matmul %418, %4, %cst_124 {dimension_numbers = #tpu.dot_dimension_numbers<[1], [0], [0], [1], [0, 0, 1, 1], [], []>} : vector<2x32xf32>, vector<32x128xf32>, vector<2x128xf32> -> vector<2x128xf32>
    %462 = arith.addf %460, %461 : vector<2x128xf32>
    %463 = vector.extract_strided_slice %462 {offsets = [0, 0], sizes = [2, 32], strides = [1, 1]} : vector<2x128xf32> to vector<2x32xf32>
    %464 = arith.negf %463 : vector<2x32xf32>
    %465 = math.exp %464 : vector<2x32xf32>
    %cst_125 = arith.constant 1.000000e+00 : f32
    %466 = vector.broadcast %cst_125 : f32 to vector<2x32xf32>
    %467 = arith.addf %466, %465 : vector<2x32xf32>
    %468 = arith.divf %466, %467 : vector<2x32xf32>
    %469 = vector.extract_strided_slice %462 {offsets = [0, 32], sizes = [2, 32], strides = [1, 1]} : vector<2x128xf32> to vector<2x32xf32>
    %470 = arith.negf %469 : vector<2x32xf32>
    %471 = math.exp %470 : vector<2x32xf32>
    %cst_126 = arith.constant 1.000000e+00 : f32
    %472 = vector.broadcast %cst_126 : f32 to vector<2x32xf32>
    %473 = arith.addf %472, %471 : vector<2x32xf32>
    %474 = arith.divf %472, %473 : vector<2x32xf32>
    %475 = vector.extract_strided_slice %462 {offsets = [0, 64], sizes = [2, 32], strides = [1, 1]} : vector<2x128xf32> to vector<2x32xf32>
    %476 = math.tanh %475 : vector<2x32xf32>
    %477 = vector.extract_strided_slice %462 {offsets = [0, 96], sizes = [2, 32], strides = [1, 1]} : vector<2x128xf32> to vector<2x32xf32>
    %478 = arith.negf %477 : vector<2x32xf32>
    %479 = math.exp %478 : vector<2x32xf32>
    %cst_127 = arith.constant 1.000000e+00 : f32
    %480 = vector.broadcast %cst_127 : f32 to vector<2x32xf32>
    %481 = arith.addf %480, %479 : vector<2x32xf32>
    %482 = arith.divf %480, %481 : vector<2x32xf32>
    %483 = arith.mulf %474, %416 : vector<2x32xf32>
    %484 = arith.mulf %468, %476 : vector<2x32xf32>
    %485 = arith.addf %483, %484 : vector<2x32xf32>
    %486 = math.tanh %485 : vector<2x32xf32>
    %487 = arith.mulf %482, %486 : vector<2x32xf32>
    %488 = arith.index_cast %457 : i32 to index
    %c0_128 = arith.constant 0 : index
    %c0_129 = arith.constant 0 : index
    %489 = vector.load %arg6[%488, %c0_128, %c0_129] : memref<8x2x32xf32, #tpu.memory_space<vmem>>, vector<1x2x32xf32>
    %490 = vector.shape_cast %489 : vector<1x2x32xf32> to vector<2x32xf32>
    %491 = vector.shape_cast %487 : vector<2x32xf32> to vector<1x2x32xf32>
    tpu.vector_store %arg6[%488, %c0_128, %c0_129], %491 {strides = array<i32>} : memref<8x2x32xf32, #tpu.memory_space<vmem>>, vector<1x2x32xf32>,
    %c7_i32_130 = arith.constant 7 : i32
    %492 = arith.index_cast %c7_i32_130 : i32 to index
    %c0_131 = arith.constant 0 : index
    %c0_132 = arith.constant 0 : index
    %493 = vector.load %arg1[%492, %c0_131, %c0_132] : memref<8x2x128xf32, #tpu.memory_space<vmem>>, vector<1x2x128xf32>
    %494 = vector.shape_cast %493 : vector<1x2x128xf32> to vector<2x128xf32>
    %cst_133 = arith.constant dense<0.000000e+00> : vector<2x128xf32>
    %495 = tpu.matmul %452, %3, %cst_133 {dimension_numbers = #tpu.dot_dimension_numbers<[1], [0], [0], [1], [0, 0, 1, 1], [], []>} : vector<2x32xf32>, vector<32x128xf32>, vector<2x128xf32> -> vector<2x128xf32>
    %496 = arith.addf %494, %495 : vector<2x128xf32>
    %497 = vector.extract_strided_slice %496 {offsets = [0, 0], sizes = [2, 32], strides = [1, 1]} : vector<2x128xf32> to vector<2x32xf32>
    %498 = arith.negf %497 : vector<2x32xf32>
    %499 = math.exp %498 : vector<2x32xf32>
    %cst_134 = arith.constant 1.000000e+00 : f32
    %500 = vector.broadcast %cst_134 : f32 to vector<2x32xf32>
    %501 = arith.addf %500, %499 : vector<2x32xf32>
    %502 = arith.divf %500, %501 : vector<2x32xf32>
    %503 = vector.extract_strided_slice %496 {offsets = [0, 32], sizes = [2, 32], strides = [1, 1]} : vector<2x128xf32> to vector<2x32xf32>
    %504 = arith.negf %503 : vector<2x32xf32>
    %505 = math.exp %504 : vector<2x32xf32>
    %cst_135 = arith.constant 1.000000e+00 : f32
    %506 = vector.broadcast %cst_135 : f32 to vector<2x32xf32>
    %507 = arith.addf %506, %505 : vector<2x32xf32>
    %508 = arith.divf %506, %507 : vector<2x32xf32>
    %509 = vector.extract_strided_slice %496 {offsets = [0, 64], sizes = [2, 32], strides = [1, 1]} : vector<2x128xf32> to vector<2x32xf32>
    %510 = math.tanh %509 : vector<2x32xf32>
    %511 = vector.extract_strided_slice %496 {offsets = [0, 96], sizes = [2, 32], strides = [1, 1]} : vector<2x128xf32> to vector<2x32xf32>
    %512 = arith.negf %511 : vector<2x32xf32>
    %513 = math.exp %512 : vector<2x32xf32>
    %cst_136 = arith.constant 1.000000e+00 : f32
    %514 = vector.broadcast %cst_136 : f32 to vector<2x32xf32>
    %515 = arith.addf %514, %513 : vector<2x32xf32>
    %516 = arith.divf %514, %515 : vector<2x32xf32>
    %517 = arith.mulf %508, %450 : vector<2x32xf32>
    %518 = arith.mulf %502, %510 : vector<2x32xf32>
    %519 = arith.addf %517, %518 : vector<2x32xf32>
    %520 = math.tanh %519 : vector<2x32xf32>
    %521 = arith.mulf %516, %520 : vector<2x32xf32>
    %522 = arith.index_cast %c7_i32_130 : i32 to index
    %c0_137 = arith.constant 0 : index
    %c0_138 = arith.constant 0 : index
    %523 = vector.load %arg5[%522, %c0_137, %c0_138] : memref<8x2x32xf32, #tpu.memory_space<vmem>>, vector<1x2x32xf32>
    %524 = vector.shape_cast %523 : vector<1x2x32xf32> to vector<2x32xf32>
    %525 = vector.shape_cast %521 : vector<2x32xf32> to vector<1x2x32xf32>
    tpu.vector_store %arg5[%522, %c0_137, %c0_138], %525 {strides = array<i32>} : memref<8x2x32xf32, #tpu.memory_space<vmem>>, vector<1x2x32xf32>,
    %c7_i32_139 = arith.constant 7 : i32
    %526 = arith.subi %c7_i32_139, %c7_i32_130 : i32
    %527 = arith.index_cast %526 : i32 to index
    %c0_140 = arith.constant 0 : index
    %c0_141 = arith.constant 0 : index
    %528 = vector.load %arg2[%527, %c0_140, %c0_141] : memref<8x2x128xf32, #tpu.memory_space<vmem>>, vector<1x2x128xf32>
    %529 = vector.shape_cast %528 : vector<1x2x128xf32> to vector<2x128xf32>
    %cst_142 = arith.constant dense<0.000000e+00> : vector<2x128xf32>
    %530 = tpu.matmul %487, %4, %cst_142 {dimension_numbers = #tpu.dot_dimension_numbers<[1], [0], [0], [1], [0, 0, 1, 1], [], []>} : vector<2x32xf32>, vector<32x128xf32>, vector<2x128xf32> -> vector<2x128xf32>
    %531 = arith.addf %529, %530 : vector<2x128xf32>
    %532 = vector.extract_strided_slice %531 {offsets = [0, 0], sizes = [2, 32], strides = [1, 1]} : vector<2x128xf32> to vector<2x32xf32>
    %533 = arith.negf %532 : vector<2x32xf32>
    %534 = math.exp %533 : vector<2x32xf32>
    %cst_143 = arith.constant 1.000000e+00 : f32
    %535 = vector.broadcast %cst_143 : f32 to vector<2x32xf32>
    %536 = arith.addf %535, %534 : vector<2x32xf32>
    %537 = arith.divf %535, %536 : vector<2x32xf32>
    %538 = vector.extract_strided_slice %531 {offsets = [0, 32], sizes = [2, 32], strides = [1, 1]} : vector<2x128xf32> to vector<2x32xf32>
    %539 = arith.negf %538 : vector<2x32xf32>
    %540 = math.exp %539 : vector<2x32xf32>
    %cst_144 = arith.constant 1.000000e+00 : f32
    %541 = vector.broadcast %cst_144 : f32 to vector<2x32xf32>
    %542 = arith.addf %541, %540 : vector<2x32xf32>
    %543 = arith.divf %541, %542 : vector<2x32xf32>
    %544 = vector.extract_strided_slice %531 {offsets = [0, 64], sizes = [2, 32], strides = [1, 1]} : vector<2x128xf32> to vector<2x32xf32>
    %545 = math.tanh %544 : vector<2x32xf32>
    %546 = vector.extract_strided_slice %531 {offsets = [0, 96], sizes = [2, 32], strides = [1, 1]} : vector<2x128xf32> to vector<2x32xf32>
    %547 = arith.negf %546 : vector<2x32xf32>
    %548 = math.exp %547 : vector<2x32xf32>
    %cst_145 = arith.constant 1.000000e+00 : f32
    %549 = vector.broadcast %cst_145 : f32 to vector<2x32xf32>
    %550 = arith.addf %549, %548 : vector<2x32xf32>
    %551 = arith.divf %549, %550 : vector<2x32xf32>
    %552 = arith.mulf %543, %485 : vector<2x32xf32>
    %553 = arith.mulf %537, %545 : vector<2x32xf32>
    %554 = arith.addf %552, %553 : vector<2x32xf32>
    %555 = math.tanh %554 : vector<2x32xf32>
    %556 = arith.mulf %551, %555 : vector<2x32xf32>
    %557 = arith.index_cast %526 : i32 to index
    %c0_146 = arith.constant 0 : index
    %c0_147 = arith.constant 0 : index
    %558 = vector.load %arg6[%557, %c0_146, %c0_147] : memref<8x2x32xf32, #tpu.memory_space<vmem>>, vector<1x2x32xf32>
    %559 = vector.shape_cast %558 : vector<1x2x32xf32> to vector<2x32xf32>
    %560 = vector.shape_cast %556 : vector<2x32xf32> to vector<1x2x32xf32>
    tpu.vector_store %arg6[%557, %c0_146, %c0_147], %560 {strides = array<i32>} : memref<8x2x32xf32, #tpu.memory_space<vmem>>, vector<1x2x32xf32>,
    %c8_i32 = arith.constant 8 : i32
    %c0_148 = arith.constant 0 : index
    %c0_149 = arith.constant 0 : index
    %561 = vector.load %arg7[%c0_148, %c0_149] : memref<2x32xf32, #tpu.memory_space<vmem>>, vector<2x32xf32>
    tpu.vector_store %arg7[%c0_148, %c0_149], %521 {strides = array<i32>} : memref<2x32xf32, #tpu.memory_space<vmem>>, vector<2x32xf32>,
    %c0_150 = arith.constant 0 : index
    %c0_151 = arith.constant 0 : index
    %562 = vector.load %arg8[%c0_150, %c0_151] : memref<2x32xf32, #tpu.memory_space<vmem>>, vector<2x32xf32>
    tpu.vector_store %arg8[%c0_150, %c0_151], %519 {strides = array<i32>} : memref<2x32xf32, #tpu.memory_space<vmem>>, vector<2x32xf32>,
    %c0_152 = arith.constant 0 : index
    %c0_153 = arith.constant 0 : index
    %563 = vector.load %arg9[%c0_152, %c0_153] : memref<2x32xf32, #tpu.memory_space<vmem>>, vector<2x32xf32>
    tpu.vector_store %arg9[%c0_152, %c0_153], %556 {strides = array<i32>} : memref<2x32xf32, #tpu.memory_space<vmem>>, vector<2x32xf32>,
    %c0_154 = arith.constant 0 : index
    %c0_155 = arith.constant 0 : index
    %564 = vector.load %arg10[%c0_154, %c0_155] : memref<2x32xf32, #tpu.memory_space<vmem>>, vector<2x32xf32>
    tpu.vector_store %arg10[%c0_154, %c0_155], %554 {strides = array<i32>} : memref<2x32xf32, #tpu.memory_space<vmem>>, vector<2x32xf32>,
    return
  }
  func.func @transform_0(%arg0: i32) -> (i32, i32, i32) {
    %c0_i32 = arith.constant 0 : i32
    %c0_i32_0 = arith.constant 0 : i32
    %c0_i32_1 = arith.constant 0 : i32
    return %arg0, %c0_i32, %c0_i32_0 : i32, i32, i32
  }
  func.func @transform_1(%arg0: i32) -> (i32, i32, i32) {
    %c0_i32 = arith.constant 0 : i32
    %0 = arith.subi %c0_i32, %arg0 : i32
    %c0_i32_0 = arith.constant 0 : i32
    %c0_i32_1 = arith.constant 0 : i32
    %c0_i32_2 = arith.constant 0 : i32
    return %0, %c0_i32_0, %c0_i32_1 : i32, i32, i32
  }
  func.func @transform_2(%arg0: i32) -> (i32, i32) {
    %c0_i32 = arith.constant 0 : i32
    %c0_i32_0 = arith.constant 0 : i32
    %c0_i32_1 = arith.constant 0 : i32
    return %c0_i32, %c0_i32_0 : i32, i32
  }
  func.func @transform_3(%arg0: i32) -> (i32, i32) {
    %c0_i32 = arith.constant 0 : i32
    %c0_i32_0 = arith.constant 0 : i32
    %c0_i32_1 = arith.constant 0 : i32
    return %c0_i32, %c0_i32_0 : i32, i32
  }
  func.func @transform_4(%arg0: i32) -> (i32, i32, i32) {
    %c0_i32 = arith.constant 0 : i32
    %c0_i32_0 = arith.constant 0 : i32
    %c0_i32_1 = arith.constant 0 : i32
    return %arg0, %c0_i32, %c0_i32_0 : i32, i32, i32
  }
  func.func @transform_5(%arg0: i32) -> (i32, i32, i32) {
    %c0_i32 = arith.constant 0 : i32
    %0 = arith.subi %c0_i32, %arg0 : i32
    %c0_i32_0 = arith.constant 0 : i32
    %c0_i32_1 = arith.constant 0 : i32
    %c0_i32_2 = arith.constant 0 : i32
    return %0, %c0_i32_0, %c0_i32_1 : i32, i32, i32
  }
}

module attributes {stable_mosaic.version = 11 : i64} {
  func.func @_proj_first_kernel(%arg0: i32, %arg1: memref<16x8xf32, #tpu.memory_space<vmem>>, %arg2: memref<8x256xf32, #tpu.memory_space<vmem>>, %arg3: memref<1x256xf32, #tpu.memory_space<vmem>>, %arg4: memref<16x128xf32, #tpu.memory_space<vmem>>, %arg5: memref<16x128xf32, #tpu.memory_space<vmem>>) attributes {dimension_semantics = [#tpu.dimension_semantics<parallel>], iteration_bounds = array<i64: 1>, scalar_prefetch = 0 : i64, scratch_operands = 0 : i64, tpu.core_type = #tpu.core_type<tc>, window_params = [{transform_indices = @transform_0, window_bounds = array<i64: 16, 8>}, {pipeline_mode = #tpu.pipeline_mode<synchronous>, transform_indices = @transform_1, window_bounds = array<i64: 8, 256>}, {pipeline_mode = #tpu.pipeline_mode<synchronous>, transform_indices = @transform_2, window_bounds = array<i64: 1, 256>}, {transform_indices = @transform_3, window_bounds = array<i64: 16, 128>}, {transform_indices = @transform_4, window_bounds = array<i64: 16, 128>}]} {
    %c0 = arith.constant 0 : index
    %c0_0 = arith.constant 0 : index
    %0 = vector.load %arg1[%c0, %c0_0] : memref<16x8xf32, #tpu.memory_space<vmem>>, vector<16x8xf32>
    %c0_1 = arith.constant 0 : index
    %c0_2 = arith.constant 0 : index
    %1 = vector.load %arg2[%c0_1, %c0_2] : memref<8x256xf32, #tpu.memory_space<vmem>>, vector<8x256xf32>
    %cst = arith.constant dense<0.000000e+00> : vector<16x256xf32>
    %2 = tpu.matmul %0, %1, %cst {dimension_numbers = #tpu.dot_dimension_numbers<[1], [0], [0], [1], [0, 0, 1, 1], [], []>} : vector<16x8xf32>, vector<8x256xf32>, vector<16x256xf32> -> vector<16x256xf32>
    %c0_3 = arith.constant 0 : index
    %c0_4 = arith.constant 0 : index
    %3 = vector.load %arg3[%c0_3, %c0_4] : memref<1x256xf32, #tpu.memory_space<vmem>>, vector<1x256xf32>
    %4 = vector.broadcast %3 : vector<1x256xf32> to vector<16x256xf32>
    %5 = arith.addf %2, %4 : vector<16x256xf32>
    %6 = vector.extract_strided_slice %5 {offsets = [0, 0], sizes = [16, 128], strides = [1, 1]} : vector<16x256xf32> to vector<16x128xf32>
    %c0_5 = arith.constant 0 : index
    %c0_6 = arith.constant 0 : index
    %7 = vector.load %arg4[%c0_5, %c0_6] : memref<16x128xf32, #tpu.memory_space<vmem>>, vector<16x128xf32>
    tpu.vector_store %arg4[%c0_5, %c0_6], %6 {strides = array<i32>} : memref<16x128xf32, #tpu.memory_space<vmem>>, vector<16x128xf32>,
    %8 = vector.extract_strided_slice %5 {offsets = [0, 128], sizes = [16, 128], strides = [1, 1]} : vector<16x256xf32> to vector<16x128xf32>
    %c0_7 = arith.constant 0 : index
    %c0_8 = arith.constant 0 : index
    %9 = vector.load %arg5[%c0_7, %c0_8] : memref<16x128xf32, #tpu.memory_space<vmem>>, vector<16x128xf32>
    tpu.vector_store %arg5[%c0_7, %c0_8], %8 {strides = array<i32>} : memref<16x128xf32, #tpu.memory_space<vmem>>, vector<16x128xf32>,
    return
  }
  func.func @transform_0(%arg0: i32) -> (i32, i32) {
    %c0_i32 = arith.constant 0 : i32
    %c0_i32_0 = arith.constant 0 : i32
    return %arg0, %c0_i32 : i32, i32
  }
  func.func @transform_1(%arg0: i32) -> (i32, i32) {
    %c0_i32 = arith.constant 0 : i32
    %c0_i32_0 = arith.constant 0 : i32
    %c0_i32_1 = arith.constant 0 : i32
    return %c0_i32, %c0_i32_0 : i32, i32
  }
  func.func @transform_2(%arg0: i32) -> (i32, i32) {
    %c0_i32 = arith.constant 0 : i32
    %c0_i32_0 = arith.constant 0 : i32
    %c0_i32_1 = arith.constant 0 : i32
    return %c0_i32, %c0_i32_0 : i32, i32
  }
  func.func @transform_3(%arg0: i32) -> (i32, i32) {
    %c0_i32 = arith.constant 0 : i32
    %c0_i32_0 = arith.constant 0 : i32
    return %arg0, %c0_i32 : i32, i32
  }
  func.func @transform_4(%arg0: i32) -> (i32, i32) {
    %c0_i32 = arith.constant 0 : i32
    %c0_i32_0 = arith.constant 0 : i32
    return %arg0, %c0_i32 : i32, i32
  }
}

module attributes {stable_mosaic.version = 11 : i64} {
  func.func @_recur_last_kernel(%arg0: i32, %arg1: memref<8x2x128xf32, #tpu.memory_space<vmem>>, %arg2: memref<8x2x128xf32, #tpu.memory_space<vmem>>, %arg3: memref<32x128xf32, #tpu.memory_space<vmem>>, %arg4: memref<32x8xf32, #tpu.memory_space<vmem>>, %arg5: memref<32x8xf32, #tpu.memory_space<vmem>>, %arg6: memref<1x8xf32, #tpu.memory_space<vmem>>, %arg7: memref<2x8xf32, #tpu.memory_space<vmem>>, %arg8: memref<2x32xf32, #tpu.memory_space<vmem>>, %arg9: memref<2x32xf32, #tpu.memory_space<vmem>>) attributes {dimension_semantics = [#tpu.dimension_semantics<arbitrary>], iteration_bounds = array<i64: 1>, scalar_prefetch = 0 : i64, scratch_operands = 2 : i64, tpu.core_type = #tpu.core_type<tc>, window_params = [{transform_indices = @transform_0, window_bounds = array<i64: 8, 2, 128>}, {pipeline_mode = #tpu.pipeline_mode<synchronous>, transform_indices = @transform_1, window_bounds = array<i64: 8, 2, 128>}, {pipeline_mode = #tpu.pipeline_mode<synchronous>, transform_indices = @transform_2, window_bounds = array<i64: 32, 128>}, {pipeline_mode = #tpu.pipeline_mode<synchronous>, transform_indices = @transform_3, window_bounds = array<i64: 32, 8>}, {pipeline_mode = #tpu.pipeline_mode<synchronous>, transform_indices = @transform_4, window_bounds = array<i64: 32, 8>}, {pipeline_mode = #tpu.pipeline_mode<synchronous>, transform_indices = @transform_5, window_bounds = array<i64: 1, 8>}, {pipeline_mode = #tpu.pipeline_mode<synchronous>, transform_indices = @transform_6, window_bounds = array<i64: 2, 8>}]} {
    %c0_i32 = arith.constant 0 : i32
    %0 = arith.cmpi eq, %arg0, %c0_i32 : i32
    %1 = arith.extui %0 : i1 to i32
    %c0_i32_0 = arith.constant 0 : i32
    %2 = arith.cmpi ne, %1, %c0_i32_0 : i32
    scf.if %2 {
      %cst_60 = arith.constant 0.000000e+00 : f32
      %251 = vector.broadcast %cst_60 : f32 to vector<2x32xf32>
      %c0_61 = arith.constant 0 : index
      %c0_62 = arith.constant 0 : index
      %252 = vector.load %arg8[%c0_61, %c0_62] : memref<2x32xf32, #tpu.memory_space<vmem>>, vector<2x32xf32>
      tpu.vector_store %arg8[%c0_61, %c0_62], %251 {strides = array<i32>} : memref<2x32xf32, #tpu.memory_space<vmem>>, vector<2x32xf32>,
      %cst_63 = arith.constant 0.000000e+00 : f32
      %253 = vector.broadcast %cst_63 : f32 to vector<2x32xf32>
      %c0_64 = arith.constant 0 : index
      %c0_65 = arith.constant 0 : index
      %254 = vector.load %arg9[%c0_64, %c0_65] : memref<2x32xf32, #tpu.memory_space<vmem>>, vector<2x32xf32>
      tpu.vector_store %arg9[%c0_64, %c0_65], %253 {strides = array<i32>} : memref<2x32xf32, #tpu.memory_space<vmem>>, vector<2x32xf32>,
    } else {
    }
    %c0 = arith.constant 0 : index
    %c0_1 = arith.constant 0 : index
    %3 = vector.load %arg3[%c0, %c0_1] : memref<32x128xf32, #tpu.memory_space<vmem>>, vector<32x128xf32>
    %c0_2 = arith.constant 0 : index
    %c0_3 = arith.constant 0 : index
    %4 = vector.load %arg8[%c0_2, %c0_3] : memref<2x32xf32, #tpu.memory_space<vmem>>, vector<2x32xf32>
    %c0_4 = arith.constant 0 : index
    %c0_5 = arith.constant 0 : index
    %5 = vector.load %arg9[%c0_4, %c0_5] : memref<2x32xf32, #tpu.memory_space<vmem>>, vector<2x32xf32>
    %c0_i32_6 = arith.constant 0 : i32
    %6 = arith.index_cast %c0_i32_6 : i32 to index
    %c0_7 = arith.constant 0 : index
    %c0_8 = arith.constant 0 : index
    %7 = vector.load %arg1[%6, %c0_7, %c0_8] : memref<8x2x128xf32, #tpu.memory_space<vmem>>, vector<1x2x128xf32>
    %8 = vector.shape_cast %7 : vector<1x2x128xf32> to vector<2x128xf32>
    %cst = arith.constant dense<0.000000e+00> : vector<2x128xf32>
    %9 = tpu.matmul %4, %3, %cst {dimension_numbers = #tpu.dot_dimension_numbers<[1], [0], [0], [1], [0, 0, 1, 1], [], []>} : vector<2x32xf32>, vector<32x128xf32>, vector<2x128xf32> -> vector<2x128xf32>
    %10 = arith.addf %8, %9 : vector<2x128xf32>
    %11 = vector.extract_strided_slice %10 {offsets = [0, 0], sizes = [2, 32], strides = [1, 1]} : vector<2x128xf32> to vector<2x32xf32>
    %12 = arith.negf %11 : vector<2x32xf32>
    %13 = math.exp %12 : vector<2x32xf32>
    %cst_9 = arith.constant 1.000000e+00 : f32
    %14 = vector.broadcast %cst_9 : f32 to vector<2x32xf32>
    %15 = arith.addf %14, %13 : vector<2x32xf32>
    %16 = arith.divf %14, %15 : vector<2x32xf32>
    %17 = vector.extract_strided_slice %10 {offsets = [0, 32], sizes = [2, 32], strides = [1, 1]} : vector<2x128xf32> to vector<2x32xf32>
    %18 = arith.negf %17 : vector<2x32xf32>
    %19 = math.exp %18 : vector<2x32xf32>
    %cst_10 = arith.constant 1.000000e+00 : f32
    %20 = vector.broadcast %cst_10 : f32 to vector<2x32xf32>
    %21 = arith.addf %20, %19 : vector<2x32xf32>
    %22 = arith.divf %20, %21 : vector<2x32xf32>
    %23 = vector.extract_strided_slice %10 {offsets = [0, 64], sizes = [2, 32], strides = [1, 1]} : vector<2x128xf32> to vector<2x32xf32>
    %24 = math.tanh %23 : vector<2x32xf32>
    %25 = vector.extract_strided_slice %10 {offsets = [0, 96], sizes = [2, 32], strides = [1, 1]} : vector<2x128xf32> to vector<2x32xf32>
    %26 = arith.negf %25 : vector<2x32xf32>
    %27 = math.exp %26 : vector<2x32xf32>
    %cst_11 = arith.constant 1.000000e+00 : f32
    %28 = vector.broadcast %cst_11 : f32 to vector<2x32xf32>
    %29 = arith.addf %28, %27 : vector<2x32xf32>
    %30 = arith.divf %28, %29 : vector<2x32xf32>
    %31 = arith.mulf %22, %5 : vector<2x32xf32>
    %32 = arith.mulf %16, %24 : vector<2x32xf32>
    %33 = arith.addf %31, %32 : vector<2x32xf32>
    %34 = math.tanh %33 : vector<2x32xf32>
    %35 = arith.mulf %30, %34 : vector<2x32xf32>
    %c1_i32 = arith.constant 1 : i32
    %36 = arith.index_cast %c1_i32 : i32 to index
    %c0_12 = arith.constant 0 : index
    %c0_13 = arith.constant 0 : index
    %37 = vector.load %arg1[%36, %c0_12, %c0_13] : memref<8x2x128xf32, #tpu.memory_space<vmem>>, vector<1x2x128xf32>
    %38 = vector.shape_cast %37 : vector<1x2x128xf32> to vector<2x128xf32>
    %cst_14 = arith.constant dense<0.000000e+00> : vector<2x128xf32>
    %39 = tpu.matmul %35, %3, %cst_14 {dimension_numbers = #tpu.dot_dimension_numbers<[1], [0], [0], [1], [0, 0, 1, 1], [], []>} : vector<2x32xf32>, vector<32x128xf32>, vector<2x128xf32> -> vector<2x128xf32>
    %40 = arith.addf %38, %39 : vector<2x128xf32>
    %41 = vector.extract_strided_slice %40 {offsets = [0, 0], sizes = [2, 32], strides = [1, 1]} : vector<2x128xf32> to vector<2x32xf32>
    %42 = arith.negf %41 : vector<2x32xf32>
    %43 = math.exp %42 : vector<2x32xf32>
    %cst_15 = arith.constant 1.000000e+00 : f32
    %44 = vector.broadcast %cst_15 : f32 to vector<2x32xf32>
    %45 = arith.addf %44, %43 : vector<2x32xf32>
    %46 = arith.divf %44, %45 : vector<2x32xf32>
    %47 = vector.extract_strided_slice %40 {offsets = [0, 32], sizes = [2, 32], strides = [1, 1]} : vector<2x128xf32> to vector<2x32xf32>
    %48 = arith.negf %47 : vector<2x32xf32>
    %49 = math.exp %48 : vector<2x32xf32>
    %cst_16 = arith.constant 1.000000e+00 : f32
    %50 = vector.broadcast %cst_16 : f32 to vector<2x32xf32>
    %51 = arith.addf %50, %49 : vector<2x32xf32>
    %52 = arith.divf %50, %51 : vector<2x32xf32>
    %53 = vector.extract_strided_slice %40 {offsets = [0, 64], sizes = [2, 32], strides = [1, 1]} : vector<2x128xf32> to vector<2x32xf32>
    %54 = math.tanh %53 : vector<2x32xf32>
    %55 = vector.extract_strided_slice %40 {offsets = [0, 96], sizes = [2, 32], strides = [1, 1]} : vector<2x128xf32> to vector<2x32xf32>
    %56 = arith.negf %55 : vector<2x32xf32>
    %57 = math.exp %56 : vector<2x32xf32>
    %cst_17 = arith.constant 1.000000e+00 : f32
    %58 = vector.broadcast %cst_17 : f32 to vector<2x32xf32>
    %59 = arith.addf %58, %57 : vector<2x32xf32>
    %60 = arith.divf %58, %59 : vector<2x32xf32>
    %61 = arith.mulf %52, %33 : vector<2x32xf32>
    %62 = arith.mulf %46, %54 : vector<2x32xf32>
    %63 = arith.addf %61, %62 : vector<2x32xf32>
    %64 = math.tanh %63 : vector<2x32xf32>
    %65 = arith.mulf %60, %64 : vector<2x32xf32>
    %c2_i32 = arith.constant 2 : i32
    %66 = arith.index_cast %c2_i32 : i32 to index
    %c0_18 = arith.constant 0 : index
    %c0_19 = arith.constant 0 : index
    %67 = vector.load %arg1[%66, %c0_18, %c0_19] : memref<8x2x128xf32, #tpu.memory_space<vmem>>, vector<1x2x128xf32>
    %68 = vector.shape_cast %67 : vector<1x2x128xf32> to vector<2x128xf32>
    %cst_20 = arith.constant dense<0.000000e+00> : vector<2x128xf32>
    %69 = tpu.matmul %65, %3, %cst_20 {dimension_numbers = #tpu.dot_dimension_numbers<[1], [0], [0], [1], [0, 0, 1, 1], [], []>} : vector<2x32xf32>, vector<32x128xf32>, vector<2x128xf32> -> vector<2x128xf32>
    %70 = arith.addf %68, %69 : vector<2x128xf32>
    %71 = vector.extract_strided_slice %70 {offsets = [0, 0], sizes = [2, 32], strides = [1, 1]} : vector<2x128xf32> to vector<2x32xf32>
    %72 = arith.negf %71 : vector<2x32xf32>
    %73 = math.exp %72 : vector<2x32xf32>
    %cst_21 = arith.constant 1.000000e+00 : f32
    %74 = vector.broadcast %cst_21 : f32 to vector<2x32xf32>
    %75 = arith.addf %74, %73 : vector<2x32xf32>
    %76 = arith.divf %74, %75 : vector<2x32xf32>
    %77 = vector.extract_strided_slice %70 {offsets = [0, 32], sizes = [2, 32], strides = [1, 1]} : vector<2x128xf32> to vector<2x32xf32>
    %78 = arith.negf %77 : vector<2x32xf32>
    %79 = math.exp %78 : vector<2x32xf32>
    %cst_22 = arith.constant 1.000000e+00 : f32
    %80 = vector.broadcast %cst_22 : f32 to vector<2x32xf32>
    %81 = arith.addf %80, %79 : vector<2x32xf32>
    %82 = arith.divf %80, %81 : vector<2x32xf32>
    %83 = vector.extract_strided_slice %70 {offsets = [0, 64], sizes = [2, 32], strides = [1, 1]} : vector<2x128xf32> to vector<2x32xf32>
    %84 = math.tanh %83 : vector<2x32xf32>
    %85 = vector.extract_strided_slice %70 {offsets = [0, 96], sizes = [2, 32], strides = [1, 1]} : vector<2x128xf32> to vector<2x32xf32>
    %86 = arith.negf %85 : vector<2x32xf32>
    %87 = math.exp %86 : vector<2x32xf32>
    %cst_23 = arith.constant 1.000000e+00 : f32
    %88 = vector.broadcast %cst_23 : f32 to vector<2x32xf32>
    %89 = arith.addf %88, %87 : vector<2x32xf32>
    %90 = arith.divf %88, %89 : vector<2x32xf32>
    %91 = arith.mulf %82, %63 : vector<2x32xf32>
    %92 = arith.mulf %76, %84 : vector<2x32xf32>
    %93 = arith.addf %91, %92 : vector<2x32xf32>
    %94 = math.tanh %93 : vector<2x32xf32>
    %95 = arith.mulf %90, %94 : vector<2x32xf32>
    %c3_i32 = arith.constant 3 : i32
    %96 = arith.index_cast %c3_i32 : i32 to index
    %c0_24 = arith.constant 0 : index
    %c0_25 = arith.constant 0 : index
    %97 = vector.load %arg1[%96, %c0_24, %c0_25] : memref<8x2x128xf32, #tpu.memory_space<vmem>>, vector<1x2x128xf32>
    %98 = vector.shape_cast %97 : vector<1x2x128xf32> to vector<2x128xf32>
    %cst_26 = arith.constant dense<0.000000e+00> : vector<2x128xf32>
    %99 = tpu.matmul %95, %3, %cst_26 {dimension_numbers = #tpu.dot_dimension_numbers<[1], [0], [0], [1], [0, 0, 1, 1], [], []>} : vector<2x32xf32>, vector<32x128xf32>, vector<2x128xf32> -> vector<2x128xf32>
    %100 = arith.addf %98, %99 : vector<2x128xf32>
    %101 = vector.extract_strided_slice %100 {offsets = [0, 0], sizes = [2, 32], strides = [1, 1]} : vector<2x128xf32> to vector<2x32xf32>
    %102 = arith.negf %101 : vector<2x32xf32>
    %103 = math.exp %102 : vector<2x32xf32>
    %cst_27 = arith.constant 1.000000e+00 : f32
    %104 = vector.broadcast %cst_27 : f32 to vector<2x32xf32>
    %105 = arith.addf %104, %103 : vector<2x32xf32>
    %106 = arith.divf %104, %105 : vector<2x32xf32>
    %107 = vector.extract_strided_slice %100 {offsets = [0, 32], sizes = [2, 32], strides = [1, 1]} : vector<2x128xf32> to vector<2x32xf32>
    %108 = arith.negf %107 : vector<2x32xf32>
    %109 = math.exp %108 : vector<2x32xf32>
    %cst_28 = arith.constant 1.000000e+00 : f32
    %110 = vector.broadcast %cst_28 : f32 to vector<2x32xf32>
    %111 = arith.addf %110, %109 : vector<2x32xf32>
    %112 = arith.divf %110, %111 : vector<2x32xf32>
    %113 = vector.extract_strided_slice %100 {offsets = [0, 64], sizes = [2, 32], strides = [1, 1]} : vector<2x128xf32> to vector<2x32xf32>
    %114 = math.tanh %113 : vector<2x32xf32>
    %115 = vector.extract_strided_slice %100 {offsets = [0, 96], sizes = [2, 32], strides = [1, 1]} : vector<2x128xf32> to vector<2x32xf32>
    %116 = arith.negf %115 : vector<2x32xf32>
    %117 = math.exp %116 : vector<2x32xf32>
    %cst_29 = arith.constant 1.000000e+00 : f32
    %118 = vector.broadcast %cst_29 : f32 to vector<2x32xf32>
    %119 = arith.addf %118, %117 : vector<2x32xf32>
    %120 = arith.divf %118, %119 : vector<2x32xf32>
    %121 = arith.mulf %112, %93 : vector<2x32xf32>
    %122 = arith.mulf %106, %114 : vector<2x32xf32>
    %123 = arith.addf %121, %122 : vector<2x32xf32>
    %124 = math.tanh %123 : vector<2x32xf32>
    %125 = arith.mulf %120, %124 : vector<2x32xf32>
    %c4_i32 = arith.constant 4 : i32
    %126 = arith.index_cast %c4_i32 : i32 to index
    %c0_30 = arith.constant 0 : index
    %c0_31 = arith.constant 0 : index
    %127 = vector.load %arg1[%126, %c0_30, %c0_31] : memref<8x2x128xf32, #tpu.memory_space<vmem>>, vector<1x2x128xf32>
    %128 = vector.shape_cast %127 : vector<1x2x128xf32> to vector<2x128xf32>
    %cst_32 = arith.constant dense<0.000000e+00> : vector<2x128xf32>
    %129 = tpu.matmul %125, %3, %cst_32 {dimension_numbers = #tpu.dot_dimension_numbers<[1], [0], [0], [1], [0, 0, 1, 1], [], []>} : vector<2x32xf32>, vector<32x128xf32>, vector<2x128xf32> -> vector<2x128xf32>
    %130 = arith.addf %128, %129 : vector<2x128xf32>
    %131 = vector.extract_strided_slice %130 {offsets = [0, 0], sizes = [2, 32], strides = [1, 1]} : vector<2x128xf32> to vector<2x32xf32>
    %132 = arith.negf %131 : vector<2x32xf32>
    %133 = math.exp %132 : vector<2x32xf32>
    %cst_33 = arith.constant 1.000000e+00 : f32
    %134 = vector.broadcast %cst_33 : f32 to vector<2x32xf32>
    %135 = arith.addf %134, %133 : vector<2x32xf32>
    %136 = arith.divf %134, %135 : vector<2x32xf32>
    %137 = vector.extract_strided_slice %130 {offsets = [0, 32], sizes = [2, 32], strides = [1, 1]} : vector<2x128xf32> to vector<2x32xf32>
    %138 = arith.negf %137 : vector<2x32xf32>
    %139 = math.exp %138 : vector<2x32xf32>
    %cst_34 = arith.constant 1.000000e+00 : f32
    %140 = vector.broadcast %cst_34 : f32 to vector<2x32xf32>
    %141 = arith.addf %140, %139 : vector<2x32xf32>
    %142 = arith.divf %140, %141 : vector<2x32xf32>
    %143 = vector.extract_strided_slice %130 {offsets = [0, 64], sizes = [2, 32], strides = [1, 1]} : vector<2x128xf32> to vector<2x32xf32>
    %144 = math.tanh %143 : vector<2x32xf32>
    %145 = vector.extract_strided_slice %130 {offsets = [0, 96], sizes = [2, 32], strides = [1, 1]} : vector<2x128xf32> to vector<2x32xf32>
    %146 = arith.negf %145 : vector<2x32xf32>
    %147 = math.exp %146 : vector<2x32xf32>
    %cst_35 = arith.constant 1.000000e+00 : f32
    %148 = vector.broadcast %cst_35 : f32 to vector<2x32xf32>
    %149 = arith.addf %148, %147 : vector<2x32xf32>
    %150 = arith.divf %148, %149 : vector<2x32xf32>
    %151 = arith.mulf %142, %123 : vector<2x32xf32>
    %152 = arith.mulf %136, %144 : vector<2x32xf32>
    %153 = arith.addf %151, %152 : vector<2x32xf32>
    %154 = math.tanh %153 : vector<2x32xf32>
    %155 = arith.mulf %150, %154 : vector<2x32xf32>
    %c5_i32 = arith.constant 5 : i32
    %156 = arith.index_cast %c5_i32 : i32 to index
    %c0_36 = arith.constant 0 : index
    %c0_37 = arith.constant 0 : index
    %157 = vector.load %arg1[%156, %c0_36, %c0_37] : memref<8x2x128xf32, #tpu.memory_space<vmem>>, vector<1x2x128xf32>
    %158 = vector.shape_cast %157 : vector<1x2x128xf32> to vector<2x128xf32>
    %cst_38 = arith.constant dense<0.000000e+00> : vector<2x128xf32>
    %159 = tpu.matmul %155, %3, %cst_38 {dimension_numbers = #tpu.dot_dimension_numbers<[1], [0], [0], [1], [0, 0, 1, 1], [], []>} : vector<2x32xf32>, vector<32x128xf32>, vector<2x128xf32> -> vector<2x128xf32>
    %160 = arith.addf %158, %159 : vector<2x128xf32>
    %161 = vector.extract_strided_slice %160 {offsets = [0, 0], sizes = [2, 32], strides = [1, 1]} : vector<2x128xf32> to vector<2x32xf32>
    %162 = arith.negf %161 : vector<2x32xf32>
    %163 = math.exp %162 : vector<2x32xf32>
    %cst_39 = arith.constant 1.000000e+00 : f32
    %164 = vector.broadcast %cst_39 : f32 to vector<2x32xf32>
    %165 = arith.addf %164, %163 : vector<2x32xf32>
    %166 = arith.divf %164, %165 : vector<2x32xf32>
    %167 = vector.extract_strided_slice %160 {offsets = [0, 32], sizes = [2, 32], strides = [1, 1]} : vector<2x128xf32> to vector<2x32xf32>
    %168 = arith.negf %167 : vector<2x32xf32>
    %169 = math.exp %168 : vector<2x32xf32>
    %cst_40 = arith.constant 1.000000e+00 : f32
    %170 = vector.broadcast %cst_40 : f32 to vector<2x32xf32>
    %171 = arith.addf %170, %169 : vector<2x32xf32>
    %172 = arith.divf %170, %171 : vector<2x32xf32>
    %173 = vector.extract_strided_slice %160 {offsets = [0, 64], sizes = [2, 32], strides = [1, 1]} : vector<2x128xf32> to vector<2x32xf32>
    %174 = math.tanh %173 : vector<2x32xf32>
    %175 = vector.extract_strided_slice %160 {offsets = [0, 96], sizes = [2, 32], strides = [1, 1]} : vector<2x128xf32> to vector<2x32xf32>
    %176 = arith.negf %175 : vector<2x32xf32>
    %177 = math.exp %176 : vector<2x32xf32>
    %cst_41 = arith.constant 1.000000e+00 : f32
    %178 = vector.broadcast %cst_41 : f32 to vector<2x32xf32>
    %179 = arith.addf %178, %177 : vector<2x32xf32>
    %180 = arith.divf %178, %179 : vector<2x32xf32>
    %181 = arith.mulf %172, %153 : vector<2x32xf32>
    %182 = arith.mulf %166, %174 : vector<2x32xf32>
    %183 = arith.addf %181, %182 : vector<2x32xf32>
    %184 = math.tanh %183 : vector<2x32xf32>
    %185 = arith.mulf %180, %184 : vector<2x32xf32>
    %c6_i32 = arith.constant 6 : i32
    %186 = arith.index_cast %c6_i32 : i32 to index
    %c0_42 = arith.constant 0 : index
    %c0_43 = arith.constant 0 : index
    %187 = vector.load %arg1[%186, %c0_42, %c0_43] : memref<8x2x128xf32, #tpu.memory_space<vmem>>, vector<1x2x128xf32>
    %188 = vector.shape_cast %187 : vector<1x2x128xf32> to vector<2x128xf32>
    %cst_44 = arith.constant dense<0.000000e+00> : vector<2x128xf32>
    %189 = tpu.matmul %185, %3, %cst_44 {dimension_numbers = #tpu.dot_dimension_numbers<[1], [0], [0], [1], [0, 0, 1, 1], [], []>} : vector<2x32xf32>, vector<32x128xf32>, vector<2x128xf32> -> vector<2x128xf32>
    %190 = arith.addf %188, %189 : vector<2x128xf32>
    %191 = vector.extract_strided_slice %190 {offsets = [0, 0], sizes = [2, 32], strides = [1, 1]} : vector<2x128xf32> to vector<2x32xf32>
    %192 = arith.negf %191 : vector<2x32xf32>
    %193 = math.exp %192 : vector<2x32xf32>
    %cst_45 = arith.constant 1.000000e+00 : f32
    %194 = vector.broadcast %cst_45 : f32 to vector<2x32xf32>
    %195 = arith.addf %194, %193 : vector<2x32xf32>
    %196 = arith.divf %194, %195 : vector<2x32xf32>
    %197 = vector.extract_strided_slice %190 {offsets = [0, 32], sizes = [2, 32], strides = [1, 1]} : vector<2x128xf32> to vector<2x32xf32>
    %198 = arith.negf %197 : vector<2x32xf32>
    %199 = math.exp %198 : vector<2x32xf32>
    %cst_46 = arith.constant 1.000000e+00 : f32
    %200 = vector.broadcast %cst_46 : f32 to vector<2x32xf32>
    %201 = arith.addf %200, %199 : vector<2x32xf32>
    %202 = arith.divf %200, %201 : vector<2x32xf32>
    %203 = vector.extract_strided_slice %190 {offsets = [0, 64], sizes = [2, 32], strides = [1, 1]} : vector<2x128xf32> to vector<2x32xf32>
    %204 = math.tanh %203 : vector<2x32xf32>
    %205 = vector.extract_strided_slice %190 {offsets = [0, 96], sizes = [2, 32], strides = [1, 1]} : vector<2x128xf32> to vector<2x32xf32>
    %206 = arith.negf %205 : vector<2x32xf32>
    %207 = math.exp %206 : vector<2x32xf32>
    %cst_47 = arith.constant 1.000000e+00 : f32
    %208 = vector.broadcast %cst_47 : f32 to vector<2x32xf32>
    %209 = arith.addf %208, %207 : vector<2x32xf32>
    %210 = arith.divf %208, %209 : vector<2x32xf32>
    %211 = arith.mulf %202, %183 : vector<2x32xf32>
    %212 = arith.mulf %196, %204 : vector<2x32xf32>
    %213 = arith.addf %211, %212 : vector<2x32xf32>
    %214 = math.tanh %213 : vector<2x32xf32>
    %215 = arith.mulf %210, %214 : vector<2x32xf32>
    %c7_i32 = arith.constant 7 : i32
    %216 = arith.index_cast %c7_i32 : i32 to index
    %c0_48 = arith.constant 0 : index
    %c0_49 = arith.constant 0 : index
    %217 = vector.load %arg1[%216, %c0_48, %c0_49] : memref<8x2x128xf32, #tpu.memory_space<vmem>>, vector<1x2x128xf32>
    %218 = vector.shape_cast %217 : vector<1x2x128xf32> to vector<2x128xf32>
    %cst_50 = arith.constant dense<0.000000e+00> : vector<2x128xf32>
    %219 = tpu.matmul %215, %3, %cst_50 {dimension_numbers = #tpu.dot_dimension_numbers<[1], [0], [0], [1], [0, 0, 1, 1], [], []>} : vector<2x32xf32>, vector<32x128xf32>, vector<2x128xf32> -> vector<2x128xf32>
    %220 = arith.addf %218, %219 : vector<2x128xf32>
    %221 = vector.extract_strided_slice %220 {offsets = [0, 0], sizes = [2, 32], strides = [1, 1]} : vector<2x128xf32> to vector<2x32xf32>
    %222 = arith.negf %221 : vector<2x32xf32>
    %223 = math.exp %222 : vector<2x32xf32>
    %cst_51 = arith.constant 1.000000e+00 : f32
    %224 = vector.broadcast %cst_51 : f32 to vector<2x32xf32>
    %225 = arith.addf %224, %223 : vector<2x32xf32>
    %226 = arith.divf %224, %225 : vector<2x32xf32>
    %227 = vector.extract_strided_slice %220 {offsets = [0, 32], sizes = [2, 32], strides = [1, 1]} : vector<2x128xf32> to vector<2x32xf32>
    %228 = arith.negf %227 : vector<2x32xf32>
    %229 = math.exp %228 : vector<2x32xf32>
    %cst_52 = arith.constant 1.000000e+00 : f32
    %230 = vector.broadcast %cst_52 : f32 to vector<2x32xf32>
    %231 = arith.addf %230, %229 : vector<2x32xf32>
    %232 = arith.divf %230, %231 : vector<2x32xf32>
    %233 = vector.extract_strided_slice %220 {offsets = [0, 64], sizes = [2, 32], strides = [1, 1]} : vector<2x128xf32> to vector<2x32xf32>
    %234 = math.tanh %233 : vector<2x32xf32>
    %235 = vector.extract_strided_slice %220 {offsets = [0, 96], sizes = [2, 32], strides = [1, 1]} : vector<2x128xf32> to vector<2x32xf32>
    %236 = arith.negf %235 : vector<2x32xf32>
    %237 = math.exp %236 : vector<2x32xf32>
    %cst_53 = arith.constant 1.000000e+00 : f32
    %238 = vector.broadcast %cst_53 : f32 to vector<2x32xf32>
    %239 = arith.addf %238, %237 : vector<2x32xf32>
    %240 = arith.divf %238, %239 : vector<2x32xf32>
    %241 = arith.mulf %232, %213 : vector<2x32xf32>
    %242 = arith.mulf %226, %234 : vector<2x32xf32>
    %243 = arith.addf %241, %242 : vector<2x32xf32>
    %244 = math.tanh %243 : vector<2x32xf32>
    %245 = arith.mulf %240, %244 : vector<2x32xf32>
    %c8_i32 = arith.constant 8 : i32
    %c0_54 = arith.constant 0 : index
    %c0_55 = arith.constant 0 : index
    %246 = vector.load %arg8[%c0_54, %c0_55] : memref<2x32xf32, #tpu.memory_space<vmem>>, vector<2x32xf32>
    tpu.vector_store %arg8[%c0_54, %c0_55], %245 {strides = array<i32>} : memref<2x32xf32, #tpu.memory_space<vmem>>, vector<2x32xf32>,
    %c0_56 = arith.constant 0 : index
    %c0_57 = arith.constant 0 : index
    %247 = vector.load %arg9[%c0_56, %c0_57] : memref<2x32xf32, #tpu.memory_space<vmem>>, vector<2x32xf32>
    tpu.vector_store %arg9[%c0_56, %c0_57], %243 {strides = array<i32>} : memref<2x32xf32, #tpu.memory_space<vmem>>, vector<2x32xf32>,
    %c0_i32_58 = arith.constant 0 : i32
    %248 = arith.cmpi eq, %arg0, %c0_i32_58 : i32
    %249 = arith.extui %248 : i1 to i32
    %c0_i32_59 = arith.constant 0 : i32
    %250 = arith.cmpi ne, %249, %c0_i32_59 : i32
    scf.if %250 {
      %c7 = arith.constant 7 : index
      %c0_60 = arith.constant 0 : index
      %c0_61 = arith.constant 0 : index
      %251 = vector.load %arg2[%c7, %c0_60, %c0_61] : memref<8x2x128xf32, #tpu.memory_space<vmem>>, vector<1x2x128xf32>
      %252 = vector.shape_cast %251 : vector<1x2x128xf32> to vector<2x128xf32>
      %253 = vector.extract_strided_slice %252 {offsets = [0, 0], sizes = [2, 32], strides = [1, 1]} : vector<2x128xf32> to vector<2x32xf32>
      %254 = arith.negf %253 : vector<2x32xf32>
      %255 = math.exp %254 : vector<2x32xf32>
      %cst_62 = arith.constant 1.000000e+00 : f32
      %256 = vector.broadcast %cst_62 : f32 to vector<2x32xf32>
      %257 = arith.addf %256, %255 : vector<2x32xf32>
      %258 = arith.divf %256, %257 : vector<2x32xf32>
      %259 = vector.extract_strided_slice %252 {offsets = [0, 64], sizes = [2, 32], strides = [1, 1]} : vector<2x128xf32> to vector<2x32xf32>
      %260 = math.tanh %259 : vector<2x32xf32>
      %261 = vector.extract_strided_slice %252 {offsets = [0, 96], sizes = [2, 32], strides = [1, 1]} : vector<2x128xf32> to vector<2x32xf32>
      %262 = arith.negf %261 : vector<2x32xf32>
      %263 = math.exp %262 : vector<2x32xf32>
      %cst_63 = arith.constant 1.000000e+00 : f32
      %264 = vector.broadcast %cst_63 : f32 to vector<2x32xf32>
      %265 = arith.addf %264, %263 : vector<2x32xf32>
      %266 = arith.divf %264, %265 : vector<2x32xf32>
      %267 = arith.mulf %258, %260 : vector<2x32xf32>
      %268 = math.tanh %267 : vector<2x32xf32>
      %269 = arith.mulf %266, %268 : vector<2x32xf32>
      %c0_64 = arith.constant 0 : index
      %c0_65 = arith.constant 0 : index
      %270 = vector.load %arg4[%c0_64, %c0_65] : memref<32x8xf32, #tpu.memory_space<vmem>>, vector<32x8xf32>
      %cst_66 = arith.constant dense<0.000000e+00> : vector<2x8xf32>
      %271 = tpu.matmul %245, %270, %cst_66 {dimension_numbers = #tpu.dot_dimension_numbers<[1], [0], [0], [1], [0, 0, 1, 1], [], []>} : vector<2x32xf32>, vector<32x8xf32>, vector<2x8xf32> -> vector<2x8xf32>
      %c0_67 = arith.constant 0 : index
      %c0_68 = arith.constant 0 : index
      %272 = vector.load %arg5[%c0_67, %c0_68] : memref<32x8xf32, #tpu.memory_space<vmem>>, vector<32x8xf32>
      %cst_69 = arith.constant dense<0.000000e+00> : vector<2x8xf32>
      %273 = tpu.matmul %269, %272, %cst_69 {dimension_numbers = #tpu.dot_dimension_numbers<[1], [0], [0], [1], [0, 0, 1, 1], [], []>} : vector<2x32xf32>, vector<32x8xf32>, vector<2x8xf32> -> vector<2x8xf32>
      %274 = arith.addf %271, %273 : vector<2x8xf32>
      %c0_70 = arith.constant 0 : index
      %c0_71 = arith.constant 0 : index
      %275 = vector.load %arg6[%c0_70, %c0_71] : memref<1x8xf32, #tpu.memory_space<vmem>>, vector<1x8xf32>
      %276 = vector.broadcast %275 : vector<1x8xf32> to vector<2x8xf32>
      %277 = arith.addf %274, %276 : vector<2x8xf32>
      %c0_72 = arith.constant 0 : index
      %c0_73 = arith.constant 0 : index
      %278 = vector.load %arg7[%c0_72, %c0_73] : memref<2x8xf32, #tpu.memory_space<vmem>>, vector<2x8xf32>
      tpu.vector_store %arg7[%c0_72, %c0_73], %277 {strides = array<i32>} : memref<2x8xf32, #tpu.memory_space<vmem>>, vector<2x8xf32>,
    } else {
    }
    return
  }
  func.func @transform_0(%arg0: i32) -> (i32, i32, i32) {
    %c0_i32 = arith.constant 0 : i32
    %c0_i32_0 = arith.constant 0 : i32
    %c0_i32_1 = arith.constant 0 : i32
    return %arg0, %c0_i32, %c0_i32_0 : i32, i32, i32
  }
  func.func @transform_1(%arg0: i32) -> (i32, i32, i32) {
    %c0_i32 = arith.constant 0 : i32
    %c0_i32_0 = arith.constant 0 : i32
    %c0_i32_1 = arith.constant 0 : i32
    %c0_i32_2 = arith.constant 0 : i32
    return %c0_i32, %c0_i32_0, %c0_i32_1 : i32, i32, i32
  }
  func.func @transform_2(%arg0: i32) -> (i32, i32) {
    %c0_i32 = arith.constant 0 : i32
    %c0_i32_0 = arith.constant 0 : i32
    %c0_i32_1 = arith.constant 0 : i32
    return %c0_i32, %c0_i32_0 : i32, i32
  }
  func.func @transform_3(%arg0: i32) -> (i32, i32) {
    %c0_i32 = arith.constant 0 : i32
    %c0_i32_0 = arith.constant 0 : i32
    %c0_i32_1 = arith.constant 0 : i32
    return %c0_i32, %c0_i32_0 : i32, i32
  }
  func.func @transform_4(%arg0: i32) -> (i32, i32) {
    %c0_i32 = arith.constant 0 : i32
    %c0_i32_0 = arith.constant 0 : i32
    %c0_i32_1 = arith.constant 0 : i32
    return %c0_i32, %c0_i32_0 : i32, i32
  }
  func.func @transform_5(%arg0: i32) -> (i32, i32) {
    %c0_i32 = arith.constant 0 : i32
    %c0_i32_0 = arith.constant 0 : i32
    %c0_i32_1 = arith.constant 0 : i32
    return %c0_i32, %c0_i32_0 : i32, i32
  }
  func.func @transform_6(%arg0: i32) -> (i32, i32) {
    %c0_i32 = arith.constant 0 : i32
    %c0_i32_0 = arith.constant 0 : i32
    %c0_i32_1 = arith.constant 0 : i32
    return %c0_i32, %c0_i32_0 : i32, i32
  }
}

</mosaic_0001>

<llo_original>
// kernel: bilstm_forward.4
$region0: #{bilstm_forward.4}
  #allocation0 [shape = 'u32[]', space=smem, size = 0x4, offset = 0x4, fixed_abs, tag = 'smem constant byte address 0x4 - core index']
  #allocation1 [shape = 'u32[144,128]{1,0:T(1,128)}', space=vmem, size = 0x12000, scoped, tag = 'internal scratch']
  %s0 = inlined_call_operand.vmem [shape: f32[16,8], index: 0, kind: input, shape index: {}]
  %s1 = inlined_call_operand.hbm [shape: f32[8,256], index: 1, kind: input, shape index: {}]
  %s2 = inlined_call_operand.vmem [shape: f32[1,256], index: 2, kind: input, shape index: {}]
  %s3 = inlined_call_operand.vmem [shape: f32[16,128], index: 3, kind: output, shape index: {0}]
  %s4 = inlined_call_operand.vmem [shape: f32[16,128], index: 4, kind: output, shape index: {1}]
  %5 = xla_tuple %s3, %s4
  %s6 = sld [smem:[#allocation0]]
  $region34: #{bilstm_forward.4} parent=0
    _
  %s8 = ssub.s32 1, %s6
  %s9 = scalar_select 0, %s8, %s6
  $region1: #{bilstm_forward.4} parent=0
    #allocation2 [shape = 'u8[8192]{0}', space=vmem, size = 0x2000, scoped, tag = 'input window, operand 1, single buffered']
    #allocation3 [shape = 's32[1]{0}', space=sflag, size = 0x4, scoped, tag = 'scoped memory for bilstm_forward.4']
    %10 = vsyncpa [#allocation3], 0
    // Predicated region
    $region2: #{bilstm_forward.4} parent=1 // pred_check
      _
    $region3: #{bilstm_forward.4} parent=1 // pred_check_branch
      %12 = sbr.rel (0) target = $region5
    $region4: #{bilstm_forward.4} parent=1 // pred_region
      _
    $region5: #{bilstm_forward.4} parent=1 // pred_fallthru
      _
    // Predicated region
    $region6: #{bilstm_forward.4} parent=1 // pred_check
      _
    $region7: #{bilstm_forward.4} parent=1 // pred_check_branch
      %14 = sbr.rel (0) target = $region9
    $region8: #{bilstm_forward.4} parent=1 // pred_region
      %s16 = ssub.s32 256, 256
      %17 = vsyncadd [#allocation3], %s16
      %s19 = sshll.u32 [#allocation2], 4
      %s20 = int_to_ptr.vmem [resolvable:$true] %s19
      %22 = dma.hbm_to_vmem [thread:$0]  %s1, 256, %s20, [#allocation3]
    $region9: #{bilstm_forward.4} parent=1 // pred_fallthru
      _
    // Predicated region
    $region10: #{bilstm_forward.4} parent=1 // pred_check
      _
    $region11: #{bilstm_forward.4} parent=1 // pred_check_branch
      %24 = sbr.rel (0) target = $region13
    $region12: #{bilstm_forward.4} parent=1 // pred_region
      _
    $region13: #{bilstm_forward.4} parent=1 // pred_fallthru
      _
    // Predicated region
    $region14: #{bilstm_forward.4} parent=1 // pred_check
      _
    $region15: #{bilstm_forward.4} parent=1 // pred_check_branch
      %26 = sbr.rel (0) target = $region17
    $region16: #{bilstm_forward.4} parent=1 // pred_region
      %27 = dma.done [#allocation3], 256
    $region17: #{bilstm_forward.4} parent=1 // pred_fallthru
      _
    %v28 = vld [vmem:[%s0] sm:$0xff]
    %v29 = vld [vmem:[%s0 + $0x8] sm:$0xff]
    %v30 = vld [vmem:[#allocation2] sm:$0xff]
    %v31 = vld [vmem:[#allocation2 + $0x8] sm:$0xff]
    %v32 = vld [vmem:[%s2] sm:$0x3]
    %v34 = vlaneseq
    %v35 = vshrl.u32 %v34, 7
    %v36 = vsub.s32 0, %v35
    %v37 = vrot.slane %v32, %v36
    %v38 = vlaneseq
    %v39 = vshrl.u32 %v38, 7
    %v40 = vsub.s32 1, %v39
    %v41 = vrot.slane %v32, %v40
    %vm44 = vcmask 64512
    %v46 = vsel %vm44, %v28, 0
    %v49 = vsel %vm44, %v29, 0
    %51 = vmatprep.subr.mxu0 %v31
    %52 = vmatpush1.msra.mxu0 %v30
    %53 = vmatprep.subr.mxu0 0.0
    %54 = vmatpush1.msra.mxu0 0.0
    %55 = vmatprep.subr.mxu0 0.0
    %56 = vmatpush1.msra.mxu0 0.0
    %57 = vmatprep.subr.mxu0 0.0
    %58 = vmatpush1.msra.mxu0 0.0
    %59 = vmatprep.subr.mxu0 0.0
    %60 = vmatpush1.msra.mxu0 0.0
    %61 = vmatprep.subr.mxu0 0.0
    %62 = vmatpush1.msra.mxu0 0.0
    %63 = vmatprep.subr.mxu0 0.0
    %64 = vmatpush1.msra.mxu0 0.0
    %65 = vmatprep.subr.mxu0 0.0
    %66 = vmatpush1.msra.mxu0 0.0
    %67 = vmatprep.subr.mxu0 0.0
    %68 = vmatpush1.msra.mxu0 0.0
    %69 = vmatprep.subr.mxu0 0.0
    %70 = vmatpush1.msra.mxu0 0.0
    %71 = vmatprep.subr.mxu0 0.0
    %72 = vmatpush1.msra.mxu0 0.0
    %73 = vmatprep.subr.mxu0 0.0
    %74 = vmatpush1.msra.mxu0 0.0
    %75 = vmatprep.subr.mxu0 0.0
    %76 = vmatpush1.msra.mxu0 0.0
    %77 = vmatprep.subr.mxu0 0.0
    %78 = vmatpush1.msra.mxu0 0.0
    %79 = vmatprep.subr.mxu0 0.0
    %80 = vmatpush1.msra.mxu0 0.0
    %81 = vmatprep.subr.mxu0 0.0
    %82 = vmatpush1.msra.mxu0 0.0
    %83 = vmatprep.subr.mxu0 0.0
    %84 = vmatpush1.msra.mxu0 0.0
    %85 = vmatprep.subr.mxu0 0.0
    %86 = vmatpush1.msra.mxu0 0.0
    %87 = vmatprep.subr.mxu0 0.0
    %88 = vmatpush1.msra.mxu0 0.0
    %89 = vmatprep.subr.mxu0 0.0
    %90 = vmatpush1.msra.mxu0 0.0
    %91 = vmatprep.subr.mxu0 0.0
    %92 = vmatpush1.msra.mxu0 0.0
    %93 = vmatprep.subr.mxu0 0.0
    %94 = vmatpush1.msra.mxu0 0.0
    %95 = vmatprep.subr.mxu0 0.0
    %96 = vmatpush1.msra.mxu0 0.0
    %97 = vmatprep.subr.mxu0 0.0
    %98 = vmatpush1.msra.mxu0 0.0
    %99 = vmatprep.subr.mxu0 0.0
    %100 = vmatpush1.msra.mxu0 0.0
    %101 = vmatprep.subr.mxu0 0.0
    %102 = vmatpush1.msra.mxu0 0.0
    %103 = vmatprep.subr.mxu0 0.0
    %104 = vmatpush1.msra.mxu0 0.0
    %105 = vmatprep.subr.mxu0 0.0
    %106 = vmatpush1.msra.mxu0 0.0
    %107 = vmatprep.subr.mxu0 0.0
    %108 = vmatpush1.msra.mxu0 0.0
    %109 = vmatprep.subr.mxu0 0.0
    %110 = vmatpush1.msra.mxu0 0.0
    %111 = vmatprep.subr.mxu0 0.0
    %112 = vmatpush1.msra.mxu0 0.0
    %113 = vmatprep.subr.mxu0 0.0
    %114 = vmatpush1.msra.mxu0 0.0
    %115 = vmatprep.mubr.f32.mxu0 0.0
    %116 = vmatmul.mubr.f32.gmra.mrb[0].mxu0 %v46
    %v117 = vpop.f32.mrb[0].mxu0
    %v118 = vadd.f32 %v37, %v117
    %v119 = vpop.f32.mrb[0].mxu0
    %v120 = vadd.f32 %v41, %v119
    %121 = vmatprep.mubr.f32.mxu0 0.0
    %122 = vmatmul.mubr.f32.gmra.mrb[0].mxu0 %v49
    %v123 = vpop.f32.mrb[0].mxu0
    %v124 = vadd.f32 %v37, %v123
    %v125 = vpop.f32.mrb[0].mxu0
    %v126 = vadd.f32 %v41, %v125
    %127 = vdwg.mxu0
    %128 = vst [vmem:[%s3] sm:$0xff] %v118
    %129 = vst [vmem:[%s3 + $0x8] sm:$0xff] %v124
    %130 = vst [vmem:[%s4] sm:$0xff] %v120
    %131 = vst [vmem:[%s4 + $0x8] sm:$0xff] %v126
    // Predicated region
    $region18: #{bilstm_forward.4} parent=1 // pred_check
      _
    $region19: #{bilstm_forward.4} parent=1 // pred_check_branch
      %133 = sbr.rel (0) target = $region21
    $region20: #{bilstm_forward.4} parent=1 // pred_region
      _
    $region21: #{bilstm_forward.4} parent=1 // pred_fallthru
      _
    // Predicated region
    $region22: #{bilstm_forward.4} parent=1 // pred_check
      _
    $region23: #{bilstm_forward.4} parent=1 // pred_check_branch
      %135 = sbr.rel (0) target = $region25
    $region24: #{bilstm_forward.4} parent=1 // pred_region
      _
    $region25: #{bilstm_forward.4} parent=1 // pred_fallthru
      _
    // Predicated region
    $region26: #{bilstm_forward.4} parent=1 // pred_check
      _
    $region27: #{bilstm_forward.4} parent=1 // pred_check_branch
      %137 = sbr.rel (0) target = $region29
    $region28: #{bilstm_forward.4} parent=1 // pred_region
      _
    $region29: #{bilstm_forward.4} parent=1 // pred_fallthru
      _
    // Predicated region
    $region30: #{bilstm_forward.4} parent=1 // pred_check
      _
    $region31: #{bilstm_forward.4} parent=1 // pred_check_branch
      %139 = sbr.rel (0) target = $region33
    $region32: #{bilstm_forward.4} parent=1 // pred_region
      _
    $region33: #{bilstm_forward.4} parent=1 // pred_fallthru
      _
    %140 = vsyncpa [#allocation3], 1

// kernel: bilstm_forward.6
$region0: #{bilstm_forward.6}
  #allocation0 [shape = 'u32[]', space=smem, size = 0x4, offset = 0x4, fixed_abs, tag = 'smem constant byte address 0x4 - core index']
  #allocation1 [shape = 'u32[144,128]{1,0:T(1,128)}', space=vmem, size = 0x12000, scoped, tag = 'internal scratch']
  %s0 = inlined_call_operand.vmem [shape: f32[16,32], index: 0, kind: input, shape index: {}]
  %s1 = inlined_call_operand.vmem [shape: f32[16,32], index: 1, kind: input, shape index: {}]
  %s2 = inlined_call_operand.vmem [shape: f32[32,256], index: 2, kind: input, shape index: {}]
  %s3 = inlined_call_operand.vmem [shape: f32[32,256], index: 3, kind: input, shape index: {}]
  %s4 = inlined_call_operand.vmem [shape: f32[1,256], index: 4, kind: input, shape index: {}]
  %s5 = inlined_call_operand.vmem [shape: f32[16,128], index: 5, kind: output, shape index: {0}]
  %s6 = inlined_call_operand.vmem [shape: f32[16,128], index: 6, kind: output, shape index: {1}]
  %7 = xla_tuple %s5, %s6
  %s8 = sld [smem:[#allocation0]]
  $region38: #{bilstm_forward.6} parent=0
    _
  %s10 = ssub.s32 1, %s8
  %s11 = scalar_select 0, %s10, %s8
  // Predicated region
  $region2: #{bilstm_forward.6} parent=0 // pred_check
    _
  $region3: #{bilstm_forward.6} parent=0 // pred_check_branch
    %13 = sbr.rel (0) target = $region5
  $region4: #{bilstm_forward.6} parent=0 // pred_region
    _
  $region5: #{bilstm_forward.6} parent=0 // pred_fallthru
    _
  // Predicated region
  $region6: #{bilstm_forward.6} parent=0 // pred_check
    _
  $region7: #{bilstm_forward.6} parent=0 // pred_check_branch
    %15 = sbr.rel (0) target = $region9
  $region8: #{bilstm_forward.6} parent=0 // pred_region
    _
  $region9: #{bilstm_forward.6} parent=0 // pred_fallthru
    _
  // Predicated region
  $region10: #{bilstm_forward.6} parent=0 // pred_check
    _
  $region11: #{bilstm_forward.6} parent=0 // pred_check_branch
    %17 = sbr.rel (0) target = $region13
  $region12: #{bilstm_forward.6} parent=0 // pred_region
    _
  $region13: #{bilstm_forward.6} parent=0 // pred_fallthru
    _
  // Predicated region
  $region14: #{bilstm_forward.6} parent=0 // pred_check
    _
  $region15: #{bilstm_forward.6} parent=0 // pred_check_branch
    %19 = sbr.rel (0) target = $region17
  $region16: #{bilstm_forward.6} parent=0 // pred_region
    _
  $region17: #{bilstm_forward.6} parent=0 // pred_fallthru
    _
  // Predicated region
  $region18: #{bilstm_forward.6} parent=0 // pred_check
    _
  $region19: #{bilstm_forward.6} parent=0 // pred_check_branch
    %21 = sbr.rel (0) target = $region21
  $region20: #{bilstm_forward.6} parent=0 // pred_region
    _
  $region21: #{bilstm_forward.6} parent=0 // pred_fallthru
    _
  %v22 = vld [vmem:[%s0] sm:$0xff]
  %v23 = vld [vmem:[%s0 + $0x8] sm:$0xff]
  %v24 = vld [vmem:[%s2] sm:$0xff]
  %v25 = vld [vmem:[%s2 + $0x8] sm:$0xff]
  %v26 = vld [vmem:[%s2 + $0x10] sm:$0xff]
  %v27 = vld [vmem:[%s2 + $0x18] sm:$0xff]
  %v28 = vld [vmem:[%s2 + $0x20] sm:$0xff]
  %v29 = vld [vmem:[%s2 + $0x28] sm:$0xff]
  %v30 = vld [vmem:[%s2 + $0x30] sm:$0xff]
  %v31 = vld [vmem:[%s2 + $0x38] sm:$0xff]
  %v32 = vld [vmem:[%s1] sm:$0xff]
  %v33 = vld [vmem:[%s1 + $0x8] sm:$0xff]
  %v34 = vld [vmem:[%s3] sm:$0xff]
  %v35 = vld [vmem:[%s3 + $0x8] sm:$0xff]
  %v36 = vld [vmem:[%s3 + $0x10] sm:$0xff]
  %v37 = vld [vmem:[%s3 + $0x18] sm:$0xff]
  %v38 = vld [vmem:[%s3 + $0x20] sm:$0xff]
  %v39 = vld [vmem:[%s3 + $0x28] sm:$0xff]
  %v40 = vld [vmem:[%s3 + $0x30] sm:$0xff]
  %v41 = vld [vmem:[%s3 + $0x38] sm:$0xff]
  %vm42 = vcmask 261120
  %v44 = vsel %vm42, %v32, 0
  %v47 = vsel %vm42, %v33, 0
  %49 = vmatprep.subr.mxu0 %v35
  %50 = vmatpush1.msra.mxu0 %v34
  %51 = vmatprep.subr.mxu0 %v37
  %52 = vmatpush1.msra.mxu0 %v36
  %53 = vmatprep.subr.mxu0 %v39
  %54 = vmatpush1.msra.mxu0 %v38
  %55 = vmatprep.subr.mxu0 %v41
  %56 = vmatpush1.msra.mxu0 %v40
  %57 = vmatprep.subr.mxu0 0.0
  %58 = vmatpush1.msra.mxu0 0.0
  %59 = vmatprep.subr.mxu0 0.0
  %60 = vmatpush1.msra.mxu0 0.0
  %61 = vmatprep.subr.mxu0 0.0
  %62 = vmatpush1.msra.mxu0 0.0
  %63 = vmatprep.subr.mxu0 0.0
  %64 = vmatpush1.msra.mxu0 0.0
  %65 = vmatprep.subr.mxu0 0.0
  %66 = vmatpush1.msra.mxu0 0.0
  %67 = vmatprep.subr.mxu0 0.0
  %68 = vmatpush1.msra.mxu0 0.0
  %69 = vmatprep.subr.mxu0 0.0
  %70 = vmatpush1.msra.mxu0 0.0
  %71 = vmatprep.subr.mxu0 0.0
  %72 = vmatpush1.msra.mxu0 0.0
  %73 = vmatprep.subr.mxu0 0.0
  %74 = vmatpush1.msra.mxu0 0.0
  %75 = vmatprep.subr.mxu0 0.0
  %76 = vmatpush1.msra.mxu0 0.0
  %77 = vmatprep.subr.mxu0 0.0
  %78 = vmatpush1.msra.mxu0 0.0
  %79 = vmatprep.subr.mxu0 0.0
  %80 = vmatpush1.msra.mxu0 0.0
  %81 = vmatprep.subr.mxu0 0.0
  %82 = vmatpush1.msra.mxu0 0.0
  %83 = vmatprep.subr.mxu0 0.0
  %84 = vmatpush1.msra.mxu0 0.0
  %85 = vmatprep.subr.mxu0 0.0
  %86 = vmatpush1.msra.mxu0 0.0
  %87 = vmatprep.subr.mxu0 0.0
  %88 = vmatpush1.msra.mxu0 0.0
  %89 = vmatprep.subr.mxu0 0.0
  %90 = vmatpush1.msra.mxu0 0.0
  %91 = vmatprep.subr.mxu0 0.0
  %92 = vmatpush1.msra.mxu0 0.0
  %93 = vmatprep.subr.mxu0 0.0
  %94 = vmatpush1.msra.mxu0 0.0
  %95 = vmatprep.subr.mxu0 0.0
  %96 = vmatpush1.msra.mxu0 0.0
  %97 = vmatprep.subr.mxu0 0.0
  %98 = vmatpush1.msra.mxu0 0.0
  %99 = vmatprep.subr.mxu0 0.0
  %100 = vmatpush1.msra.mxu0 0.0
  %101 = vmatprep.subr.mxu0 0.0
  %102 = vmatpush1.msra.mxu0 0.0
  %103 = vmatprep.subr.mxu0 0.0
  %104 = vmatpush1.msra.mxu0 0.0
  %105 = vmatprep.subr.mxu0 0.0
  %106 = vmatpush1.msra.mxu0 0.0
  %107 = vmatprep.subr.mxu0 0.0
  %108 = vmatpush1.msra.mxu0 0.0
  %109 = vmatprep.subr.mxu0 0.0
  %110 = vmatpush1.msra.mxu0 0.0
  %111 = vmatprep.subr.mxu0 0.0
  %112 = vmatpush1.msra.mxu0 0.0
  %113 = vmatprep.mubr.f32.mxu0 0.0
  %114 = vmatmul.mubr.f32.gmra.mrb[0].mxu0 %v44
  %v115 = vpop.f32.mrb[0].mxu0
  %v116 = vadd.f32 0.0, %v115
  %v117 = vpop.f32.mrb[0].mxu0
  %v118 = vadd.f32 0.0, %v117
  %119 = vmatprep.mubr.f32.mxu0 0.0
  %120 = vmatmul.mubr.f32.gmra.mrb[0].mxu0 %v47
  %v121 = vpop.f32.mrb[0].mxu0
  %v122 = vadd.f32 0.0, %v121
  %v123 = vpop.f32.mrb[0].mxu0
  %v124 = vadd.f32 0.0, %v123
  %125 = vdwg.mxu0
  %v127 = vsel %vm42, %v22, 0
  %v130 = vsel %vm42, %v23, 0
  %132 = vmatprep.subr.mxu0 %v25
  %133 = vmatpush1.msra.mxu0 %v24
  %134 = vmatprep.subr.mxu0 %v27
  %135 = vmatpush1.msra.mxu0 %v26
  %136 = vmatprep.subr.mxu0 %v29
  %137 = vmatpush1.msra.mxu0 %v28
  %138 = vmatprep.subr.mxu0 %v31
  %139 = vmatpush1.msra.mxu0 %v30
  %140 = vmatprep.subr.mxu0 0.0
  %141 = vmatpush1.msra.mxu0 0.0
  %142 = vmatprep.subr.mxu0 0.0
  %143 = vmatpush1.msra.mxu0 0.0
  %144 = vmatprep.subr.mxu0 0.0
  %145 = vmatpush1.msra.mxu0 0.0
  %146 = vmatprep.subr.mxu0 0.0
  %147 = vmatpush1.msra.mxu0 0.0
  %148 = vmatprep.subr.mxu0 0.0
  %149 = vmatpush1.msra.mxu0 0.0
  %150 = vmatprep.subr.mxu0 0.0
  %151 = vmatpush1.msra.mxu0 0.0
  %152 = vmatprep.subr.mxu0 0.0
  %153 = vmatpush1.msra.mxu0 0.0
  %154 = vmatprep.subr.mxu0 0.0
  %155 = vmatpush1.msra.mxu0 0.0
  %156 = vmatprep.subr.mxu0 0.0
  %157 = vmatpush1.msra.mxu0 0.0
  %158 = vmatprep.subr.mxu0 0.0
  %159 = vmatpush1.msra.mxu0 0.0
  %160 = vmatprep.subr.mxu0 0.0
  %161 = vmatpush1.msra.mxu0 0.0
  %162 = vmatprep.subr.mxu0 0.0
  %163 = vmatpush1.msra.mxu0 0.0
  %164 = vmatprep.subr.mxu0 0.0
  %165 = vmatpush1.msra.mxu0 0.0
  %166 = vmatprep.subr.mxu0 0.0
  %167 = vmatpush1.msra.mxu0 0.0
  %168 = vmatprep.subr.mxu0 0.0
  %169 = vmatpush1.msra.mxu0 0.0
  %170 = vmatprep.subr.mxu0 0.0
  %171 = vmatpush1.msra.mxu0 0.0
  %172 = vmatprep.subr.mxu0 0.0
  %173 = vmatpush1.msra.mxu0 0.0
  %174 = vmatprep.subr.mxu0 0.0
  %175 = vmatpush1.msra.mxu0 0.0
  %176 = vmatprep.subr.mxu0 0.0
  %177 = vmatpush1.msra.mxu0 0.0
  %178 = vmatprep.subr.mxu0 0.0
  %179 = vmatpush1.msra.mxu0 0.0
  %180 = vmatprep.subr.mxu0 0.0
  %181 = vmatpush1.msra.mxu0 0.0
  %182 = vmatprep.subr.mxu0 0.0
  %183 = vmatpush1.msra.mxu0 0.0
  %184 = vmatprep.subr.mxu0 0.0
  %185 = vmatpush1.msra.mxu0 0.0
  %186 = vmatprep.subr.mxu0 0.0
  %187 = vmatpush1.msra.mxu0 0.0
  %188 = vmatprep.subr.mxu0 0.0
  %189 = vmatpush1.msra.mxu0 0.0
  %190 = vmatprep.subr.mxu0 0.0
  %191 = vmatpush1.msra.mxu0 0.0
  %192 = vmatprep.subr.mxu0 0.0
  %193 = vmatpush1.msra.mxu0 0.0
  %194 = vmatprep.subr.mxu0 0.0
  %195 = vmatpush1.msra.mxu0 0.0
  %196 = vmatprep.mubr.f32.mxu0 0.0
  %197 = vmatmul.mubr.f32.gmra.mrb[0].mxu0 %v127
  %v198 = vpop.f32.mrb[0].mxu0
  %v199 = vadd.f32 %v116, %v198
  %v200 = vpop.f32.mrb[0].mxu0
  %v201 = vadd.f32 %v118, %v200
  %202 = vmatprep.mubr.f32.mxu0 0.0
  %203 = vmatmul.mubr.f32.gmra.mrb[0].mxu0 %v130
  %v204 = vpop.f32.mrb[0].mxu0
  %v205 = vadd.f32 %v122, %v204
  %v206 = vpop.f32.mrb[0].mxu0
  %v207 = vadd.f32 %v124, %v206
  %208 = vdwg.mxu0
  %v209 = vld [vmem:[%s4] sm:$0x3]
  %v211 = vlaneseq
  %v212 = vshrl.u32 %v211, 7
  %v213 = vsub.s32 0, %v212
  %v214 = vrot.slane %v209, %v213
  %v215 = vlaneseq
  %v216 = vshrl.u32 %v215, 7
  %v217 = vsub.s32 1, %v216
  %v218 = vrot.slane %v209, %v217
  %v221 = vadd.f32 %v199, %v214
  %v222 = vadd.f32 %v201, %v218
  %v223 = vadd.f32 %v205, %v214
  %v224 = vadd.f32 %v207, %v218
  %225 = vst [vmem:[%s5] sm:$0xff] %v221
  %226 = vst [vmem:[%s5 + $0x8] sm:$0xff] %v223
  %227 = vst [vmem:[%s6] sm:$0xff] %v222
  %228 = vst [vmem:[%s6 + $0x8] sm:$0xff] %v224
  // Predicated region
  $region22: #{bilstm_forward.6} parent=0 // pred_check
    _
  $region23: #{bilstm_forward.6} parent=0 // pred_check_branch
    %230 = sbr.rel (0) target = $region25
  $region24: #{bilstm_forward.6} parent=0 // pred_region
    _
  $region25: #{bilstm_forward.6} parent=0 // pred_fallthru
    _
  // Predicated region
  $region26: #{bilstm_forward.6} parent=0 // pred_check
    _
  $region27: #{bilstm_forward.6} parent=0 // pred_check_branch
    %232 = sbr.rel (0) target = $region29
  $region28: #{bilstm_forward.6} parent=0 // pred_region
    _
  $region29: #{bilstm_forward.6} parent=0 // pred_fallthru
    _
  // Predicated region
  $region30: #{bilstm_forward.6} parent=0 // pred_check
    _
  $region31: #{bilstm_forward.6} parent=0 // pred_check_branch
    %234 = sbr.rel (0) target = $region33
  $region32: #{bilstm_forward.6} parent=0 // pred_region
    _
  $region33: #{bilstm_forward.6} parent=0 // pred_fallthru
    _
  // Predicated region
  $region34: #{bilstm_forward.6} parent=0 // pred_check
    _
  $region35: #{bilstm_forward.6} parent=0 // pred_check_branch
    %236 = sbr.rel (0) target = $region37
  $region36: #{bilstm_forward.6} parent=0 // pred_region
    _
  $region37: #{bilstm_forward.6} parent=0 // pred_fallthru
    _

// kernel: bilstm_forward.5
$region0: #{bilstm_forward.5}
  #allocation0 [shape = 'u32[]', space=smem, size = 0x4, offset = 0x4, fixed_abs, tag = 'smem constant byte address 0x4 - core index']
  #allocation1 [shape = 'u32[144,128]{1,0:T(1,128)}', space=vmem, size = 0x12000, scoped, tag = 'internal scratch']
  #allocation2 [shape = 'f32[2,32]{1,0:T(2,128)}', space=vmem, size = 0x400, scoped, tag = 'scratch operand']
  #allocation3 [shape = 'f32[2,32]{1,0:T(2,128)}', space=vmem, size = 0x400, scoped, tag = 'scratch operand']
  #allocation4 [shape = 'f32[2,32]{1,0:T(2,128)}', space=vmem, size = 0x400, scoped, tag = 'scratch operand']
  #allocation5 [shape = 'f32[2,32]{1,0:T(2,128)}', space=vmem, size = 0x400, scoped, tag = 'scratch operand']
  %s0 = inlined_call_operand.vmem [shape: f32[8,2,128], index: 0, kind: input, shape index: {}]
  %s1 = inlined_call_operand.vmem [shape: f32[8,2,128], index: 1, kind: input, shape index: {}]
  %s2 = inlined_call_operand.vmem [shape: f32[32,128], index: 2, kind: input, shape index: {}]
  %s3 = inlined_call_operand.vmem [shape: f32[32,128], index: 3, kind: input, shape index: {}]
  %s4 = inlined_call_operand.vmem [shape: f32[8,2,32], index: 4, kind: output, shape index: {0}]
  %s5 = inlined_call_operand.vmem [shape: f32[8,2,32], index: 5, kind: output, shape index: {1}]
  %6 = xla_tuple %s4, %s5
  %s7 = sld [smem:[#allocation0]]
  $region38: #{bilstm_forward.5} parent=0
    _
  %s9 = ssub.s32 1, %s7
  %s10 = scalar_select 0, %s9, %s7
  // Predicated region
  $region2: #{bilstm_forward.5} parent=0 // pred_check
    _
  $region3: #{bilstm_forward.5} parent=0 // pred_check_branch
    %12 = sbr.rel (0) target = $region5
  $region4: #{bilstm_forward.5} parent=0 // pred_region
    _
  $region5: #{bilstm_forward.5} parent=0 // pred_fallthru
    _
  // Predicated region
  $region6: #{bilstm_forward.5} parent=0 // pred_check
    _
  $region7: #{bilstm_forward.5} parent=0 // pred_check_branch
    %14 = sbr.rel (0) target = $region9
  $region8: #{bilstm_forward.5} parent=0 // pred_region
    %s15 = ssub.s32 0, 0
    %s16 = smul.u32 8, %s15
    %p17 = scmp.lt.s32.totalorder %s16, 7
    %s18 = scalar_select %p17, %s16, 7
    %s19 = smul.addr %s18, 2
    %s20 = scalar_lea.vmem %s1, %s19
    %s21 = ssub.s32 0, 0
    %s22 = smul.u32 8, %s21
  $region9: #{bilstm_forward.5} parent=0 // pred_fallthru
    _
  // Predicated region
  $region10: #{bilstm_forward.5} parent=0 // pred_check
    _
  $region11: #{bilstm_forward.5} parent=0 // pred_check_branch
    %24 = sbr.rel (0) target = $region13
  $region12: #{bilstm_forward.5} parent=0 // pred_region
    _
  $region13: #{bilstm_forward.5} parent=0 // pred_fallthru
    _
  // Predicated region
  $region14: #{bilstm_forward.5} parent=0 // pred_check
    _
  $region15: #{bilstm_forward.5} parent=0 // pred_check_branch
    %26 = sbr.rel (0) target = $region17
  $region16: #{bilstm_forward.5} parent=0 // pred_region
    _
  $region17: #{bilstm_forward.5} parent=0 // pred_fallthru
    _
  %s27 = ssub.s32 0, 0
  %s28 = smul.u32 8, %s27
  %p29 = scmp.lt.s32.totalorder %s28, 7
  %s30 = scalar_select %p29, %s28, 7
  %s31 = smul.addr %s30, 2
  %s32 = scalar_lea.vmem %s1, %s31
  %s33 = ssub.s32 0, 0
  %s34 = smul.u32 8, %s33
  %p35 = scmp.lt.s32.totalorder %s34, 7
  %s36 = scalar_select %p35, %s34, 7
  %s37 = smul.addr %s36, 2
  %s38 = scalar_lea.vmem %s5, %s37
  %s39 = ssub.s32 0, 0
  %s40 = smul.u32 8, %s39
  %p41 = scmp.lt.s32.totalorder %s40, 7
  %s42 = scalar_select %p41, %s40, 7
  %s43 = smul.addr %s42, 2
  %s44 = scalar_lea.vmem %s1, %s43
  %s45 = ssub.s32 0, 0
  %s46 = smul.u32 8, %s45
  %s47 = ssub.s32 0, 0
  %s48 = smul.u32 8, %s47
  %p49 = scmp.lt.s32.totalorder %s48, 7
  %s50 = scalar_select %p49, %s48, 7
  %s51 = smul.addr %s50, 2
  %s52 = scalar_lea.vmem %s5, %s51
  %s53 = ssub.s32 0, 0
  %s54 = smul.u32 8, %s53
  %p55 = scmp.eq.s32.totalorder 0, 0
  // Predicated region
  $region18: #{bilstm_forward.5} parent=0 // pred_check
    %p56 = pneg %p55
  $region19: #{bilstm_forward.5} parent=0 // pred_check_branch
    %58 = sbr.rel (%p56) target = $region21
  $region20: #{bilstm_forward.5} parent=0 // pred_region
    %vm59 = vcmask 254976
    %60 = vst.msk [vmem:[#allocation2] sm:$0x3] %vm59, 0.0
    %61 = vst.msk [vmem:[#allocation3] sm:$0x3] %vm59, 0.0
    %62 = vst.msk [vmem:[#allocation4] sm:$0x3] %vm59, 0.0
    %63 = vst.msk [vmem:[#allocation5] sm:$0x3] %vm59, 0.0
  $region21: #{bilstm_forward.5} parent=0 // pred_fallthru
    _
  %v64 = vld [vmem:[%s2] sm:$0xff]
  %v65 = vld [vmem:[%s2 + $0x8] sm:$0xff]
  %v66 = vld [vmem:[%s2 + $0x10] sm:$0xff]
  %v67 = vld [vmem:[%s2 + $0x18] sm:$0xff]
  %v68 = vld [vmem:[%s3] sm:$0xff]
  %v69 = vld [vmem:[%s3 + $0x8] sm:$0xff]
  %v70 = vld [vmem:[%s3 + $0x10] sm:$0xff]
  %v71 = vld [vmem:[%s3 + $0x18] sm:$0xff]
  %v72 = vld [vmem:[#allocation2] sm:$0x3]
  %v73 = vld [vmem:[#allocation3] sm:$0x3]
  %v74 = vld [vmem:[#allocation4] sm:$0x3]
  %v75 = vld [vmem:[#allocation5] sm:$0x3]
  %v76 = vld [vmem:[%s0] sm:$0x3]
  %vm77 = vcmask 261120
  %v79 = vsel %vm77, %v72, 0
  %81 = vmatprep.subr.mxu0 0.0
  %82 = vmatpush1.msra.mxu0 %v64
  %83 = vmatprep.subr.mxu0 0.0
  %84 = vmatpush1.msra.mxu0 %v65
  %85 = vmatprep.subr.mxu0 0.0
  %86 = vmatpush1.msra.mxu0 %v66
  %87 = vmatprep.subr.mxu0 0.0
  %88 = vmatpush1.msra.mxu0 %v67
  %89 = vmatprep.subr.mxu0 0.0
  %90 = vmatpush1.msra.mxu0 0.0
  %91 = vmatprep.subr.mxu0 0.0
  %92 = vmatpush1.msra.mxu0 0.0
  %93 = vmatprep.subr.mxu0 0.0
  %94 = vmatpush1.msra.mxu0 0.0
  %95 = vmatprep.subr.mxu0 0.0
  %96 = vmatpush1.msra.mxu0 0.0
  %97 = vmatprep.subr.mxu0 0.0
  %98 = vmatpush1.msra.mxu0 0.0
  %99 = vmatprep.subr.mxu0 0.0
  %100 = vmatpush1.msra.mxu0 0.0
  %101 = vmatprep.subr.mxu0 0.0
  %102 = vmatpush1.msra.mxu0 0.0
  %103 = vmatprep.subr.mxu0 0.0
  %104 = vmatpush1.msra.mxu0 0.0
  %105 = vmatprep.subr.mxu0 0.0
  %106 = vmatpush1.msra.mxu0 0.0
  %107 = vmatprep.subr.mxu0 0.0
  %108 = vmatpush1.msra.mxu0 0.0
  %109 = vmatprep.subr.mxu0 0.0
  %110 = vmatpush1.msra.mxu0 0.0
  %111 = vmatprep.subr.mxu0 0.0
  %112 = vmatpush1.msra.mxu0 0.0
  %113 = vmatprep.subr.mxu0 0.0
  %114 = vmatpush1.msra.mxu0 0.0
  %115 = vmatprep.subr.mxu0 0.0
  %116 = vmatpush1.msra.mxu0 0.0
  %117 = vmatprep.subr.mxu0 0.0
  %118 = vmatpush1.msra.mxu0 0.0
  %119 = vmatprep.subr.mxu0 0.0
  %120 = vmatpush1.msra.mxu0 0.0
  %121 = vmatprep.subr.mxu0 0.0
  %122 = vmatpush1.msra.mxu0 0.0
  %123 = vmatprep.subr.mxu0 0.0
  %124 = vmatpush1.msra.mxu0 0.0
  %125 = vmatprep.subr.mxu0 0.0
  %126 = vmatpush1.msra.mxu0 0.0
  %127 = vmatprep.subr.mxu0 0.0
  %128 = vmatpush1.msra.mxu0 0.0
  %129 = vmatprep.subr.mxu0 0.0
  %130 = vmatpush1.msra.mxu0 0.0
  %131 = vmatprep.subr.mxu0 0.0
  %132 = vmatpush1.msra.mxu0 0.0
  %133 = vmatprep.subr.mxu0 0.0
  %134 = vmatpush1.msra.mxu0 0.0
  %135 = vmatprep.subr.mxu0 0.0
  %136 = vmatpush1.msra.mxu0 0.0
  %137 = vmatprep.subr.mxu0 0.0
  %138 = vmatpush1.msra.mxu0 0.0
  %139 = vmatprep.subr.mxu0 0.0
  %140 = vmatpush1.msra.mxu0 0.0
  %141 = vmatprep.subr.mxu0 0.0
  %142 = vmatpush1.msra.mxu0 0.0
  %143 = vmatprep.subr.mxu0 0.0
  %144 = vmatpush1.msra.mxu0 0.0
  %145 = vmatprep.mubr.f32.mxu0 0.0
  %146 = vmatmul.mubr.f32.gmra.mrb[0].mxu0 %v79
  %v147 = vpop.f32.mrb[0].mxu0
  %v148 = vadd.f32 0.0, %v147
  %v149 = vpop.f32.mrb[0].mxu0
  %150 = vdwg.mxu0
  %v151 = vadd.f32 %v76, %v148
  %v152 = vxor.u32 %v151, 2147483648
  %v153 = vmul.f32 %v152, 1.442695
  %v154 = vpow.pop %v153
  %v155 = vadd.f32 %v154, 1.0
  %v156 = vrcp.pop %v155
  %v157 = vmul.f32 1.0, %v156
  %v158 = vtanh.pop %v151
  %160 = vrot.lane.b32.xlu0 %v73, 32
  %v161 = vpop.permute.xlu0 %160
  %v163 = vmul.f32 %v157, %v161
  %165 = vrot.lane.b32.xlu0 %v158, 64
  %v166 = vpop.permute.xlu0 %165
  %v168 = vmul.f32 %v157, %v166
  %170 = vrot.lane.b32.xlu0 %v168, 32
  %v171 = vpop.permute.xlu0 %170
  %v173 = vadd.f32 %v163, %v171
  %v174 = vtanh.pop %v173
  %176 = vrot.lane.b32.xlu0 %v174, 64
  %v177 = vpop.permute.xlu0 %176
  %v179 = vmul.f32 %v157, %v177
  %181 = vrot.lane.b32.xlu0 %v179, 32
  %v182 = vpop.permute.xlu0 %181
  %vm184 = vcmask 254976
  %185 = vst.msk [vmem:[%s4] sm:$0x3] %vm184, %v182
  %s186 = scalar_lea.vmem %s44, 14
  %v187 = vld [vmem:[%s186] sm:$0x3]
  %v189 = vsel %vm77, %v74, 0
  %191 = vmatprep.subr.mxu0 0.0
  %192 = vmatpush1.msra.mxu0 %v68
  %193 = vmatprep.subr.mxu0 0.0
  %194 = vmatpush1.msra.mxu0 %v69
  %195 = vmatprep.subr.mxu0 0.0
  %196 = vmatpush1.msra.mxu0 %v70
  %197 = vmatprep.subr.mxu0 0.0
  %198 = vmatpush1.msra.mxu0 %v71
  %199 = vmatprep.subr.mxu0 0.0
  %200 = vmatpush1.msra.mxu0 0.0
  %201 = vmatprep.subr.mxu0 0.0
  %202 = vmatpush1.msra.mxu0 0.0
  %203 = vmatprep.subr.mxu0 0.0
  %204 = vmatpush1.msra.mxu0 0.0
  %205 = vmatprep.subr.mxu0 0.0
  %206 = vmatpush1.msra.mxu0 0.0
  %207 = vmatprep.subr.mxu0 0.0
  %208 = vmatpush1.msra.mxu0 0.0
  %209 = vmatprep.subr.mxu0 0.0
  %210 = vmatpush1.msra.mxu0 0.0
  %211 = vmatprep.subr.mxu0 0.0
  %212 = vmatpush1.msra.mxu0 0.0
  %213 = vmatprep.subr.mxu0 0.0
  %214 = vmatpush1.msra.mxu0 0.0
  %215 = vmatprep.subr.mxu0 0.0
  %216 = vmatpush1.msra.mxu0 0.0
  %217 = vmatprep.subr.mxu0 0.0
  %218 = vmatpush1.msra.mxu0 0.0
  %219 = vmatprep.subr.mxu0 0.0
  %220 = vmatpush1.msra.mxu0 0.0
  %221 = vmatprep.subr.mxu0 0.0
  %222 = vmatpush1.msra.mxu0 0.0
  %223 = vmatprep.subr.mxu0 0.0
  %224 = vmatpush1.msra.mxu0 0.0
  %225 = vmatprep.subr.mxu0 0.0
  %226 = vmatpush1.msra.mxu0 0.0
  %227 = vmatprep.subr.mxu0 0.0
  %228 = vmatpush1.msra.mxu0 0.0
  %229 = vmatprep.subr.mxu0 0.0
  %230 = vmatpush1.msra.mxu0 0.0
  %231 = vmatprep.subr.mxu0 0.0
  %232 = vmatpush1.msra.mxu0 0.0
  %233 = vmatprep.subr.mxu0 0.0
  %234 = vmatpush1.msra.mxu0 0.0
  %235 = vmatprep.subr.mxu0 0.0
  %236 = vmatpush1.msra.mxu0 0.0
  %237 = vmatprep.subr.mxu0 0.0
  %238 = vmatpush1.msra.mxu0 0.0
  %239 = vmatprep.subr.mxu0 0.0
  %240 = vmatpush1.msra.mxu0 0.0
  %241 = vmatprep.subr.mxu0 0.0
  %242 = vmatpush1.msra.mxu0 0.0
  %243 = vmatprep.subr.mxu0 0.0
  %244 = vmatpush1.msra.mxu0 0.0
  %245 = vmatprep.subr.mxu0 0.0
  %246 = vmatpush1.msra.mxu0 0.0
  %247 = vmatprep.subr.mxu0 0.0
  %248 = vmatpush1.msra.mxu0 0.0
  %249 = vmatprep.subr.mxu0 0.0
  %250 = vmatpush1.msra.mxu0 0.0
  %251 = vmatprep.subr.mxu0 0.0
  %252 = vmatpush1.msra.mxu0 0.0
  %253 = vmatprep.subr.mxu0 0.0
  %254 = vmatpush1.msra.mxu0 0.0
  %255 = vmatprep.mubr.f32.mxu0 0.0
  %256 = vmatmul.mubr.f32.gmra.mrb[0].mxu0 %v189
  %v257 = vpop.f32.mrb[0].mxu0
  %v258 = vadd.f32 0.0, %v257
  %v259 = vpop.f32.mrb[0].mxu0
  %260 = vdwg.mxu0
  %v261 = vadd.f32 %v187, %v258
  %v262 = vxor.u32 %v261, 2147483648
  %v263 = vmul.f32 %v262, 1.442695
  %v264 = vpow.pop %v263
  %v265 = vadd.f32 %v264, 1.0
  %v266 = vrcp.pop %v265
  %v267 = vmul.f32 1.0, %v266
  %v268 = vtanh.pop %v261
  %270 = vrot.lane.b32.xlu0 %v75, 32
  %v271 = vpop.permute.xlu0 %270
  %v273 = vmul.f32 %v267, %v271
  %275 = vrot.lane.b32.xlu0 %v268, 64
  %v276 = vpop.permute.xlu0 %275
  %v278 = vmul.f32 %v267, %v276
  %280 = vrot.lane.b32.xlu0 %v278, 32
  %v281 = vpop.permute.xlu0 %280
  %v283 = vadd.f32 %v273, %v281
  %v284 = vtanh.pop %v283
  %286 = vrot.lane.b32.xlu0 %v284, 64
  %v287 = vpop.permute.xlu0 %286
  %v289 = vmul.f32 %v267, %v287
  %291 = vrot.lane.b32.xlu0 %v289, 32
  %v292 = vpop.permute.xlu0 %291
  %s294 = scalar_lea.vmem %s52, 14
  %295 = vst.msk [vmem:[%s294] sm:$0x3] %vm184, %v292
  %s296 = scalar_lea.vmem %s0, 2
  %v297 = vld [vmem:[%s296] sm:$0x3]
  %v298 = vsel %vm77, %v182, 0
  %300 = vmatprep.subr.mxu0 0.0
  %301 = vmatpush1.msra.mxu0 %v64
  %302 = vmatprep.subr.mxu0 0.0
  %303 = vmatpush1.msra.mxu0 %v65
  %304 = vmatprep.subr.mxu0 0.0
  %305 = vmatpush1.msra.mxu0 %v66
  %306 = vmatprep.subr.mxu0 0.0
  %307 = vmatpush1.msra.mxu0 %v67
  %308 = vmatprep.subr.mxu0 0.0
  %309 = vmatpush1.msra.mxu0 0.0
  %310 = vmatprep.subr.mxu0 0.0
  %311 = vmatpush1.msra.mxu0 0.0
  %312 = vmatprep.subr.mxu0 0.0
  %313 = vmatpush1.msra.mxu0 0.0
  %314 = vmatprep.subr.mxu0 0.0
  %315 = vmatpush1.msra.mxu0 0.0
  %316 = vmatprep.subr.mxu0 0.0
  %317 = vmatpush1.msra.mxu0 0.0
  %318 = vmatprep.subr.mxu0 0.0
  %319 = vmatpush1.msra.mxu0 0.0
  %320 = vmatprep.subr.mxu0 0.0
  %321 = vmatpush1.msra.mxu0 0.0
  %322 = vmatprep.subr.mxu0 0.0
  %323 = vmatpush1.msra.mxu0 0.0
  %324 = vmatprep.subr.mxu0 0.0
  %325 = vmatpush1.msra.mxu0 0.0
  %326 = vmatprep.subr.mxu0 0.0
  %327 = vmatpush1.msra.mxu0 0.0
  %328 = vmatprep.subr.mxu0 0.0
  %329 = vmatpush1.msra.mxu0 0.0
  %330 = vmatprep.subr.mxu0 0.0
  %331 = vmatpush1.msra.mxu0 0.0
  %332 = vmatprep.subr.mxu0 0.0
  %333 = vmatpush1.msra.mxu0 0.0
  %334 = vmatprep.subr.mxu0 0.0
  %335 = vmatpush1.msra.mxu0 0.0
  %336 = vmatprep.subr.mxu0 0.0
  %337 = vmatpush1.msra.mxu0 0.0
  %338 = vmatprep.subr.mxu0 0.0
  %339 = vmatpush1.msra.mxu0 0.0
  %340 = vmatprep.subr.mxu0 0.0
  %341 = vmatpush1.msra.mxu0 0.0
  %342 = vmatprep.subr.mxu0 0.0
  %343 = vmatpush1.msra.mxu0 0.0
  %344 = vmatprep.subr.mxu0 0.0
  %345 = vmatpush1.msra.mxu0 0.0
  %346 = vmatprep.subr.mxu0 0.0
  %347 = vmatpush1.msra.mxu0 0.0
  %348 = vmatprep.subr.mxu0 0.0
  %349 = vmatpush1.msra.mxu0 0.0
  %350 = vmatprep.subr.mxu0 0.0
  %351 = vmatpush1.msra.mxu0 0.0
  %352 = vmatprep.subr.mxu0 0.0
  %353 = vmatpush1.msra.mxu0 0.0
  %354 = vmatprep.subr.mxu0 0.0
  %355 = vmatpush1.msra.mxu0 0.0
  %356 = vmatprep.subr.mxu0 0.0
  %357 = vmatpush1.msra.mxu0 0.0
  %358 = vmatprep.subr.mxu0 0.0
  %359 = vmatpush1.msra.mxu0 0.0
  %360 = vmatprep.subr.mxu0 0.0
  %361 = vmatpush1.msra.mxu0 0.0
  %362 = vmatprep.subr.mxu0 0.0
  %363 = vmatpush1.msra.mxu0 0.0
  %364 = vmatprep.mubr.f32.mxu0 0.0
  %365 = vmatmul.mubr.f32.gmra.mrb[0].mxu0 %v298
  %v366 = vpop.f32.mrb[0].mxu0
  %v367 = vadd.f32 0.0, %v366
  %v368 = vpop.f32.mrb[0].mxu0
  %369 = vdwg.mxu0
  %v370 = vadd.f32 %v297, %v367
  %v371 = vxor.u32 %v370, 2147483648
  %v372 = vmul.f32 %v371, 1.442695
  %v373 = vpow.pop %v372
  %v374 = vadd.f32 %v373, 1.0
  %v375 = vrcp.pop %v374
  %v376 = vmul.f32 1.0, %v375
  %v377 = vtanh.pop %v370
  %v378 = vmul.f32 %v376, %v173
  %380 = vrot.lane.b32.xlu0 %v377, 64
  %v381 = vpop.permute.xlu0 %380
  %v383 = vmul.f32 %v376, %v381
  %385 = vrot.lane.b32.xlu0 %v383, 32
  %v386 = vpop.permute.xlu0 %385
  %v388 = vadd.f32 %v378, %v386
  %v389 = vtanh.pop %v388
  %391 = vrot.lane.b32.xlu0 %v389, 64
  %v392 = vpop.permute.xlu0 %391
  %v394 = vmul.f32 %v376, %v392
  %396 = vrot.lane.b32.xlu0 %v394, 32
  %v397 = vpop.permute.xlu0 %396
  %s399 = scalar_lea.vmem %s4, 2
  %400 = vst.msk [vmem:[%s399] sm:$0x3] %vm184, %v397
  %s401 = scalar_lea.vmem %s44, 12
  %v402 = vld [vmem:[%s401] sm:$0x3]
  %v403 = vsel %vm77, %v292, 0
  %405 = vmatprep.subr.mxu0 0.0
  %406 = vmatpush1.msra.mxu0 %v68
  %407 = vmatprep.subr.mxu0 0.0
  %408 = vmatpush1.msra.mxu0 %v69
  %409 = vmatprep.subr.mxu0 0.0
  %410 = vmatpush1.msra.mxu0 %v70
  %411 = vmatprep.subr.mxu0 0.0
  %412 = vmatpush1.msra.mxu0 %v71
  %413 = vmatprep.subr.mxu0 0.0
  %414 = vmatpush1.msra.mxu0 0.0
  %415 = vmatprep.subr.mxu0 0.0
  %416 = vmatpush1.msra.mxu0 0.0
  %417 = vmatprep.subr.mxu0 0.0
  %418 = vmatpush1.msra.mxu0 0.0
  %419 = vmatprep.subr.mxu0 0.0
  %420 = vmatpush1.msra.mxu0 0.0
  %421 = vmatprep.subr.mxu0 0.0
  %422 = vmatpush1.msra.mxu0 0.0
  %423 = vmatprep.subr.mxu0 0.0
  %424 = vmatpush1.msra.mxu0 0.0
  %425 = vmatprep.subr.mxu0 0.0
  %426 = vmatpush1.msra.mxu0 0.0
  %427 = vmatprep.subr.mxu0 0.0
  %428 = vmatpush1.msra.mxu0 0.0
  %429 = vmatprep.subr.mxu0 0.0
  %430 = vmatpush1.msra.mxu0 0.0
  %431 = vmatprep.subr.mxu0 0.0
  %432 = vmatpush1.msra.mxu0 0.0
  %433 = vmatprep.subr.mxu0 0.0
  %434 = vmatpush1.msra.mxu0 0.0
  %435 = vmatprep.subr.mxu0 0.0
  %436 = vmatpush1.msra.mxu0 0.0
  %437 = vmatprep.subr.mxu0 0.0
  %438 = vmatpush1.msra.mxu0 0.0
  %439 = vmatprep.subr.mxu0 0.0
  %440 = vmatpush1.msra.mxu0 0.0
  %441 = vmatprep.subr.mxu0 0.0
  %442 = vmatpush1.msra.mxu0 0.0
  %443 = vmatprep.subr.mxu0 0.0
  %444 = vmatpush1.msra.mxu0 0.0
  %445 = vmatprep.subr.mxu0 0.0
  %446 = vmatpush1.msra.mxu0 0.0
  %447 = vmatprep.subr.mxu0 0.0
  %448 = vmatpush1.msra.mxu0 0.0
  %449 = vmatprep.subr.mxu0 0.0
  %450 = vmatpush1.msra.mxu0 0.0
  %451 = vmatprep.subr.mxu0 0.0
  %452 = vmatpush1.msra.mxu0 0.0
  %453 = vmatprep.subr.mxu0 0.0
  %454 = vmatpush1.msra.mxu0 0.0
  %455 = vmatprep.subr.mxu0 0.0
  %456 = vmatpush1.msra.mxu0 0.0
  %457 = vmatprep.subr.mxu0 0.0
  %458 = vmatpush1.msra.mxu0 0.0
  %459 = vmatprep.subr.mxu0 0.0
  %460 = vmatpush1.msra.mxu0 0.0
  %461 = vmatprep.subr.mxu0 0.0
  %462 = vmatpush1.msra.mxu0 0.0
  %463 = vmatprep.subr.mxu0 0.0
  %464 = vmatpush1.msra.mxu0 0.0
  %465 = vmatprep.subr.mxu0 0.0
  %466 = vmatpush1.msra.mxu0 0.0
  %467 = vmatprep.subr.mxu0 0.0
  %468 = vmatpush1.msra.mxu0 0.0
  %469 = vmatprep.mubr.f32.mxu0 0.0
  %470 = vmatmul.mubr.f32.gmra.mrb[0].mxu0 %v403
  %v471 = vpop.f32.mrb[0].mxu0
  %v472 = vadd.f32 0.0, %v471
  %v473 = vpop.f32.mrb[0].mxu0
  %474 = vdwg.mxu0
  %v475 = vadd.f32 %v402, %v472
  %v476 = vxor.u32 %v475, 2147483648
  %v477 = vmul.f32 %v476, 1.442695
  %v478 = vpow.pop %v477
  %v479 = vadd.f32 %v478, 1.0
  %v480 = vrcp.pop %v479
  %v481 = vmul.f32 1.0, %v480
  %v482 = vtanh.pop %v475
  %v483 = vmul.f32 %v481, %v283
  %485 = vrot.lane.b32.xlu0 %v482, 64
  %v486 = vpop.permute.xlu0 %485
  %v488 = vmul.f32 %v481, %v486
  %490 = vrot.lane.b32.xlu0 %v488, 32
  %v491 = vpop.permute.xlu0 %490
  %v493 = vadd.f32 %v483, %v491
  %v494 = vtanh.pop %v493
  %496 = vrot.lane.b32.xlu0 %v494, 64
  %v497 = vpop.permute.xlu0 %496
  %v499 = vmul.f32 %v481, %v497
  %501 = vrot.lane.b32.xlu0 %v499, 32
  %v502 = vpop.permute.xlu0 %501
  %s504 = scalar_lea.vmem %s52, 12
  %505 = vst.msk [vmem:[%s504] sm:$0x3] %vm184, %v502
  %s506 = scalar_lea.vmem %s0, 4
  %v507 = vld [vmem:[%s506] sm:$0x3]
  %v508 = vsel %vm77, %v397, 0
  %510 = vmatprep.subr.mxu0 0.0
  %511 = vmatpush1.msra.mxu0 %v64
  %512 = vmatprep.subr.mxu0 0.0
  %513 = vmatpush1.msra.mxu0 %v65
  %514 = vmatprep.subr.mxu0 0.0
  %515 = vmatpush1.msra.mxu0 %v66
  %516 = vmatprep.subr.mxu0 0.0
  %517 = vmatpush1.msra.mxu0 %v67
  %518 = vmatprep.subr.mxu0 0.0
  %519 = vmatpush1.msra.mxu0 0.0
  %520 = vmatprep.subr.mxu0 0.0
  %521 = vmatpush1.msra.mxu0 0.0
  %522 = vmatprep.subr.mxu0 0.0
  %523 = vmatpush1.msra.mxu0 0.0
  %524 = vmatprep.subr.mxu0 0.0
  %525 = vmatpush1.msra.mxu0 0.0
  %526 = vmatprep.subr.mxu0 0.0
  %527 = vmatpush1.msra.mxu0 0.0
  %528 = vmatprep.subr.mxu0 0.0
  %529 = vmatpush1.msra.mxu0 0.0
  %530 = vmatprep.subr.mxu0 0.0
  %531 = vmatpush1.msra.mxu0 0.0
  %532 = vmatprep.subr.mxu0 0.0
  %533 = vmatpush1.msra.mxu0 0.0
  %534 = vmatprep.subr.mxu0 0.0
  %535 = vmatpush1.msra.mxu0 0.0
  %536 = vmatprep.subr.mxu0 0.0
  %537 = vmatpush1.msra.mxu0 0.0
  %538 = vmatprep.subr.mxu0 0.0
  %539 = vmatpush1.msra.mxu0 0.0
  %540 = vmatprep.subr.mxu0 0.0
  %541 = vmatpush1.msra.mxu0 0.0
  %542 = vmatprep.subr.mxu0 0.0
  %543 = vmatpush1.msra.mxu0 0.0
  %544 = vmatprep.subr.mxu0 0.0
  %545 = vmatpush1.msra.mxu0 0.0
  %546 = vmatprep.subr.mxu0 0.0
  %547 = vmatpush1.msra.mxu0 0.0
  %548 = vmatprep.subr.mxu0 0.0
  %549 = vmatpush1.msra.mxu0 0.0
  %550 = vmatprep.subr.mxu0 0.0
  %551 = vmatpush1.msra.mxu0 0.0
  %552 = vmatprep.subr.mxu0 0.0
  %553 = vmatpush1.msra.mxu0 0.0
  %554 = vmatprep.subr.mxu0 0.0
  %555 = vmatpush1.msra.mxu0 0.0
  %556 = vmatprep.subr.mxu0 0.0
  %557 = vmatpush1.msra.mxu0 0.0
  %558 = vmatprep.subr.mxu0 0.0
  %559 = vmatpush1.msra.mxu0 0.0
  %560 = vmatprep.subr.mxu0 0.0
  %561 = vmatpush1.msra.mxu0 0.0
  %562 = vmatprep.subr.mxu0 0.0
  %563 = vmatpush1.msra.mxu0 0.0
  %564 = vmatprep.subr.mxu0 0.0
  %565 = vmatpush1.msra.mxu0 0.0
  %566 = vmatprep.subr.mxu0 0.0
  %567 = vmatpush1.msra.mxu0 0.0
  %568 = vmatprep.subr.mxu0 0.0
  %569 = vmatpush1.msra.mxu0 0.0
  %570 = vmatprep.subr.mxu0 0.0
  %571 = vmatpush1.msra.mxu0 0.0
  %572 = vmatprep.subr.mxu0 0.0
  %573 = vmatpush1.msra.mxu0 0.0
  %574 = vmatprep.mubr.f32.mxu0 0.0
  %575 = vmatmul.mubr.f32.gmra.mrb[0].mxu0 %v508
  %v576 = vpop.f32.mrb[0].mxu0
  %v577 = vadd.f32 0.0, %v576
  %v578 = vpop.f32.mrb[0].mxu0
  %579 = vdwg.mxu0
  %v580 = vadd.f32 %v507, %v577
  %v581 = vxor.u32 %v580, 2147483648
  %v582 = vmul.f32 %v581, 1.442695
  %v583 = vpow.pop %v582
  %v584 = vadd.f32 %v583, 1.0
  %v585 = vrcp.pop %v584
  %v586 = vmul.f32 1.0, %v585
  %v587 = vtanh.pop %v580
  %v588 = vmul.f32 %v586, %v388
  %590 = vrot.lane.b32.xlu0 %v587, 64
  %v591 = vpop.permute.xlu0 %590
  %v593 = vmul.f32 %v586, %v591
  %595 = vrot.lane.b32.xlu0 %v593, 32
  %v596 = vpop.permute.xlu0 %595
  %v598 = vadd.f32 %v588, %v596
  %v599 = vtanh.pop %v598
  %601 = vrot.lane.b32.xlu0 %v599, 64
  %v602 = vpop.permute.xlu0 %601
  %v604 = vmul.f32 %v586, %v602
  %606 = vrot.lane.b32.xlu0 %v604, 32
  %v607 = vpop.permute.xlu0 %606
  %s609 = scalar_lea.vmem %s4, 4
  %610 = vst.msk [vmem:[%s609] sm:$0x3] %vm184, %v607
  %s611 = scalar_lea.vmem %s44, 10
  %v612 = vld [vmem:[%s611] sm:$0x3]
  %v613 = vsel %vm77, %v502, 0
  %615 = vmatprep.subr.mxu0 0.0
  %616 = vmatpush1.msra.mxu0 %v68
  %617 = vmatprep.subr.mxu0 0.0
  %618 = vmatpush1.msra.mxu0 %v69
  %619 = vmatprep.subr.mxu0 0.0
  %620 = vmatpush1.msra.mxu0 %v70
  %621 = vmatprep.subr.mxu0 0.0
  %622 = vmatpush1.msra.mxu0 %v71
  %623 = vmatprep.subr.mxu0 0.0
  %624 = vmatpush1.msra.mxu0 0.0
  %625 = vmatprep.subr.mxu0 0.0
  %626 = vmatpush1.msra.mxu0 0.0
  %627 = vmatprep.subr.mxu0 0.0
  %628 = vmatpush1.msra.mxu0 0.0
  %629 = vmatprep.subr.mxu0 0.0
  %630 = vmatpush1.msra.mxu0 0.0
  %631 = vmatprep.subr.mxu0 0.0
  %632 = vmatpush1.msra.mxu0 0.0
  %633 = vmatprep.subr.mxu0 0.0
  %634 = vmatpush1.msra.mxu0 0.0
  %635 = vmatprep.subr.mxu0 0.0
  %636 = vmatpush1.msra.mxu0 0.0
  %637 = vmatprep.subr.mxu0 0.0
  %638 = vmatpush1.msra.mxu0 0.0
  %639 = vmatprep.subr.mxu0 0.0
  %640 = vmatpush1.msra.mxu0 0.0
  %641 = vmatprep.subr.mxu0 0.0
  %642 = vmatpush1.msra.mxu0 0.0
  %643 = vmatprep.subr.mxu0 0.0
  %644 = vmatpush1.msra.mxu0 0.0
  %645 = vmatprep.subr.mxu0 0.0
  %646 = vmatpush1.msra.mxu0 0.0
  %647 = vmatprep.subr.mxu0 0.0
  %648 = vmatpush1.msra.mxu0 0.0
  %649 = vmatprep.subr.mxu0 0.0
  %650 = vmatpush1.msra.mxu0 0.0
  %651 = vmatprep.subr.mxu0 0.0
  %652 = vmatpush1.msra.mxu0 0.0
  %653 = vmatprep.subr.mxu0 0.0
  %654 = vmatpush1.msra.mxu0 0.0
  %655 = vmatprep.subr.mxu0 0.0
  %656 = vmatpush1.msra.mxu0 0.0
  %657 = vmatprep.subr.mxu0 0.0
  %658 = vmatpush1.msra.mxu0 0.0
  %659 = vmatprep.subr.mxu0 0.0
  %660 = vmatpush1.msra.mxu0 0.0
  %661 = vmatprep.subr.mxu0 0.0
  %662 = vmatpush1.msra.mxu0 0.0
  %663 = vmatprep.subr.mxu0 0.0
  %664 = vmatpush1.msra.mxu0 0.0
  %665 = vmatprep.subr.mxu0 0.0
  %666 = vmatpush1.msra.mxu0 0.0
  %667 = vmatprep.subr.mxu0 0.0
  %668 = vmatpush1.msra.mxu0 0.0
  %669 = vmatprep.subr.mxu0 0.0
  %670 = vmatpush1.msra.mxu0 0.0
  %671 = vmatprep.subr.mxu0 0.0
  %672 = vmatpush1.msra.mxu0 0.0
  %673 = vmatprep.subr.mxu0 0.0
  %674 = vmatpush1.msra.mxu0 0.0
  %675 = vmatprep.subr.mxu0 0.0
  %676 = vmatpush1.msra.mxu0 0.0
  %677 = vmatprep.subr.mxu0 0.0
  %678 = vmatpush1.msra.mxu0 0.0
  %679 = vmatprep.mubr.f32.mxu0 0.0
  %680 = vmatmul.mubr.f32.gmra.mrb[0].mxu0 %v613
  %v681 = vpop.f32.mrb[0].mxu0
  %v682 = vadd.f32 0.0, %v681
  %v683 = vpop.f32.mrb[0].mxu0
  %684 = vdwg.mxu0
  %v685 = vadd.f32 %v612, %v682
  %v686 = vxor.u32 %v685, 2147483648
  %v687 = vmul.f32 %v686, 1.442695
  %v688 = vpow.pop %v687
  %v689 = vadd.f32 %v688, 1.0
  %v690 = vrcp.pop %v689
  %v691 = vmul.f32 1.0, %v690
  %v692 = vtanh.pop %v685
  %v693 = vmul.f32 %v691, %v493
  %695 = vrot.lane.b32.xlu0 %v692, 64
  %v696 = vpop.permute.xlu0 %695
  %v698 = vmul.f32 %v691, %v696
  %700 = vrot.lane.b32.xlu0 %v698, 32
  %v701 = vpop.permute.xlu0 %700
  %v703 = vadd.f32 %v693, %v701
  %v704 = vtanh.pop %v703
  %706 = vrot.lane.b32.xlu0 %v704, 64
  %v707 = vpop.permute.xlu0 %706
  %v709 = vmul.f32 %v691, %v707
  %711 = vrot.lane.b32.xlu0 %v709, 32
  %v712 = vpop.permute.xlu0 %711
  %s714 = scalar_lea.vmem %s52, 10
  %715 = vst.msk [vmem:[%s714] sm:$0x3] %vm184, %v712
  %s716 = scalar_lea.vmem %s0, 6
  %v717 = vld [vmem:[%s716] sm:$0x3]
  %v718 = vsel %vm77, %v607, 0
  %720 = vmatprep.subr.mxu0 0.0
  %721 = vmatpush1.msra.mxu0 %v64
  %722 = vmatprep.subr.mxu0 0.0
  %723 = vmatpush1.msra.mxu0 %v65
  %724 = vmatprep.subr.mxu0 0.0
  %725 = vmatpush1.msra.mxu0 %v66
  %726 = vmatprep.subr.mxu0 0.0
  %727 = vmatpush1.msra.mxu0 %v67
  %728 = vmatprep.subr.mxu0 0.0
  %729 = vmatpush1.msra.mxu0 0.0
  %730 = vmatprep.subr.mxu0 0.0
  %731 = vmatpush1.msra.mxu0 0.0
  %732 = vmatprep.subr.mxu0 0.0
  %733 = vmatpush1.msra.mxu0 0.0
  %734 = vmatprep.subr.mxu0 0.0
  %735 = vmatpush1.msra.mxu0 0.0
  %736 = vmatprep.subr.mxu0 0.0
  %737 = vmatpush1.msra.mxu0 0.0
  %738 = vmatprep.subr.mxu0 0.0
  %739 = vmatpush1.msra.mxu0 0.0
  %740 = vmatprep.subr.mxu0 0.0
  %741 = vmatpush1.msra.mxu0 0.0
  %742 = vmatprep.subr.mxu0 0.0
  %743 = vmatpush1.msra.mxu0 0.0
  %744 = vmatprep.subr.mxu0 0.0
  %745 = vmatpush1.msra.mxu0 0.0
  %746 = vmatprep.subr.mxu0 0.0
  %747 = vmatpush1.msra.mxu0 0.0
  %748 = vmatprep.subr.mxu0 0.0
  %749 = vmatpush1.msra.mxu0 0.0
  %750 = vmatprep.subr.mxu0 0.0
  %751 = vmatpush1.msra.mxu0 0.0
  %752 = vmatprep.subr.mxu0 0.0
  %753 = vmatpush1.msra.mxu0 0.0
  %754 = vmatprep.subr.mxu0 0.0
  %755 = vmatpush1.msra.mxu0 0.0
  %756 = vmatprep.subr.mxu0 0.0
  %757 = vmatpush1.msra.mxu0 0.0
  %758 = vmatprep.subr.mxu0 0.0
  %759 = vmatpush1.msra.mxu0 0.0
  %760 = vmatprep.subr.mxu0 0.0
  %761 = vmatpush1.msra.mxu0 0.0
  %762 = vmatprep.subr.mxu0 0.0
  %763 = vmatpush1.msra.mxu0 0.0
  %764 = vmatprep.subr.mxu0 0.0
  %765 = vmatpush1.msra.mxu0 0.0
  %766 = vmatprep.subr.mxu0 0.0
  %767 = vmatpush1.msra.mxu0 0.0
  %768 = vmatprep.subr.mxu0 0.0
  %769 = vmatpush1.msra.mxu0 0.0
  %770 = vmatprep.subr.mxu0 0.0
  %771 = vmatpush1.msra.mxu0 0.0
  %772 = vmatprep.subr.mxu0 0.0
  %773 = vmatpush1.msra.mxu0 0.0
  %774 = vmatprep.subr.mxu0 0.0
  %775 = vmatpush1.msra.mxu0 0.0
  %776 = vmatprep.subr.mxu0 0.0
  %777 = vmatpush1.msra.mxu0 0.0
  %778 = vmatprep.subr.mxu0 0.0
  %779 = vmatpush1.msra.mxu0 0.0
  %780 = vmatprep.subr.mxu0 0.0
  %781 = vmatpush1.msra.mxu0 0.0
  %782 = vmatprep.subr.mxu0 0.0
  %783 = vmatpush1.msra.mxu0 0.0
  %784 = vmatprep.mubr.f32.mxu0 0.0
  %785 = vmatmul.mubr.f32.gmra.mrb[0].mxu0 %v718
  %v786 = vpop.f32.mrb[0].mxu0
  %v787 = vadd.f32 0.0, %v786
  %v788 = vpop.f32.mrb[0].mxu0
  %789 = vdwg.mxu0
  %v790 = vadd.f32 %v717, %v787
  %v791 = vxor.u32 %v790, 2147483648
  %v792 = vmul.f32 %v791, 1.442695
  %v793 = vpow.pop %v792
  %v794 = vadd.f32 %v793, 1.0
  %v795 = vrcp.pop %v794
  %v796 = vmul.f32 1.0, %v795
  %v797 = vtanh.pop %v790
  %v798 = vmul.f32 %v796, %v598
  %800 = vrot.lane.b32.xlu0 %v797, 64
  %v801 = vpop.permute.xlu0 %800
  %v803 = vmul.f32 %v796, %v801
  %805 = vrot.lane.b32.xlu0 %v803, 32
  %v806 = vpop.permute.xlu0 %805
  %v808 = vadd.f32 %v798, %v806
  %v809 = vtanh.pop %v808
  %811 = vrot.lane.b32.xlu0 %v809, 64
  %v812 = vpop.permute.xlu0 %811
  %v814 = vmul.f32 %v796, %v812
  %816 = vrot.lane.b32.xlu0 %v814, 32
  %v817 = vpop.permute.xlu0 %816
  %s819 = scalar_lea.vmem %s4, 6
  %820 = vst.msk [vmem:[%s819] sm:$0x3] %vm184, %v817
  %s821 = scalar_lea.vmem %s44, 8
  %v822 = vld [vmem:[%s821] sm:$0x3]
  %v823 = vsel %vm77, %v712, 0
  %825 = vmatprep.subr.mxu0 0.0
  %826 = vmatpush1.msra.mxu0 %v68
  %827 = vmatprep.subr.mxu0 0.0
  %828 = vmatpush1.msra.mxu0 %v69
  %829 = vmatprep.subr.mxu0 0.0
  %830 = vmatpush1.msra.mxu0 %v70
  %831 = vmatprep.subr.mxu0 0.0
  %832 = vmatpush1.msra.mxu0 %v71
  %833 = vmatprep.subr.mxu0 0.0
  %834 = vmatpush1.msra.mxu0 0.0
  %835 = vmatprep.subr.mxu0 0.0
  %836 = vmatpush1.msra.mxu0 0.0
  %837 = vmatprep.subr.mxu0 0.0
  %838 = vmatpush1.msra.mxu0 0.0
  %839 = vmatprep.subr.mxu0 0.0
  %840 = vmatpush1.msra.mxu0 0.0
  %841 = vmatprep.subr.mxu0 0.0
  %842 = vmatpush1.msra.mxu0 0.0
  %843 = vmatprep.subr.mxu0 0.0
  %844 = vmatpush1.msra.mxu0 0.0
  %845 = vmatprep.subr.mxu0 0.0
  %846 = vmatpush1.msra.mxu0 0.0
  %847 = vmatprep.subr.mxu0 0.0
  %848 = vmatpush1.msra.mxu0 0.0
  %849 = vmatprep.subr.mxu0 0.0
  %850 = vmatpush1.msra.mxu0 0.0
  %851 = vmatprep.subr.mxu0 0.0
  %852 = vmatpush1.msra.mxu0 0.0
  %853 = vmatprep.subr.mxu0 0.0
  %854 = vmatpush1.msra.mxu0 0.0
  %855 = vmatprep.subr.mxu0 0.0
  %856 = vmatpush1.msra.mxu0 0.0
  %857 = vmatprep.subr.mxu0 0.0
  %858 = vmatpush1.msra.mxu0 0.0
  %859 = vmatprep.subr.mxu0 0.0
  %860 = vmatpush1.msra.mxu0 0.0
  %861 = vmatprep.subr.mxu0 0.0
  %862 = vmatpush1.msra.mxu0 0.0
  %863 = vmatprep.subr.mxu0 0.0
  %864 = vmatpush1.msra.mxu0 0.0
  %865 = vmatprep.subr.mxu0 0.0
  %866 = vmatpush1.msra.mxu0 0.0
  %867 = vmatprep.subr.mxu0 0.0
  %868 = vmatpush1.msra.mxu0 0.0
  %869 = vmatprep.subr.mxu0 0.0
  %870 = vmatpush1.msra.mxu0 0.0
  %871 = vmatprep.subr.mxu0 0.0
  %872 = vmatpush1.msra.mxu0 0.0
  %873 = vmatprep.subr.mxu0 0.0
  %874 = vmatpush1.msra.mxu0 0.0
  %875 = vmatprep.subr.mxu0 0.0
  %876 = vmatpush1.msra.mxu0 0.0
  %877 = vmatprep.subr.mxu0 0.0
  %878 = vmatpush1.msra.mxu0 0.0
  %879 = vmatprep.subr.mxu0 0.0
  %880 = vmatpush1.msra.mxu0 0.0
  %881 = vmatprep.subr.mxu0 0.0
  %882 = vmatpush1.msra.mxu0 0.0
  %883 = vmatprep.subr.mxu0 0.0
  %884 = vmatpush1.msra.mxu0 0.0
  %885 = vmatprep.subr.mxu0 0.0
  %886 = vmatpush1.msra.mxu0 0.0
  %887 = vmatprep.subr.mxu0 0.0
  %888 = vmatpush1.msra.mxu0 0.0
  %889 = vmatprep.mubr.f32.mxu0 0.0
  %890 = vmatmul.mubr.f32.gmra.mrb[0].mxu0 %v823
  %v891 = vpop.f32.mrb[0].mxu0
  %v892 = vadd.f32 0.0, %v891
  %v893 = vpop.f32.mrb[0].mxu0
  %894 = vdwg.mxu0
  %v895 = vadd.f32 %v822, %v892
  %v896 = vxor.u32 %v895, 2147483648
  %v897 = vmul.f32 %v896, 1.442695
  %v898 = vpow.pop %v897
  %v899 = vadd.f32 %v898, 1.0
  %v900 = vrcp.pop %v899
  %v901 = vmul.f32 1.0, %v900
  %v902 = vtanh.pop %v895
  %v903 = vmul.f32 %v901, %v703
  %905 = vrot.lane.b32.xlu0 %v902, 64
  %v906 = vpop.permute.xlu0 %905
  %v908 = vmul.f32 %v901, %v906
  %910 = vrot.lane.b32.xlu0 %v908, 32
  %v911 = vpop.permute.xlu0 %910
  %v913 = vadd.f32 %v903, %v911
  %v914 = vtanh.pop %v913
  %916 = vrot.lane.b32.xlu0 %v914, 64
  %v917 = vpop.permute.xlu0 %916
  %v919 = vmul.f32 %v901, %v917
  %921 = vrot.lane.b32.xlu0 %v919, 32
  %v922 = vpop.permute.xlu0 %921
  %s924 = scalar_lea.vmem %s52, 8
  %925 = vst.msk [vmem:[%s924] sm:$0x3] %vm184, %v922
  %s926 = scalar_lea.vmem %s0, 8
  %v927 = vld [vmem:[%s926] sm:$0x3]
  %v928 = vsel %vm77, %v817, 0
  %930 = vmatprep.subr.mxu0 0.0
  %931 = vmatpush1.msra.mxu0 %v64
  %932 = vmatprep.subr.mxu0 0.0
  %933 = vmatpush1.msra.mxu0 %v65
  %934 = vmatprep.subr.mxu0 0.0
  %935 = vmatpush1.msra.mxu0 %v66
  %936 = vmatprep.subr.mxu0 0.0
  %937 = vmatpush1.msra.mxu0 %v67
  %938 = vmatprep.subr.mxu0 0.0
  %939 = vmatpush1.msra.mxu0 0.0
  %940 = vmatprep.subr.mxu0 0.0
  %941 = vmatpush1.msra.mxu0 0.0
  %942 = vmatprep.subr.mxu0 0.0
  %943 = vmatpush1.msra.mxu0 0.0
  %944 = vmatprep.subr.mxu0 0.0
  %945 = vmatpush1.msra.mxu0 0.0
  %946 = vmatprep.subr.mxu0 0.0
  %947 = vmatpush1.msra.mxu0 0.0
  %948 = vmatprep.subr.mxu0 0.0
  %949 = vmatpush1.msra.mxu0 0.0
  %950 = vmatprep.subr.mxu0 0.0
  %951 = vmatpush1.msra.mxu0 0.0
  %952 = vmatprep.subr.mxu0 0.0
  %953 = vmatpush1.msra.mxu0 0.0
  %954 = vmatprep.subr.mxu0 0.0
  %955 = vmatpush1.msra.mxu0 0.0
  %956 = vmatprep.subr.mxu0 0.0
  %957 = vmatpush1.msra.mxu0 0.0
  %958 = vmatprep.subr.mxu0 0.0
  %959 = vmatpush1.msra.mxu0 0.0
  %960 = vmatprep.subr.mxu0 0.0
  %961 = vmatpush1.msra.mxu0 0.0
  %962 = vmatprep.subr.mxu0 0.0
  %963 = vmatpush1.msra.mxu0 0.0
  %964 = vmatprep.subr.mxu0 0.0
  %965 = vmatpush1.msra.mxu0 0.0
  %966 = vmatprep.subr.mxu0 0.0
  %967 = vmatpush1.msra.mxu0 0.0
  %968 = vmatprep.subr.mxu0 0.0
  %969 = vmatpush1.msra.mxu0 0.0
  %970 = vmatprep.subr.mxu0 0.0
  %971 = vmatpush1.msra.mxu0 0.0
  %972 = vmatprep.subr.mxu0 0.0
  %973 = vmatpush1.msra.mxu0 0.0
  %974 = vmatprep.subr.mxu0 0.0
  %975 = vmatpush1.msra.mxu0 0.0
  %976 = vmatprep.subr.mxu0 0.0
  %977 = vmatpush1.msra.mxu0 0.0
  %978 = vmatprep.subr.mxu0 0.0
  %979 = vmatpush1.msra.mxu0 0.0
  %980 = vmatprep.subr.mxu0 0.0
  %981 = vmatpush1.msra.mxu0 0.0
  %982 = vmatprep.subr.mxu0 0.0
  %983 = vmatpush1.msra.mxu0 0.0
  %984 = vmatprep.subr.mxu0 0.0
  %985 = vmatpush1.msra.mxu0 0.0
  %986 = vmatprep.subr.mxu0 0.0
  %987 = vmatpush1.msra.mxu0 0.0
  %988 = vmatprep.subr.mxu0 0.0
  %989 = vmatpush1.msra.mxu0 0.0
  %990 = vmatprep.subr.mxu0 0.0
  %991 = vmatpush1.msra.mxu0 0.0
  %992 = vmatprep.subr.mxu0 0.0
  %993 = vmatpush1.msra.mxu0 0.0
  %994 = vmatprep.mubr.f32.mxu0 0.0
  %995 = vmatmul.mubr.f32.gmra.mrb[0].mxu0 %v928
  %v996 = vpop.f32.mrb[0].mxu0
  %v997 = vadd.f32 0.0, %v996
  %v998 = vpop.f32.mrb[0].mxu0
  %999 = vdwg.mxu0
  %v1000 = vadd.f32 %v927, %v997
  %v1001 = vxor.u32 %v1000, 2147483648
  %v1002 = vmul.f32 %v1001, 1.442695
  %v1003 = vpow.pop %v1002
  %v1004 = vadd.f32 %v1003, 1.0
  %v1005 = vrcp.pop %v1004
  %v1006 = vmul.f32 1.0, %v1005
  %v1007 = vtanh.pop %v1000
  %v1008 = vmul.f32 %v1006, %v808
  %1010 = vrot.lane.b32.xlu0 %v1007, 64
  %v1011 = vpop.permute.xlu0 %1010
  %v1013 = vmul.f32 %v1006, %v1011
  %1015 = vrot.lane.b32.xlu0 %v1013, 32
  %v1016 = vpop.permute.xlu0 %1015
  %v1018 = vadd.f32 %v1008, %v1016
  %v1019 = vtanh.pop %v1018
  %1021 = vrot.lane.b32.xlu0 %v1019, 64
  %v1022 = vpop.permute.xlu0 %1021
  %v1024 = vmul.f32 %v1006, %v1022
  %1026 = vrot.lane.b32.xlu0 %v1024, 32
  %v1027 = vpop.permute.xlu0 %1026
  %s1029 = scalar_lea.vmem %s4, 8
  %1030 = vst.msk [vmem:[%s1029] sm:$0x3] %vm184, %v1027
  %s1031 = scalar_lea.vmem %s44, 6
  %v1032 = vld [vmem:[%s1031] sm:$0x3]
  %v1033 = vsel %vm77, %v922, 0
  %1035 = vmatprep.subr.mxu0 0.0
  %1036 = vmatpush1.msra.mxu0 %v68
  %1037 = vmatprep.subr.mxu0 0.0
  %1038 = vmatpush1.msra.mxu0 %v69
  %1039 = vmatprep.subr.mxu0 0.0
  %1040 = vmatpush1.msra.mxu0 %v70
  %1041 = vmatprep.subr.mxu0 0.0
  %1042 = vmatpush1.msra.mxu0 %v71
  %1043 = vmatprep.subr.mxu0 0.0
  %1044 = vmatpush1.msra.mxu0 0.0
  %1045 = vmatprep.subr.mxu0 0.0
  %1046 = vmatpush1.msra.mxu0 0.0
  %1047 = vmatprep.subr.mxu0 0.0
  %1048 = vmatpush1.msra.mxu0 0.0
  %1049 = vmatprep.subr.mxu0 0.0
  %1050 = vmatpush1.msra.mxu0 0.0
  %1051 = vmatprep.subr.mxu0 0.0
  %1052 = vmatpush1.msra.mxu0 0.0
  %1053 = vmatprep.subr.mxu0 0.0
  %1054 = vmatpush1.msra.mxu0 0.0
  %1055 = vmatprep.subr.mxu0 0.0
  %1056 = vmatpush1.msra.mxu0 0.0
  %1057 = vmatprep.subr.mxu0 0.0
  %1058 = vmatpush1.msra.mxu0 0.0
  %1059 = vmatprep.subr.mxu0 0.0
  %1060 = vmatpush1.msra.mxu0 0.0
  %1061 = vmatprep.subr.mxu0 0.0
  %1062 = vmatpush1.msra.mxu0 0.0
  %1063 = vmatprep.subr.mxu0 0.0
  %1064 = vmatpush1.msra.mxu0 0.0
  %1065 = vmatprep.subr.mxu0 0.0
  %1066 = vmatpush1.msra.mxu0 0.0
  %1067 = vmatprep.subr.mxu0 0.0
  %1068 = vmatpush1.msra.mxu0 0.0
  %1069 = vmatprep.subr.mxu0 0.0
  %1070 = vmatpush1.msra.mxu0 0.0
  %1071 = vmatprep.subr.mxu0 0.0
  %1072 = vmatpush1.msra.mxu0 0.0
  %1073 = vmatprep.subr.mxu0 0.0
  %1074 = vmatpush1.msra.mxu0 0.0
  %1075 = vmatprep.subr.mxu0 0.0
  %1076 = vmatpush1.msra.mxu0 0.0
  %1077 = vmatprep.subr.mxu0 0.0
  %1078 = vmatpush1.msra.mxu0 0.0
  %1079 = vmatprep.subr.mxu0 0.0
  %1080 = vmatpush1.msra.mxu0 0.0
  %1081 = vmatprep.subr.mxu0 0.0
  %1082 = vmatpush1.msra.mxu0 0.0
  %1083 = vmatprep.subr.mxu0 0.0
  %1084 = vmatpush1.msra.mxu0 0.0
  %1085 = vmatprep.subr.mxu0 0.0
  %1086 = vmatpush1.msra.mxu0 0.0
  %1087 = vmatprep.subr.mxu0 0.0
  %1088 = vmatpush1.msra.mxu0 0.0
  %1089 = vmatprep.subr.mxu0 0.0
  %1090 = vmatpush1.msra.mxu0 0.0
  %1091 = vmatprep.subr.mxu0 0.0
  %1092 = vmatpush1.msra.mxu0 0.0
  %1093 = vmatprep.subr.mxu0 0.0
  %1094 = vmatpush1.msra.mxu0 0.0
  %1095 = vmatprep.subr.mxu0 0.0
  %1096 = vmatpush1.msra.mxu0 0.0
  %1097 = vmatprep.subr.mxu0 0.0
  %1098 = vmatpush1.msra.mxu0 0.0
  %1099 = vmatprep.mubr.f32.mxu0 0.0
  %1100 = vmatmul.mubr.f32.gmra.mrb[0].mxu0 %v1033
  %v1101 = vpop.f32.mrb[0].mxu0
  %v1102 = vadd.f32 0.0, %v1101
  %v1103 = vpop.f32.mrb[0].mxu0
  %1104 = vdwg.mxu0
  %v1105 = vadd.f32 %v1032, %v1102
  %v1106 = vxor.u32 %v1105, 2147483648
  %v1107 = vmul.f32 %v1106, 1.442695
  %v1108 = vpow.pop %v1107
  %v1109 = vadd.f32 %v1108, 1.0
  %v1110 = vrcp.pop %v1109
  %v1111 = vmul.f32 1.0, %v1110
  %v1112 = vtanh.pop %v1105
  %v1113 = vmul.f32 %v1111, %v913
  %1115 = vrot.lane.b32.xlu0 %v1112, 64
  %v1116 = vpop.permute.xlu0 %1115
  %v1118 = vmul.f32 %v1111, %v1116
  %1120 = vrot.lane.b32.xlu0 %v1118, 32
  %v1121 = vpop.permute.xlu0 %1120
  %v1123 = vadd.f32 %v1113, %v1121
  %v1124 = vtanh.pop %v1123
  %1126 = vrot.lane.b32.xlu0 %v1124, 64
  %v1127 = vpop.permute.xlu0 %1126
  %v1129 = vmul.f32 %v1111, %v1127
  %1131 = vrot.lane.b32.xlu0 %v1129, 32
  %v1132 = vpop.permute.xlu0 %1131
  %s1134 = scalar_lea.vmem %s52, 6
  %1135 = vst.msk [vmem:[%s1134] sm:$0x3] %vm184, %v1132
  %s1136 = scalar_lea.vmem %s0, 10
  %v1137 = vld [vmem:[%s1136] sm:$0x3]
  %v1138 = vsel %vm77, %v1027, 0
  %1140 = vmatprep.subr.mxu0 0.0
  %1141 = vmatpush1.msra.mxu0 %v64
  %1142 = vmatprep.subr.mxu0 0.0
  %1143 = vmatpush1.msra.mxu0 %v65
  %1144 = vmatprep.subr.mxu0 0.0
  %1145 = vmatpush1.msra.mxu0 %v66
  %1146 = vmatprep.subr.mxu0 0.0
  %1147 = vmatpush1.msra.mxu0 %v67
  %1148 = vmatprep.subr.mxu0 0.0
  %1149 = vmatpush1.msra.mxu0 0.0
  %1150 = vmatprep.subr.mxu0 0.0
  %1151 = vmatpush1.msra.mxu0 0.0
  %1152 = vmatprep.subr.mxu0 0.0
  %1153 = vmatpush1.msra.mxu0 0.0
  %1154 = vmatprep.subr.mxu0 0.0
  %1155 = vmatpush1.msra.mxu0 0.0
  %1156 = vmatprep.subr.mxu0 0.0
  %1157 = vmatpush1.msra.mxu0 0.0
  %1158 = vmatprep.subr.mxu0 0.0
  %1159 = vmatpush1.msra.mxu0 0.0
  %1160 = vmatprep.subr.mxu0 0.0
  %1161 = vmatpush1.msra.mxu0 0.0
  %1162 = vmatprep.subr.mxu0 0.0
  %1163 = vmatpush1.msra.mxu0 0.0
  %1164 = vmatprep.subr.mxu0 0.0
  %1165 = vmatpush1.msra.mxu0 0.0
  %1166 = vmatprep.subr.mxu0 0.0
  %1167 = vmatpush1.msra.mxu0 0.0
  %1168 = vmatprep.subr.mxu0 0.0
  %1169 = vmatpush1.msra.mxu0 0.0
  %1170 = vmatprep.subr.mxu0 0.0
  %1171 = vmatpush1.msra.mxu0 0.0
  %1172 = vmatprep.subr.mxu0 0.0
  %1173 = vmatpush1.msra.mxu0 0.0
  %1174 = vmatprep.subr.mxu0 0.0
  %1175 = vmatpush1.msra.mxu0 0.0
  %1176 = vmatprep.subr.mxu0 0.0
  %1177 = vmatpush1.msra.mxu0 0.0
  %1178 = vmatprep.subr.mxu0 0.0
  %1179 = vmatpush1.msra.mxu0 0.0
  %1180 = vmatprep.subr.mxu0 0.0
  %1181 = vmatpush1.msra.mxu0 0.0
  %1182 = vmatprep.subr.mxu0 0.0
  %1183 = vmatpush1.msra.mxu0 0.0
  %1184 = vmatprep.subr.mxu0 0.0
  %1185 = vmatpush1.msra.mxu0 0.0
  %1186 = vmatprep.subr.mxu0 0.0
  %1187 = vmatpush1.msra.mxu0 0.0
  %1188 = vmatprep.subr.mxu0 0.0
  %1189 = vmatpush1.msra.mxu0 0.0
  %1190 = vmatprep.subr.mxu0 0.0
  %1191 = vmatpush1.msra.mxu0 0.0
  %1192 = vmatprep.subr.mxu0 0.0
  %1193 = vmatpush1.msra.mxu0 0.0
  %1194 = vmatprep.subr.mxu0 0.0
  %1195 = vmatpush1.msra.mxu0 0.0
  %1196 = vmatprep.subr.mxu0 0.0
  %1197 = vmatpush1.msra.mxu0 0.0
  %1198 = vmatprep.subr.mxu0 0.0
  %1199 = vmatpush1.msra.mxu0 0.0
  %1200 = vmatprep.subr.mxu0 0.0
  %1201 = vmatpush1.msra.mxu0 0.0
  %1202 = vmatprep.subr.mxu0 0.0
  %1203 = vmatpush1.msra.mxu0 0.0
  %1204 = vmatprep.mubr.f32.mxu0 0.0
  %1205 = vmatmul.mubr.f32.gmra.mrb[0].mxu0 %v1138
  %v1206 = vpop.f32.mrb[0].mxu0
  %v1207 = vadd.f32 0.0, %v1206
  %v1208 = vpop.f32.mrb[0].mxu0
  %1209 = vdwg.mxu0
  %v1210 = vadd.f32 %v1137, %v1207
  %v1211 = vxor.u32 %v1210, 2147483648
  %v1212 = vmul.f32 %v1211, 1.442695
  %v1213 = vpow.pop %v1212
  %v1214 = vadd.f32 %v1213, 1.0
  %v1215 = vrcp.pop %v1214
  %v1216 = vmul.f32 1.0, %v1215
  %v1217 = vtanh.pop %v1210
  %v1218 = vmul.f32 %v1216, %v1018
  %1220 = vrot.lane.b32.xlu0 %v1217, 64
  %v1221 = vpop.permute.xlu0 %1220
  %v1223 = vmul.f32 %v1216, %v1221
  %1225 = vrot.lane.b32.xlu0 %v1223, 32
  %v1226 = vpop.permute.xlu0 %1225
  %v1228 = vadd.f32 %v1218, %v1226
  %v1229 = vtanh.pop %v1228
  %1231 = vrot.lane.b32.xlu0 %v1229, 64
  %v1232 = vpop.permute.xlu0 %1231
  %v1234 = vmul.f32 %v1216, %v1232
  %1236 = vrot.lane.b32.xlu0 %v1234, 32
  %v1237 = vpop.permute.xlu0 %1236
  %s1239 = scalar_lea.vmem %s4, 10
  %1240 = vst.msk [vmem:[%s1239] sm:$0x3] %vm184, %v1237
  %s1241 = scalar_lea.vmem %s44, 4
  %v1242 = vld [vmem:[%s1241] sm:$0x3]
  %v1243 = vsel %vm77, %v1132, 0
  %1245 = vmatprep.subr.mxu0 0.0
  %1246 = vmatpush1.msra.mxu0 %v68
  %1247 = vmatprep.subr.mxu0 0.0
  %1248 = vmatpush1.msra.mxu0 %v69
  %1249 = vmatprep.subr.mxu0 0.0
  %1250 = vmatpush1.msra.mxu0 %v70
  %1251 = vmatprep.subr.mxu0 0.0
  %1252 = vmatpush1.msra.mxu0 %v71
  %1253 = vmatprep.subr.mxu0 0.0
  %1254 = vmatpush1.msra.mxu0 0.0
  %1255 = vmatprep.subr.mxu0 0.0
  %1256 = vmatpush1.msra.mxu0 0.0
  %1257 = vmatprep.subr.mxu0 0.0
  %1258 = vmatpush1.msra.mxu0 0.0
  %1259 = vmatprep.subr.mxu0 0.0
  %1260 = vmatpush1.msra.mxu0 0.0
  %1261 = vmatprep.subr.mxu0 0.0
  %1262 = vmatpush1.msra.mxu0 0.0
  %1263 = vmatprep.subr.mxu0 0.0
  %1264 = vmatpush1.msra.mxu0 0.0
  %1265 = vmatprep.subr.mxu0 0.0
  %1266 = vmatpush1.msra.mxu0 0.0
  %1267 = vmatprep.subr.mxu0 0.0
  %1268 = vmatpush1.msra.mxu0 0.0
  %1269 = vmatprep.subr.mxu0 0.0
  %1270 = vmatpush1.msra.mxu0 0.0
  %1271 = vmatprep.subr.mxu0 0.0
  %1272 = vmatpush1.msra.mxu0 0.0
  %1273 = vmatprep.subr.mxu0 0.0
  %1274 = vmatpush1.msra.mxu0 0.0
  %1275 = vmatprep.subr.mxu0 0.0
  %1276 = vmatpush1.msra.mxu0 0.0
  %1277 = vmatprep.subr.mxu0 0.0
  %1278 = vmatpush1.msra.mxu0 0.0
  %1279 = vmatprep.subr.mxu0 0.0
  %1280 = vmatpush1.msra.mxu0 0.0
  %1281 = vmatprep.subr.mxu0 0.0
  %1282 = vmatpush1.msra.mxu0 0.0
  %1283 = vmatprep.subr.mxu0 0.0
  %1284 = vmatpush1.msra.mxu0 0.0
  %1285 = vmatprep.subr.mxu0 0.0
  %1286 = vmatpush1.msra.mxu0 0.0
  %1287 = vmatprep.subr.mxu0 0.0
  %1288 = vmatpush1.msra.mxu0 0.0
  %1289 = vmatprep.subr.mxu0 0.0
  %1290 = vmatpush1.msra.mxu0 0.0
  %1291 = vmatprep.subr.mxu0 0.0
  %1292 = vmatpush1.msra.mxu0 0.0
  %1293 = vmatprep.subr.mxu0 0.0
  %1294 = vmatpush1.msra.mxu0 0.0
  %1295 = vmatprep.subr.mxu0 0.0
  %1296 = vmatpush1.msra.mxu0 0.0
  %1297 = vmatprep.subr.mxu0 0.0
  %1298 = vmatpush1.msra.mxu0 0.0
  %1299 = vmatprep.subr.mxu0 0.0
  %1300 = vmatpush1.msra.mxu0 0.0
  %1301 = vmatprep.subr.mxu0 0.0
  %1302 = vmatpush1.msra.mxu0 0.0
  %1303 = vmatprep.subr.mxu0 0.0
  %1304 = vmatpush1.msra.mxu0 0.0
  %1305 = vmatprep.subr.mxu0 0.0
  %1306 = vmatpush1.msra.mxu0 0.0
  %1307 = vmatprep.subr.mxu0 0.0
  %1308 = vmatpush1.msra.mxu0 0.0
  %1309 = vmatprep.mubr.f32.mxu0 0.0
  %1310 = vmatmul.mubr.f32.gmra.mrb[0].mxu0 %v1243
  %v1311 = vpop.f32.mrb[0].mxu0
  %v1312 = vadd.f32 0.0, %v1311
  %v1313 = vpop.f32.mrb[0].mxu0
  %1314 = vdwg.mxu0
  %v1315 = vadd.f32 %v1242, %v1312
  %v1316 = vxor.u32 %v1315, 2147483648
  %v1317 = vmul.f32 %v1316, 1.442695
  %v1318 = vpow.pop %v1317
  %v1319 = vadd.f32 %v1318, 1.0
  %v1320 = vrcp.pop %v1319
  %v1321 = vmul.f32 1.0, %v1320
  %v1322 = vtanh.pop %v1315
  %v1323 = vmul.f32 %v1321, %v1123
  %1325 = vrot.lane.b32.xlu0 %v1322, 64
  %v1326 = vpop.permute.xlu0 %1325
  %v1328 = vmul.f32 %v1321, %v1326
  %1330 = vrot.lane.b32.xlu0 %v1328, 32
  %v1331 = vpop.permute.xlu0 %1330
  %v1333 = vadd.f32 %v1323, %v1331
  %v1334 = vtanh.pop %v1333
  %1336 = vrot.lane.b32.xlu0 %v1334, 64
  %v1337 = vpop.permute.xlu0 %1336
  %v1339 = vmul.f32 %v1321, %v1337
  %1341 = vrot.lane.b32.xlu0 %v1339, 32
  %v1342 = vpop.permute.xlu0 %1341
  %s1344 = scalar_lea.vmem %s52, 4
  %1345 = vst.msk [vmem:[%s1344] sm:$0x3] %vm184, %v1342
  %s1346 = scalar_lea.vmem %s0, 12
  %v1347 = vld [vmem:[%s1346] sm:$0x3]
  %v1348 = vsel %vm77, %v1237, 0
  %1350 = vmatprep.subr.mxu0 0.0
  %1351 = vmatpush1.msra.mxu0 %v64
  %1352 = vmatprep.subr.mxu0 0.0
  %1353 = vmatpush1.msra.mxu0 %v65
  %1354 = vmatprep.subr.mxu0 0.0
  %1355 = vmatpush1.msra.mxu0 %v66
  %1356 = vmatprep.subr.mxu0 0.0
  %1357 = vmatpush1.msra.mxu0 %v67
  %1358 = vmatprep.subr.mxu0 0.0
  %1359 = vmatpush1.msra.mxu0 0.0
  %1360 = vmatprep.subr.mxu0 0.0
  %1361 = vmatpush1.msra.mxu0 0.0
  %1362 = vmatprep.subr.mxu0 0.0
  %1363 = vmatpush1.msra.mxu0 0.0
  %1364 = vmatprep.subr.mxu0 0.0
  %1365 = vmatpush1.msra.mxu0 0.0
  %1366 = vmatprep.subr.mxu0 0.0
  %1367 = vmatpush1.msra.mxu0 0.0
  %1368 = vmatprep.subr.mxu0 0.0
  %1369 = vmatpush1.msra.mxu0 0.0
  %1370 = vmatprep.subr.mxu0 0.0
  %1371 = vmatpush1.msra.mxu0 0.0
  %1372 = vmatprep.subr.mxu0 0.0
  %1373 = vmatpush1.msra.mxu0 0.0
  %1374 = vmatprep.subr.mxu0 0.0
  %1375 = vmatpush1.msra.mxu0 0.0
  %1376 = vmatprep.subr.mxu0 0.0
  %1377 = vmatpush1.msra.mxu0 0.0
  %1378 = vmatprep.subr.mxu0 0.0
  %1379 = vmatpush1.msra.mxu0 0.0
  %1380 = vmatprep.subr.mxu0 0.0
  %1381 = vmatpush1.msra.mxu0 0.0
  %1382 = vmatprep.subr.mxu0 0.0
  %1383 = vmatpush1.msra.mxu0 0.0
  %1384 = vmatprep.subr.mxu0 0.0
  %1385 = vmatpush1.msra.mxu0 0.0
  %1386 = vmatprep.subr.mxu0 0.0
  %1387 = vmatpush1.msra.mxu0 0.0
  %1388 = vmatprep.subr.mxu0 0.0
  %1389 = vmatpush1.msra.mxu0 0.0
  %1390 = vmatprep.subr.mxu0 0.0
  %1391 = vmatpush1.msra.mxu0 0.0
  %1392 = vmatprep.subr.mxu0 0.0
  %1393 = vmatpush1.msra.mxu0 0.0
  %1394 = vmatprep.subr.mxu0 0.0
  %1395 = vmatpush1.msra.mxu0 0.0
  %1396 = vmatprep.subr.mxu0 0.0
  %1397 = vmatpush1.msra.mxu0 0.0
  %1398 = vmatprep.subr.mxu0 0.0
  %1399 = vmatpush1.msra.mxu0 0.0
  %1400 = vmatprep.subr.mxu0 0.0
  %1401 = vmatpush1.msra.mxu0 0.0
  %1402 = vmatprep.subr.mxu0 0.0
  %1403 = vmatpush1.msra.mxu0 0.0
  %1404 = vmatprep.subr.mxu0 0.0
  %1405 = vmatpush1.msra.mxu0 0.0
  %1406 = vmatprep.subr.mxu0 0.0
  %1407 = vmatpush1.msra.mxu0 0.0
  %1408 = vmatprep.subr.mxu0 0.0
  %1409 = vmatpush1.msra.mxu0 0.0
  %1410 = vmatprep.subr.mxu0 0.0
  %1411 = vmatpush1.msra.mxu0 0.0
  %1412 = vmatprep.subr.mxu0 0.0
  %1413 = vmatpush1.msra.mxu0 0.0
  %1414 = vmatprep.mubr.f32.mxu0 0.0
  %1415 = vmatmul.mubr.f32.gmra.mrb[0].mxu0 %v1348
  %v1416 = vpop.f32.mrb[0].mxu0
  %v1417 = vadd.f32 0.0, %v1416
  %v1418 = vpop.f32.mrb[0].mxu0
  %1419 = vdwg.mxu0
  %v1420 = vadd.f32 %v1347, %v1417
  %v1421 = vxor.u32 %v1420, 2147483648
  %v1422 = vmul.f32 %v1421, 1.442695
  %v1423 = vpow.pop %v1422
  %v1424 = vadd.f32 %v1423, 1.0
  %v1425 = vrcp.pop %v1424
  %v1426 = vmul.f32 1.0, %v1425
  %v1427 = vtanh.pop %v1420
  %v1428 = vmul.f32 %v1426, %v1228
  %1430 = vrot.lane.b32.xlu0 %v1427, 64
  %v1431 = vpop.permute.xlu0 %1430
  %v1433 = vmul.f32 %v1426, %v1431
  %1435 = vrot.lane.b32.xlu0 %v1433, 32
  %v1436 = vpop.permute.xlu0 %1435
  %v1438 = vadd.f32 %v1428, %v1436
  %v1439 = vtanh.pop %v1438
  %1441 = vrot.lane.b32.xlu0 %v1439, 64
  %v1442 = vpop.permute.xlu0 %1441
  %v1444 = vmul.f32 %v1426, %v1442
  %1446 = vrot.lane.b32.xlu0 %v1444, 32
  %v1447 = vpop.permute.xlu0 %1446
  %s1449 = scalar_lea.vmem %s4, 12
  %1450 = vst.msk [vmem:[%s1449] sm:$0x3] %vm184, %v1447
  %s1451 = scalar_lea.vmem %s44, 2
  %v1452 = vld [vmem:[%s1451] sm:$0x3]
  %v1453 = vsel %vm77, %v1342, 0
  %1455 = vmatprep.subr.mxu0 0.0
  %1456 = vmatpush1.msra.mxu0 %v68
  %1457 = vmatprep.subr.mxu0 0.0
  %1458 = vmatpush1.msra.mxu0 %v69
  %1459 = vmatprep.subr.mxu0 0.0
  %1460 = vmatpush1.msra.mxu0 %v70
  %1461 = vmatprep.subr.mxu0 0.0
  %1462 = vmatpush1.msra.mxu0 %v71
  %1463 = vmatprep.subr.mxu0 0.0
  %1464 = vmatpush1.msra.mxu0 0.0
  %1465 = vmatprep.subr.mxu0 0.0
  %1466 = vmatpush1.msra.mxu0 0.0
  %1467 = vmatprep.subr.mxu0 0.0
  %1468 = vmatpush1.msra.mxu0 0.0
  %1469 = vmatprep.subr.mxu0 0.0
  %1470 = vmatpush1.msra.mxu0 0.0
  %1471 = vmatprep.subr.mxu0 0.0
  %1472 = vmatpush1.msra.mxu0 0.0
  %1473 = vmatprep.subr.mxu0 0.0
  %1474 = vmatpush1.msra.mxu0 0.0
  %1475 = vmatprep.subr.mxu0 0.0
  %1476 = vmatpush1.msra.mxu0 0.0
  %1477 = vmatprep.subr.mxu0 0.0
  %1478 = vmatpush1.msra.mxu0 0.0
  %1479 = vmatprep.subr.mxu0 0.0
  %1480 = vmatpush1.msra.mxu0 0.0
  %1481 = vmatprep.subr.mxu0 0.0
  %1482 = vmatpush1.msra.mxu0 0.0
  %1483 = vmatprep.subr.mxu0 0.0
  %1484 = vmatpush1.msra.mxu0 0.0
  %1485 = vmatprep.subr.mxu0 0.0
  %1486 = vmatpush1.msra.mxu0 0.0
  %1487 = vmatprep.subr.mxu0 0.0
  %1488 = vmatpush1.msra.mxu0 0.0
  %1489 = vmatprep.subr.mxu0 0.0
  %1490 = vmatpush1.msra.mxu0 0.0
  %1491 = vmatprep.subr.mxu0 0.0
  %1492 = vmatpush1.msra.mxu0 0.0
  %1493 = vmatprep.subr.mxu0 0.0
  %1494 = vmatpush1.msra.mxu0 0.0
  %1495 = vmatprep.subr.mxu0 0.0
  %1496 = vmatpush1.msra.mxu0 0.0
  %1497 = vmatprep.subr.mxu0 0.0
  %1498 = vmatpush1.msra.mxu0 0.0
  %1499 = vmatprep.subr.mxu0 0.0
  %1500 = vmatpush1.msra.mxu0 0.0
  %1501 = vmatprep.subr.mxu0 0.0
  %1502 = vmatpush1.msra.mxu0 0.0
  %1503 = vmatprep.subr.mxu0 0.0
  %1504 = vmatpush1.msra.mxu0 0.0
  %1505 = vmatprep.subr.mxu0 0.0
  %1506 = vmatpush1.msra.mxu0 0.0
  %1507 = vmatprep.subr.mxu0 0.0
  %1508 = vmatpush1.msra.mxu0 0.0
  %1509 = vmatprep.subr.mxu0 0.0
  %1510 = vmatpush1.msra.mxu0 0.0
  %1511 = vmatprep.subr.mxu0 0.0
  %1512 = vmatpush1.msra.mxu0 0.0
  %1513 = vmatprep.subr.mxu0 0.0
  %1514 = vmatpush1.msra.mxu0 0.0
  %1515 = vmatprep.subr.mxu0 0.0
  %1516 = vmatpush1.msra.mxu0 0.0
  %1517 = vmatprep.subr.mxu0 0.0
  %1518 = vmatpush1.msra.mxu0 0.0
  %1519 = vmatprep.mubr.f32.mxu0 0.0
  %1520 = vmatmul.mubr.f32.gmra.mrb[0].mxu0 %v1453
  %v1521 = vpop.f32.mrb[0].mxu0
  %v1522 = vadd.f32 0.0, %v1521
  %v1523 = vpop.f32.mrb[0].mxu0
  %1524 = vdwg.mxu0
  %v1525 = vadd.f32 %v1452, %v1522
  %v1526 = vxor.u32 %v1525, 2147483648
  %v1527 = vmul.f32 %v1526, 1.442695
  %v1528 = vpow.pop %v1527
  %v1529 = vadd.f32 %v1528, 1.0
  %v1530 = vrcp.pop %v1529
  %v1531 = vmul.f32 1.0, %v1530
  %v1532 = vtanh.pop %v1525
  %v1533 = vmul.f32 %v1531, %v1333
  %1535 = vrot.lane.b32.xlu0 %v1532, 64
  %v1536 = vpop.permute.xlu0 %1535
  %v1538 = vmul.f32 %v1531, %v1536
  %1540 = vrot.lane.b32.xlu0 %v1538, 32
  %v1541 = vpop.permute.xlu0 %1540
  %v1543 = vadd.f32 %v1533, %v1541
  %v1544 = vtanh.pop %v1543
  %1546 = vrot.lane.b32.xlu0 %v1544, 64
  %v1547 = vpop.permute.xlu0 %1546
  %v1549 = vmul.f32 %v1531, %v1547
  %1551 = vrot.lane.b32.xlu0 %v1549, 32
  %v1552 = vpop.permute.xlu0 %1551
  %s1554 = scalar_lea.vmem %s52, 2
  %1555 = vst.msk [vmem:[%s1554] sm:$0x3] %vm184, %v1552
  %s1556 = scalar_lea.vmem %s0, 14
  %v1557 = vld [vmem:[%s1556] sm:$0x3]
  %v1558 = vsel %vm77, %v1447, 0
  %1560 = vmatprep.subr.mxu0 0.0
  %1561 = vmatpush1.msra.mxu0 %v64
  %1562 = vmatprep.subr.mxu0 0.0
  %1563 = vmatpush1.msra.mxu0 %v65
  %1564 = vmatprep.subr.mxu0 0.0
  %1565 = vmatpush1.msra.mxu0 %v66
  %1566 = vmatprep.subr.mxu0 0.0
  %1567 = vmatpush1.msra.mxu0 %v67
  %1568 = vmatprep.subr.mxu0 0.0
  %1569 = vmatpush1.msra.mxu0 0.0
  %1570 = vmatprep.subr.mxu0 0.0
  %1571 = vmatpush1.msra.mxu0 0.0
  %1572 = vmatprep.subr.mxu0 0.0
  %1573 = vmatpush1.msra.mxu0 0.0
  %1574 = vmatprep.subr.mxu0 0.0
  %1575 = vmatpush1.msra.mxu0 0.0
  %1576 = vmatprep.subr.mxu0 0.0
  %1577 = vmatpush1.msra.mxu0 0.0
  %1578 = vmatprep.subr.mxu0 0.0
  %1579 = vmatpush1.msra.mxu0 0.0
  %1580 = vmatprep.subr.mxu0 0.0
  %1581 = vmatpush1.msra.mxu0 0.0
  %1582 = vmatprep.subr.mxu0 0.0
  %1583 = vmatpush1.msra.mxu0 0.0
  %1584 = vmatprep.subr.mxu0 0.0
  %1585 = vmatpush1.msra.mxu0 0.0
  %1586 = vmatprep.subr.mxu0 0.0
  %1587 = vmatpush1.msra.mxu0 0.0
  %1588 = vmatprep.subr.mxu0 0.0
  %1589 = vmatpush1.msra.mxu0 0.0
  %1590 = vmatprep.subr.mxu0 0.0
  %1591 = vmatpush1.msra.mxu0 0.0
  %1592 = vmatprep.subr.mxu0 0.0
  %1593 = vmatpush1.msra.mxu0 0.0
  %1594 = vmatprep.subr.mxu0 0.0
  %1595 = vmatpush1.msra.mxu0 0.0
  %1596 = vmatprep.subr.mxu0 0.0
  %1597 = vmatpush1.msra.mxu0 0.0
  %1598 = vmatprep.subr.mxu0 0.0
  %1599 = vmatpush1.msra.mxu0 0.0
  %1600 = vmatprep.subr.mxu0 0.0
  %1601 = vmatpush1.msra.mxu0 0.0
  %1602 = vmatprep.subr.mxu0 0.0
  %1603 = vmatpush1.msra.mxu0 0.0
  %1604 = vmatprep.subr.mxu0 0.0
  %1605 = vmatpush1.msra.mxu0 0.0
  %1606 = vmatprep.subr.mxu0 0.0
  %1607 = vmatpush1.msra.mxu0 0.0
  %1608 = vmatprep.subr.mxu0 0.0
  %1609 = vmatpush1.msra.mxu0 0.0
  %1610 = vmatprep.subr.mxu0 0.0
  %1611 = vmatpush1.msra.mxu0 0.0
  %1612 = vmatprep.subr.mxu0 0.0
  %1613 = vmatpush1.msra.mxu0 0.0
  %1614 = vmatprep.subr.mxu0 0.0
  %1615 = vmatpush1.msra.mxu0 0.0
  %1616 = vmatprep.subr.mxu0 0.0
  %1617 = vmatpush1.msra.mxu0 0.0
  %1618 = vmatprep.subr.mxu0 0.0
  %1619 = vmatpush1.msra.mxu0 0.0
  %1620 = vmatprep.subr.mxu0 0.0
  %1621 = vmatpush1.msra.mxu0 0.0
  %1622 = vmatprep.subr.mxu0 0.0
  %1623 = vmatpush1.msra.mxu0 0.0
  %1624 = vmatprep.mubr.f32.mxu0 0.0
  %1625 = vmatmul.mubr.f32.gmra.mrb[0].mxu0 %v1558
  %v1626 = vpop.f32.mrb[0].mxu0
  %v1627 = vadd.f32 0.0, %v1626
  %v1628 = vpop.f32.mrb[0].mxu0
  %1629 = vdwg.mxu0
  %v1630 = vadd.f32 %v1557, %v1627
  %v1631 = vxor.u32 %v1630, 2147483648
  %v1632 = vmul.f32 %v1631, 1.442695
  %v1633 = vpow.pop %v1632
  %v1634 = vadd.f32 %v1633, 1.0
  %v1635 = vrcp.pop %v1634
  %v1636 = vmul.f32 1.0, %v1635
  %v1637 = vtanh.pop %v1630
  %v1638 = vmul.f32 %v1636, %v1438
  %1640 = vrot.lane.b32.xlu0 %v1637, 64
  %v1641 = vpop.permute.xlu0 %1640
  %v1643 = vmul.f32 %v1636, %v1641
  %1645 = vrot.lane.b32.xlu0 %v1643, 32
  %v1646 = vpop.permute.xlu0 %1645
  %v1648 = vadd.f32 %v1638, %v1646
  %v1649 = vtanh.pop %v1648
  %1651 = vrot.lane.b32.xlu0 %v1649, 64
  %v1652 = vpop.permute.xlu0 %1651
  %v1654 = vmul.f32 %v1636, %v1652
  %1656 = vrot.lane.b32.xlu0 %v1654, 32
  %v1657 = vpop.permute.xlu0 %1656
  %s1659 = scalar_lea.vmem %s4, 14
  %1660 = vst.msk [vmem:[%s1659] sm:$0x3] %vm184, %v1657
  %v1661 = vld [vmem:[%s44] sm:$0x3]
  %v1662 = vsel %vm77, %v1552, 0
  %1664 = vmatprep.subr.mxu0 0.0
  %1665 = vmatpush1.msra.mxu0 %v68
  %1666 = vmatprep.subr.mxu0 0.0
  %1667 = vmatpush1.msra.mxu0 %v69
  %1668 = vmatprep.subr.mxu0 0.0
  %1669 = vmatpush1.msra.mxu0 %v70
  %1670 = vmatprep.subr.mxu0 0.0
  %1671 = vmatpush1.msra.mxu0 %v71
  %1672 = vmatprep.subr.mxu0 0.0
  %1673 = vmatpush1.msra.mxu0 0.0
  %1674 = vmatprep.subr.mxu0 0.0
  %1675 = vmatpush1.msra.mxu0 0.0
  %1676 = vmatprep.subr.mxu0 0.0
  %1677 = vmatpush1.msra.mxu0 0.0
  %1678 = vmatprep.subr.mxu0 0.0
  %1679 = vmatpush1.msra.mxu0 0.0
  %1680 = vmatprep.subr.mxu0 0.0
  %1681 = vmatpush1.msra.mxu0 0.0
  %1682 = vmatprep.subr.mxu0 0.0
  %1683 = vmatpush1.msra.mxu0 0.0
  %1684 = vmatprep.subr.mxu0 0.0
  %1685 = vmatpush1.msra.mxu0 0.0
  %1686 = vmatprep.subr.mxu0 0.0
  %1687 = vmatpush1.msra.mxu0 0.0
  %1688 = vmatprep.subr.mxu0 0.0
  %1689 = vmatpush1.msra.mxu0 0.0
  %1690 = vmatprep.subr.mxu0 0.0
  %1691 = vmatpush1.msra.mxu0 0.0
  %1692 = vmatprep.subr.mxu0 0.0
  %1693 = vmatpush1.msra.mxu0 0.0
  %1694 = vmatprep.subr.mxu0 0.0
  %1695 = vmatpush1.msra.mxu0 0.0
  %1696 = vmatprep.subr.mxu0 0.0
  %1697 = vmatpush1.msra.mxu0 0.0
  %1698 = vmatprep.subr.mxu0 0.0
  %1699 = vmatpush1.msra.mxu0 0.0
  %1700 = vmatprep.subr.mxu0 0.0
  %1701 = vmatpush1.msra.mxu0 0.0
  %1702 = vmatprep.subr.mxu0 0.0
  %1703 = vmatpush1.msra.mxu0 0.0
  %1704 = vmatprep.subr.mxu0 0.0
  %1705 = vmatpush1.msra.mxu0 0.0
  %1706 = vmatprep.subr.mxu0 0.0
  %1707 = vmatpush1.msra.mxu0 0.0
  %1708 = vmatprep.subr.mxu0 0.0
  %1709 = vmatpush1.msra.mxu0 0.0
  %1710 = vmatprep.subr.mxu0 0.0
  %1711 = vmatpush1.msra.mxu0 0.0
  %1712 = vmatprep.subr.mxu0 0.0
  %1713 = vmatpush1.msra.mxu0 0.0
  %1714 = vmatprep.subr.mxu0 0.0
  %1715 = vmatpush1.msra.mxu0 0.0
  %1716 = vmatprep.subr.mxu0 0.0
  %1717 = vmatpush1.msra.mxu0 0.0
  %1718 = vmatprep.subr.mxu0 0.0
  %1719 = vmatpush1.msra.mxu0 0.0
  %1720 = vmatprep.subr.mxu0 0.0
  %1721 = vmatpush1.msra.mxu0 0.0
  %1722 = vmatprep.subr.mxu0 0.0
  %1723 = vmatpush1.msra.mxu0 0.0
  %1724 = vmatprep.subr.mxu0 0.0
  %1725 = vmatpush1.msra.mxu0 0.0
  %1726 = vmatprep.subr.mxu0 0.0
  %1727 = vmatpush1.msra.mxu0 0.0
  %1728 = vmatprep.mubr.f32.mxu0 0.0
  %1729 = vmatmul.mubr.f32.gmra.mrb[0].mxu0 %v1662
  %v1730 = vpop.f32.mrb[0].mxu0
  %v1731 = vadd.f32 0.0, %v1730
  %v1732 = vpop.f32.mrb[0].mxu0
  %1733 = vdwg.mxu0
  %v1734 = vadd.f32 %v1661, %v1731
  %v1735 = vxor.u32 %v1734, 2147483648
  %v1736 = vmul.f32 %v1735, 1.442695
  %v1737 = vpow.pop %v1736
  %v1738 = vadd.f32 %v1737, 1.0
  %v1739 = vrcp.pop %v1738
  %v1740 = vmul.f32 1.0, %v1739
  %v1741 = vtanh.pop %v1734
  %v1742 = vmul.f32 %v1740, %v1543
  %1744 = vrot.lane.b32.xlu0 %v1741, 64
  %v1745 = vpop.permute.xlu0 %1744
  %v1747 = vmul.f32 %v1740, %v1745
  %1749 = vrot.lane.b32.xlu0 %v1747, 32
  %v1750 = vpop.permute.xlu0 %1749
  %v1752 = vadd.f32 %v1742, %v1750
  %v1753 = vtanh.pop %v1752
  %1755 = vrot.lane.b32.xlu0 %v1753, 64
  %v1756 = vpop.permute.xlu0 %1755
  %v1758 = vmul.f32 %v1740, %v1756
  %1760 = vrot.lane.b32.xlu0 %v1758, 32
  %v1761 = vpop.permute.xlu0 %1760
  %1763 = vst.msk [vmem:[%s52] sm:$0x3] %vm184, %v1761
  %1764 = vst.msk [vmem:[#allocation2] sm:$0x3] %vm184, %v1657
  %1766 = vrot.lane.b32.xlu0 %v1648, 96
  %v1767 = vpop.permute.xlu0 %1766
  %1769 = vst.msk [vmem:[#allocation3] sm:$0x3] %vm184, %v1767
  %1770 = vst.msk [vmem:[#allocation4] sm:$0x3] %vm184, %v1761
  %1772 = vrot.lane.b32.xlu0 %v1752, 96
  %v1773 = vpop.permute.xlu0 %1772
  %1775 = vst.msk [vmem:[#allocation5] sm:$0x3] %vm184, %v1773
  %s1776 = ssub.s32 0, 0
  %s1777 = smul.u32 8, %s1776
  %p1778 = scmp.lt.s32.totalorder %s1777, 7
  %s1779 = scalar_select %p1778, %s1777, 7
  %s1780 = smul.addr %s1779, 2
  %s1781 = scalar_lea.vmem %s5, %s1780
  // Predicated region
  $region22: #{bilstm_forward.5} parent=0 // pred_check
    _
  $region23: #{bilstm_forward.5} parent=0 // pred_check_branch
    %1783 = sbr.rel (0) target = $region25
  $region24: #{bilstm_forward.5} parent=0 // pred_region
    _
  $region25: #{bilstm_forward.5} parent=0 // pred_fallthru
    _
  // Predicated region
  $region26: #{bilstm_forward.5} parent=0 // pred_check
    _
  $region27: #{bilstm_forward.5} parent=0 // pred_check_branch
    %1785 = sbr.rel (0) target = $region29
  $region28: #{bilstm_forward.5} parent=0 // pred_region
    %s1786 = ssub.s32 0, 0
    %s1787 = smul.u32 8, %s1786
  $region29: #{bilstm_forward.5} parent=0 // pred_fallthru
    _
  // Predicated region
  $region30: #{bilstm_forward.5} parent=0 // pred_check
    _
  $region31: #{bilstm_forward.5} parent=0 // pred_check_branch
    %1789 = sbr.rel (0) target = $region33
  $region32: #{bilstm_forward.5} parent=0 // pred_region
    _
  $region33: #{bilstm_forward.5} parent=0 // pred_fallthru
    _
  // Predicated region
  $region34: #{bilstm_forward.5} parent=0 // pred_check
    _
  $region35: #{bilstm_forward.5} parent=0 // pred_check_branch
    %1791 = sbr.rel (0) target = $region37
  $region36: #{bilstm_forward.5} parent=0 // pred_region
    %s1792 = ssub.s32 0, 0
    %s1793 = smul.u32 8, %s1792
    %p1794 = scmp.lt.s32.totalorder %s1793, 7
    %s1795 = scalar_select %p1794, %s1793, 7
    %s1796 = smul.addr %s1795, 2
    %s1797 = scalar_lea.vmem %s5, %s1796
  $region37: #{bilstm_forward.5} parent=0 // pred_fallthru
    _

// kernel: bilstm_forward.7
$region0: #{bilstm_forward.7}
  #allocation0 [shape = 'u32[]', space=smem, size = 0x4, offset = 0x4, fixed_abs, tag = 'smem constant byte address 0x4 - core index']
  #allocation1 [shape = 'u32[144,128]{1,0:T(1,128)}', space=vmem, size = 0x12000, scoped, tag = 'internal scratch']
  #allocation2 [shape = 'f32[2,32]{1,0:T(2,128)}', space=vmem, size = 0x400, scoped, tag = 'scratch operand']
  #allocation3 [shape = 'f32[2,32]{1,0:T(2,128)}', space=vmem, size = 0x400, scoped, tag = 'scratch operand']
  %s0 = inlined_call_operand.vmem [shape: f32[8,2,128], index: 0, kind: input, shape index: {}]
  %s1 = inlined_call_operand.vmem [shape: f32[8,2,128], index: 1, kind: input, shape index: {}]
  %s2 = inlined_call_operand.vmem [shape: f32[32,128], index: 2, kind: input, shape index: {}]
  %s3 = inlined_call_operand.vmem [shape: f32[32,8], index: 3, kind: input, shape index: {}]
  %s4 = inlined_call_operand.vmem [shape: f32[32,8], index: 4, kind: input, shape index: {}]
  %s5 = inlined_call_operand.vmem [shape: f32[1,8], index: 5, kind: input, shape index: {}]
  %s6 = inlined_call_operand.hbm [shape: f32[2,8], index: 6, kind: output, shape index: {}]
  %s7 = sld [smem:[#allocation0]]
  $region42: #{bilstm_forward.7} parent=0
    _
  %s9 = ssub.s32 1, %s7
  %s10 = scalar_select 0, %s9, %s7
  $region1: #{bilstm_forward.7} parent=0
    #allocation4 [shape = 'u8[1024]{0}', space=vmem, size = 0x400, scoped, tag = 'output window, operand 0, single buffered']
    #allocation5 [shape = 's32[1]{0}', space=sflag, size = 0x4, scoped, tag = 'scoped memory for bilstm_forward.7']
    %11 = vsyncpa [#allocation5], 0
    // Predicated region
    $region2: #{bilstm_forward.7} parent=1 // pred_check
      _
    $region3: #{bilstm_forward.7} parent=1 // pred_check_branch
      %13 = sbr.rel (0) target = $region5
    $region4: #{bilstm_forward.7} parent=1 // pred_region
      _
    $region5: #{bilstm_forward.7} parent=1 // pred_fallthru
      _
    // Predicated region
    $region6: #{bilstm_forward.7} parent=1 // pred_check
      _
    $region7: #{bilstm_forward.7} parent=1 // pred_check_branch
      %15 = sbr.rel (0) target = $region9
    $region8: #{bilstm_forward.7} parent=1 // pred_region
      _
    $region9: #{bilstm_forward.7} parent=1 // pred_fallthru
      _
    // Predicated region
    $region10: #{bilstm_forward.7} parent=1 // pred_check
      _
    $region11: #{bilstm_forward.7} parent=1 // pred_check_branch
      %17 = sbr.rel (0) target = $region13
    $region12: #{bilstm_forward.7} parent=1 // pred_region
      _
    $region13: #{bilstm_forward.7} parent=1 // pred_fallthru
      _
    // Predicated region
    $region14: #{bilstm_forward.7} parent=1 // pred_check
      _
    $region15: #{bilstm_forward.7} parent=1 // pred_check_branch
      %19 = sbr.rel (0) target = $region17
    $region16: #{bilstm_forward.7} parent=1 // pred_region
      _
    $region17: #{bilstm_forward.7} parent=1 // pred_fallthru
      _
    // Predicated region
    $region18: #{bilstm_forward.7} parent=1 // pred_check
      _
    $region19: #{bilstm_forward.7} parent=1 // pred_check_branch
      %21 = sbr.rel (0) target = $region21
    $region20: #{bilstm_forward.7} parent=1 // pred_region
      _
    $region21: #{bilstm_forward.7} parent=1 // pred_fallthru
      _
    // Predicated region
    $region22: #{bilstm_forward.7} parent=1 // pred_check
      _
    $region23: #{bilstm_forward.7} parent=1 // pred_check_branch
      %23 = sbr.rel (0) target = $region25
    $region24: #{bilstm_forward.7} parent=1 // pred_region
      _
    $region25: #{bilstm_forward.7} parent=1 // pred_fallthru
      _
    %p24 = scmp.eq.s32.totalorder 0, 0
    // Predicated region
    $region26: #{bilstm_forward.7} parent=1 // pred_check
      %p25 = pneg %p24
    $region27: #{bilstm_forward.7} parent=1 // pred_check_branch
      %27 = sbr.rel (%p25) target = $region29
    $region28: #{bilstm_forward.7} parent=1 // pred_region
      %vm28 = vcmask 254976
      %29 = vst.msk [vmem:[#allocation2] sm:$0x3] %vm28, 0.0
      %30 = vst.msk [vmem:[#allocation3] sm:$0x3] %vm28, 0.0
    $region29: #{bilstm_forward.7} parent=1 // pred_fallthru
      _
    %v31 = vld [vmem:[%s2] sm:$0xff]
    %v32 = vld [vmem:[%s2 + $0x8] sm:$0xff]
    %v33 = vld [vmem:[%s2 + $0x10] sm:$0xff]
    %v34 = vld [vmem:[%s2 + $0x18] sm:$0xff]
    %v35 = vld [vmem:[#allocation2] sm:$0x3]
    %v36 = vld [vmem:[#allocation3] sm:$0x3]
    %v37 = vld [vmem:[%s0] sm:$0x3]
    %vm38 = vcmask 261120
    %v40 = vsel %vm38, %v35, 0
    %42 = vmatprep.subr.mxu0 0.0
    %43 = vmatpush1.msra.mxu0 %v31
    %44 = vmatprep.subr.mxu0 0.0
    %45 = vmatpush1.msra.mxu0 %v32
    %46 = vmatprep.subr.mxu0 0.0
    %47 = vmatpush1.msra.mxu0 %v33
    %48 = vmatprep.subr.mxu0 0.0
    %49 = vmatpush1.msra.mxu0 %v34
    %50 = vmatprep.subr.mxu0 0.0
    %51 = vmatpush1.msra.mxu0 0.0
    %52 = vmatprep.subr.mxu0 0.0
    %53 = vmatpush1.msra.mxu0 0.0
    %54 = vmatprep.subr.mxu0 0.0
    %55 = vmatpush1.msra.mxu0 0.0
    %56 = vmatprep.subr.mxu0 0.0
    %57 = vmatpush1.msra.mxu0 0.0
    %58 = vmatprep.subr.mxu0 0.0
    %59 = vmatpush1.msra.mxu0 0.0
    %60 = vmatprep.subr.mxu0 0.0
    %61 = vmatpush1.msra.mxu0 0.0
    %62 = vmatprep.subr.mxu0 0.0
    %63 = vmatpush1.msra.mxu0 0.0
    %64 = vmatprep.subr.mxu0 0.0
    %65 = vmatpush1.msra.mxu0 0.0
    %66 = vmatprep.subr.mxu0 0.0
    %67 = vmatpush1.msra.mxu0 0.0
    %68 = vmatprep.subr.mxu0 0.0
    %69 = vmatpush1.msra.mxu0 0.0
    %70 = vmatprep.subr.mxu0 0.0
    %71 = vmatpush1.msra.mxu0 0.0
    %72 = vmatprep.subr.mxu0 0.0
    %73 = vmatpush1.msra.mxu0 0.0
    %74 = vmatprep.subr.mxu0 0.0
    %75 = vmatpush1.msra.mxu0 0.0
    %76 = vmatprep.subr.mxu0 0.0
    %77 = vmatpush1.msra.mxu0 0.0
    %78 = vmatprep.subr.mxu0 0.0
    %79 = vmatpush1.msra.mxu0 0.0
    %80 = vmatprep.subr.mxu0 0.0
    %81 = vmatpush1.msra.mxu0 0.0
    %82 = vmatprep.subr.mxu0 0.0
    %83 = vmatpush1.msra.mxu0 0.0
    %84 = vmatprep.subr.mxu0 0.0
    %85 = vmatpush1.msra.mxu0 0.0
    %86 = vmatprep.subr.mxu0 0.0
    %87 = vmatpush1.msra.mxu0 0.0
    %88 = vmatprep.subr.mxu0 0.0
    %89 = vmatpush1.msra.mxu0 0.0
    %90 = vmatprep.subr.mxu0 0.0
    %91 = vmatpush1.msra.mxu0 0.0
    %92 = vmatprep.subr.mxu0 0.0
    %93 = vmatpush1.msra.mxu0 0.0
    %94 = vmatprep.subr.mxu0 0.0
    %95 = vmatpush1.msra.mxu0 0.0
    %96 = vmatprep.subr.mxu0 0.0
    %97 = vmatpush1.msra.mxu0 0.0
    %98 = vmatprep.subr.mxu0 0.0
    %99 = vmatpush1.msra.mxu0 0.0
    %100 = vmatprep.subr.mxu0 0.0
    %101 = vmatpush1.msra.mxu0 0.0
    %102 = vmatprep.subr.mxu0 0.0
    %103 = vmatpush1.msra.mxu0 0.0
    %104 = vmatprep.subr.mxu0 0.0
    %105 = vmatpush1.msra.mxu0 0.0
    %106 = vmatprep.mubr.f32.mxu0 0.0
    %107 = vmatmul.mubr.f32.gmra.mrb[0].mxu0 %v40
    %v108 = vpop.f32.mrb[0].mxu0
    %v109 = vadd.f32 0.0, %v108
    %v110 = vpop.f32.mrb[0].mxu0
    %111 = vdwg.mxu0
    %v112 = vadd.f32 %v37, %v109
    %v113 = vxor.u32 %v112, 2147483648
    %v114 = vmul.f32 %v113, 1.442695
    %v115 = vpow.pop %v114
    %v116 = vadd.f32 %v115, 1.0
    %v117 = vrcp.pop %v116
    %v118 = vmul.f32 1.0, %v117
    %v119 = vtanh.pop %v112
    %121 = vrot.lane.b32.xlu0 %v36, 32
    %v122 = vpop.permute.xlu0 %121
    %v124 = vmul.f32 %v118, %v122
    %126 = vrot.lane.b32.xlu0 %v119, 64
    %v127 = vpop.permute.xlu0 %126
    %v129 = vmul.f32 %v118, %v127
    %131 = vrot.lane.b32.xlu0 %v129, 32
    %v132 = vpop.permute.xlu0 %131
    %v134 = vadd.f32 %v124, %v132
    %v135 = vtanh.pop %v134
    %137 = vrot.lane.b32.xlu0 %v135, 64
    %v138 = vpop.permute.xlu0 %137
    %v140 = vmul.f32 %v118, %v138
    %s141 = scalar_lea.vmem %s0, 2
    %v142 = vld [vmem:[%s141] sm:$0x3]
    %144 = vrot.lane.b32.xlu0 %v140, 32
    %v145 = vpop.permute.xlu0 %144
    %v146 = vsel %vm38, %v145, 0
    %148 = vmatprep.subr.mxu0 0.0
    %149 = vmatpush1.msra.mxu0 %v31
    %150 = vmatprep.subr.mxu0 0.0
    %151 = vmatpush1.msra.mxu0 %v32
    %152 = vmatprep.subr.mxu0 0.0
    %153 = vmatpush1.msra.mxu0 %v33
    %154 = vmatprep.subr.mxu0 0.0
    %155 = vmatpush1.msra.mxu0 %v34
    %156 = vmatprep.subr.mxu0 0.0
    %157 = vmatpush1.msra.mxu0 0.0
    %158 = vmatprep.subr.mxu0 0.0
    %159 = vmatpush1.msra.mxu0 0.0
    %160 = vmatprep.subr.mxu0 0.0
    %161 = vmatpush1.msra.mxu0 0.0
    %162 = vmatprep.subr.mxu0 0.0
    %163 = vmatpush1.msra.mxu0 0.0
    %164 = vmatprep.subr.mxu0 0.0
    %165 = vmatpush1.msra.mxu0 0.0
    %166 = vmatprep.subr.mxu0 0.0
    %167 = vmatpush1.msra.mxu0 0.0
    %168 = vmatprep.subr.mxu0 0.0
    %169 = vmatpush1.msra.mxu0 0.0
    %170 = vmatprep.subr.mxu0 0.0
    %171 = vmatpush1.msra.mxu0 0.0
    %172 = vmatprep.subr.mxu0 0.0
    %173 = vmatpush1.msra.mxu0 0.0
    %174 = vmatprep.subr.mxu0 0.0
    %175 = vmatpush1.msra.mxu0 0.0
    %176 = vmatprep.subr.mxu0 0.0
    %177 = vmatpush1.msra.mxu0 0.0
    %178 = vmatprep.subr.mxu0 0.0
    %179 = vmatpush1.msra.mxu0 0.0
    %180 = vmatprep.subr.mxu0 0.0
    %181 = vmatpush1.msra.mxu0 0.0
    %182 = vmatprep.subr.mxu0 0.0
    %183 = vmatpush1.msra.mxu0 0.0
    %184 = vmatprep.subr.mxu0 0.0
    %185 = vmatpush1.msra.mxu0 0.0
    %186 = vmatprep.subr.mxu0 0.0
    %187 = vmatpush1.msra.mxu0 0.0
    %188 = vmatprep.subr.mxu0 0.0
    %189 = vmatpush1.msra.mxu0 0.0
    %190 = vmatprep.subr.mxu0 0.0
    %191 = vmatpush1.msra.mxu0 0.0
    %192 = vmatprep.subr.mxu0 0.0
    %193 = vmatpush1.msra.mxu0 0.0
    %194 = vmatprep.subr.mxu0 0.0
    %195 = vmatpush1.msra.mxu0 0.0
    %196 = vmatprep.subr.mxu0 0.0
    %197 = vmatpush1.msra.mxu0 0.0
    %198 = vmatprep.subr.mxu0 0.0
    %199 = vmatpush1.msra.mxu0 0.0
    %200 = vmatprep.subr.mxu0 0.0
    %201 = vmatpush1.msra.mxu0 0.0
    %202 = vmatprep.subr.mxu0 0.0
    %203 = vmatpush1.msra.mxu0 0.0
    %204 = vmatprep.subr.mxu0 0.0
    %205 = vmatpush1.msra.mxu0 0.0
    %206 = vmatprep.subr.mxu0 0.0
    %207 = vmatpush1.msra.mxu0 0.0
    %208 = vmatprep.subr.mxu0 0.0
    %209 = vmatpush1.msra.mxu0 0.0
    %210 = vmatprep.subr.mxu0 0.0
    %211 = vmatpush1.msra.mxu0 0.0
    %212 = vmatprep.mubr.f32.mxu0 0.0
    %213 = vmatmul.mubr.f32.gmra.mrb[0].mxu0 %v146
    %v214 = vpop.f32.mrb[0].mxu0
    %v215 = vadd.f32 0.0, %v214
    %v216 = vpop.f32.mrb[0].mxu0
    %217 = vdwg.mxu0
    %v218 = vadd.f32 %v142, %v215
    %v219 = vxor.u32 %v218, 2147483648
    %v220 = vmul.f32 %v219, 1.442695
    %v221 = vpow.pop %v220
    %v222 = vadd.f32 %v221, 1.0
    %v223 = vrcp.pop %v222
    %v224 = vmul.f32 1.0, %v223
    %v225 = vtanh.pop %v218
    %v226 = vmul.f32 %v224, %v134
    %228 = vrot.lane.b32.xlu0 %v225, 64
    %v229 = vpop.permute.xlu0 %228
    %v231 = vmul.f32 %v224, %v229
    %233 = vrot.lane.b32.xlu0 %v231, 32
    %v234 = vpop.permute.xlu0 %233
    %v236 = vadd.f32 %v226, %v234
    %v237 = vtanh.pop %v236
    %239 = vrot.lane.b32.xlu0 %v237, 64
    %v240 = vpop.permute.xlu0 %239
    %v242 = vmul.f32 %v224, %v240
    %s243 = scalar_lea.vmem %s0, 4
    %v244 = vld [vmem:[%s243] sm:$0x3]
    %246 = vrot.lane.b32.xlu0 %v242, 32
    %v247 = vpop.permute.xlu0 %246
    %v248 = vsel %vm38, %v247, 0
    %250 = vmatprep.subr.mxu0 0.0
    %251 = vmatpush1.msra.mxu0 %v31
    %252 = vmatprep.subr.mxu0 0.0
    %253 = vmatpush1.msra.mxu0 %v32
    %254 = vmatprep.subr.mxu0 0.0
    %255 = vmatpush1.msra.mxu0 %v33
    %256 = vmatprep.subr.mxu0 0.0
    %257 = vmatpush1.msra.mxu0 %v34
    %258 = vmatprep.subr.mxu0 0.0
    %259 = vmatpush1.msra.mxu0 0.0
    %260 = vmatprep.subr.mxu0 0.0
    %261 = vmatpush1.msra.mxu0 0.0
    %262 = vmatprep.subr.mxu0 0.0
    %263 = vmatpush1.msra.mxu0 0.0
    %264 = vmatprep.subr.mxu0 0.0
    %265 = vmatpush1.msra.mxu0 0.0
    %266 = vmatprep.subr.mxu0 0.0
    %267 = vmatpush1.msra.mxu0 0.0
    %268 = vmatprep.subr.mxu0 0.0
    %269 = vmatpush1.msra.mxu0 0.0
    %270 = vmatprep.subr.mxu0 0.0
    %271 = vmatpush1.msra.mxu0 0.0
    %272 = vmatprep.subr.mxu0 0.0
    %273 = vmatpush1.msra.mxu0 0.0
    %274 = vmatprep.subr.mxu0 0.0
    %275 = vmatpush1.msra.mxu0 0.0
    %276 = vmatprep.subr.mxu0 0.0
    %277 = vmatpush1.msra.mxu0 0.0
    %278 = vmatprep.subr.mxu0 0.0
    %279 = vmatpush1.msra.mxu0 0.0
    %280 = vmatprep.subr.mxu0 0.0
    %281 = vmatpush1.msra.mxu0 0.0
    %282 = vmatprep.subr.mxu0 0.0
    %283 = vmatpush1.msra.mxu0 0.0
    %284 = vmatprep.subr.mxu0 0.0
    %285 = vmatpush1.msra.mxu0 0.0
    %286 = vmatprep.subr.mxu0 0.0
    %287 = vmatpush1.msra.mxu0 0.0
    %288 = vmatprep.subr.mxu0 0.0
    %289 = vmatpush1.msra.mxu0 0.0
    %290 = vmatprep.subr.mxu0 0.0
    %291 = vmatpush1.msra.mxu0 0.0
    %292 = vmatprep.subr.mxu0 0.0
    %293 = vmatpush1.msra.mxu0 0.0
    %294 = vmatprep.subr.mxu0 0.0
    %295 = vmatpush1.msra.mxu0 0.0
    %296 = vmatprep.subr.mxu0 0.0
    %297 = vmatpush1.msra.mxu0 0.0
    %298 = vmatprep.subr.mxu0 0.0
    %299 = vmatpush1.msra.mxu0 0.0
    %300 = vmatprep.subr.mxu0 0.0
    %301 = vmatpush1.msra.mxu0 0.0
    %302 = vmatprep.subr.mxu0 0.0
    %303 = vmatpush1.msra.mxu0 0.0
    %304 = vmatprep.subr.mxu0 0.0
    %305 = vmatpush1.msra.mxu0 0.0
    %306 = vmatprep.subr.mxu0 0.0
    %307 = vmatpush1.msra.mxu0 0.0
    %308 = vmatprep.subr.mxu0 0.0
    %309 = vmatpush1.msra.mxu0 0.0
    %310 = vmatprep.subr.mxu0 0.0
    %311 = vmatpush1.msra.mxu0 0.0
    %312 = vmatprep.subr.mxu0 0.0
    %313 = vmatpush1.msra.mxu0 0.0
    %314 = vmatprep.mubr.f32.mxu0 0.0
    %315 = vmatmul.mubr.f32.gmra.mrb[0].mxu0 %v248
    %v316 = vpop.f32.mrb[0].mxu0
    %v317 = vadd.f32 0.0, %v316
    %v318 = vpop.f32.mrb[0].mxu0
    %319 = vdwg.mxu0
    %v320 = vadd.f32 %v244, %v317
    %v321 = vxor.u32 %v320, 2147483648
    %v322 = vmul.f32 %v321, 1.442695
    %v323 = vpow.pop %v322
    %v324 = vadd.f32 %v323, 1.0
    %v325 = vrcp.pop %v324
    %v326 = vmul.f32 1.0, %v325
    %v327 = vtanh.pop %v320
    %v328 = vmul.f32 %v326, %v236
    %330 = vrot.lane.b32.xlu0 %v327, 64
    %v331 = vpop.permute.xlu0 %330
    %v333 = vmul.f32 %v326, %v331
    %335 = vrot.lane.b32.xlu0 %v333, 32
    %v336 = vpop.permute.xlu0 %335
    %v338 = vadd.f32 %v328, %v336
    %v339 = vtanh.pop %v338
    %341 = vrot.lane.b32.xlu0 %v339, 64
    %v342 = vpop.permute.xlu0 %341
    %v344 = vmul.f32 %v326, %v342
    %s345 = scalar_lea.vmem %s0, 6
    %v346 = vld [vmem:[%s345] sm:$0x3]
    %348 = vrot.lane.b32.xlu0 %v344, 32
    %v349 = vpop.permute.xlu0 %348
    %v350 = vsel %vm38, %v349, 0
    %352 = vmatprep.subr.mxu0 0.0
    %353 = vmatpush1.msra.mxu0 %v31
    %354 = vmatprep.subr.mxu0 0.0
    %355 = vmatpush1.msra.mxu0 %v32
    %356 = vmatprep.subr.mxu0 0.0
    %357 = vmatpush1.msra.mxu0 %v33
    %358 = vmatprep.subr.mxu0 0.0
    %359 = vmatpush1.msra.mxu0 %v34
    %360 = vmatprep.subr.mxu0 0.0
    %361 = vmatpush1.msra.mxu0 0.0
    %362 = vmatprep.subr.mxu0 0.0
    %363 = vmatpush1.msra.mxu0 0.0
    %364 = vmatprep.subr.mxu0 0.0
    %365 = vmatpush1.msra.mxu0 0.0
    %366 = vmatprep.subr.mxu0 0.0
    %367 = vmatpush1.msra.mxu0 0.0
    %368 = vmatprep.subr.mxu0 0.0
    %369 = vmatpush1.msra.mxu0 0.0
    %370 = vmatprep.subr.mxu0 0.0
    %371 = vmatpush1.msra.mxu0 0.0
    %372 = vmatprep.subr.mxu0 0.0
    %373 = vmatpush1.msra.mxu0 0.0
    %374 = vmatprep.subr.mxu0 0.0
    %375 = vmatpush1.msra.mxu0 0.0
    %376 = vmatprep.subr.mxu0 0.0
    %377 = vmatpush1.msra.mxu0 0.0
    %378 = vmatprep.subr.mxu0 0.0
    %379 = vmatpush1.msra.mxu0 0.0
    %380 = vmatprep.subr.mxu0 0.0
    %381 = vmatpush1.msra.mxu0 0.0
    %382 = vmatprep.subr.mxu0 0.0
    %383 = vmatpush1.msra.mxu0 0.0
    %384 = vmatprep.subr.mxu0 0.0
    %385 = vmatpush1.msra.mxu0 0.0
    %386 = vmatprep.subr.mxu0 0.0
    %387 = vmatpush1.msra.mxu0 0.0
    %388 = vmatprep.subr.mxu0 0.0
    %389 = vmatpush1.msra.mxu0 0.0
    %390 = vmatprep.subr.mxu0 0.0
    %391 = vmatpush1.msra.mxu0 0.0
    %392 = vmatprep.subr.mxu0 0.0
    %393 = vmatpush1.msra.mxu0 0.0
    %394 = vmatprep.subr.mxu0 0.0
    %395 = vmatpush1.msra.mxu0 0.0
    %396 = vmatprep.subr.mxu0 0.0
    %397 = vmatpush1.msra.mxu0 0.0
    %398 = vmatprep.subr.mxu0 0.0
    %399 = vmatpush1.msra.mxu0 0.0
    %400 = vmatprep.subr.mxu0 0.0
    %401 = vmatpush1.msra.mxu0 0.0
    %402 = vmatprep.subr.mxu0 0.0
    %403 = vmatpush1.msra.mxu0 0.0
    %404 = vmatprep.subr.mxu0 0.0
    %405 = vmatpush1.msra.mxu0 0.0
    %406 = vmatprep.subr.mxu0 0.0
    %407 = vmatpush1.msra.mxu0 0.0
    %408 = vmatprep.subr.mxu0 0.0
    %409 = vmatpush1.msra.mxu0 0.0
    %410 = vmatprep.subr.mxu0 0.0
    %411 = vmatpush1.msra.mxu0 0.0
    %412 = vmatprep.subr.mxu0 0.0
    %413 = vmatpush1.msra.mxu0 0.0
    %414 = vmatprep.subr.mxu0 0.0
    %415 = vmatpush1.msra.mxu0 0.0
    %416 = vmatprep.mubr.f32.mxu0 0.0
    %417 = vmatmul.mubr.f32.gmra.mrb[0].mxu0 %v350
    %v418 = vpop.f32.mrb[0].mxu0
    %v419 = vadd.f32 0.0, %v418
    %v420 = vpop.f32.mrb[0].mxu0
    %421 = vdwg.mxu0
    %v422 = vadd.f32 %v346, %v419
    %v423 = vxor.u32 %v422, 2147483648
    %v424 = vmul.f32 %v423, 1.442695
    %v425 = vpow.pop %v424
    %v426 = vadd.f32 %v425, 1.0
    %v427 = vrcp.pop %v426
    %v428 = vmul.f32 1.0, %v427
    %v429 = vtanh.pop %v422
    %v430 = vmul.f32 %v428, %v338
    %432 = vrot.lane.b32.xlu0 %v429, 64
    %v433 = vpop.permute.xlu0 %432
    %v435 = vmul.f32 %v428, %v433
    %437 = vrot.lane.b32.xlu0 %v435, 32
    %v438 = vpop.permute.xlu0 %437
    %v440 = vadd.f32 %v430, %v438
    %v441 = vtanh.pop %v440
    %443 = vrot.lane.b32.xlu0 %v441, 64
    %v444 = vpop.permute.xlu0 %443
    %v446 = vmul.f32 %v428, %v444
    %s447 = scalar_lea.vmem %s0, 8
    %v448 = vld [vmem:[%s447] sm:$0x3]
    %450 = vrot.lane.b32.xlu0 %v446, 32
    %v451 = vpop.permute.xlu0 %450
    %v452 = vsel %vm38, %v451, 0
    %454 = vmatprep.subr.mxu0 0.0
    %455 = vmatpush1.msra.mxu0 %v31
    %456 = vmatprep.subr.mxu0 0.0
    %457 = vmatpush1.msra.mxu0 %v32
    %458 = vmatprep.subr.mxu0 0.0
    %459 = vmatpush1.msra.mxu0 %v33
    %460 = vmatprep.subr.mxu0 0.0
    %461 = vmatpush1.msra.mxu0 %v34
    %462 = vmatprep.subr.mxu0 0.0
    %463 = vmatpush1.msra.mxu0 0.0
    %464 = vmatprep.subr.mxu0 0.0
    %465 = vmatpush1.msra.mxu0 0.0
    %466 = vmatprep.subr.mxu0 0.0
    %467 = vmatpush1.msra.mxu0 0.0
    %468 = vmatprep.subr.mxu0 0.0
    %469 = vmatpush1.msra.mxu0 0.0
    %470 = vmatprep.subr.mxu0 0.0
    %471 = vmatpush1.msra.mxu0 0.0
    %472 = vmatprep.subr.mxu0 0.0
    %473 = vmatpush1.msra.mxu0 0.0
    %474 = vmatprep.subr.mxu0 0.0
    %475 = vmatpush1.msra.mxu0 0.0
    %476 = vmatprep.subr.mxu0 0.0
    %477 = vmatpush1.msra.mxu0 0.0
    %478 = vmatprep.subr.mxu0 0.0
    %479 = vmatpush1.msra.mxu0 0.0
    %480 = vmatprep.subr.mxu0 0.0
    %481 = vmatpush1.msra.mxu0 0.0
    %482 = vmatprep.subr.mxu0 0.0
    %483 = vmatpush1.msra.mxu0 0.0
    %484 = vmatprep.subr.mxu0 0.0
    %485 = vmatpush1.msra.mxu0 0.0
    %486 = vmatprep.subr.mxu0 0.0
    %487 = vmatpush1.msra.mxu0 0.0
    %488 = vmatprep.subr.mxu0 0.0
    %489 = vmatpush1.msra.mxu0 0.0
    %490 = vmatprep.subr.mxu0 0.0
    %491 = vmatpush1.msra.mxu0 0.0
    %492 = vmatprep.subr.mxu0 0.0
    %493 = vmatpush1.msra.mxu0 0.0
    %494 = vmatprep.subr.mxu0 0.0
    %495 = vmatpush1.msra.mxu0 0.0
    %496 = vmatprep.subr.mxu0 0.0
    %497 = vmatpush1.msra.mxu0 0.0
    %498 = vmatprep.subr.mxu0 0.0
    %499 = vmatpush1.msra.mxu0 0.0
    %500 = vmatprep.subr.mxu0 0.0
    %501 = vmatpush1.msra.mxu0 0.0
    %502 = vmatprep.subr.mxu0 0.0
    %503 = vmatpush1.msra.mxu0 0.0
    %504 = vmatprep.subr.mxu0 0.0
    %505 = vmatpush1.msra.mxu0 0.0
    %506 = vmatprep.subr.mxu0 0.0
    %507 = vmatpush1.msra.mxu0 0.0
    %508 = vmatprep.subr.mxu0 0.0
    %509 = vmatpush1.msra.mxu0 0.0
    %510 = vmatprep.subr.mxu0 0.0
    %511 = vmatpush1.msra.mxu0 0.0
    %512 = vmatprep.subr.mxu0 0.0
    %513 = vmatpush1.msra.mxu0 0.0
    %514 = vmatprep.subr.mxu0 0.0
    %515 = vmatpush1.msra.mxu0 0.0
    %516 = vmatprep.subr.mxu0 0.0
    %517 = vmatpush1.msra.mxu0 0.0
    %518 = vmatprep.mubr.f32.mxu0 0.0
    %519 = vmatmul.mubr.f32.gmra.mrb[0].mxu0 %v452
    %v520 = vpop.f32.mrb[0].mxu0
    %v521 = vadd.f32 0.0, %v520
    %v522 = vpop.f32.mrb[0].mxu0
    %523 = vdwg.mxu0
    %v524 = vadd.f32 %v448, %v521
    %v525 = vxor.u32 %v524, 2147483648
    %v526 = vmul.f32 %v525, 1.442695
    %v527 = vpow.pop %v526
    %v528 = vadd.f32 %v527, 1.0
    %v529 = vrcp.pop %v528
    %v530 = vmul.f32 1.0, %v529
    %v531 = vtanh.pop %v524
    %v532 = vmul.f32 %v530, %v440
    %534 = vrot.lane.b32.xlu0 %v531, 64
    %v535 = vpop.permute.xlu0 %534
    %v537 = vmul.f32 %v530, %v535
    %539 = vrot.lane.b32.xlu0 %v537, 32
    %v540 = vpop.permute.xlu0 %539
    %v542 = vadd.f32 %v532, %v540
    %v543 = vtanh.pop %v542
    %545 = vrot.lane.b32.xlu0 %v543, 64
    %v546 = vpop.permute.xlu0 %545
    %v548 = vmul.f32 %v530, %v546
    %s549 = scalar_lea.vmem %s0, 10
    %v550 = vld [vmem:[%s549] sm:$0x3]
    %552 = vrot.lane.b32.xlu0 %v548, 32
    %v553 = vpop.permute.xlu0 %552
    %v554 = vsel %vm38, %v553, 0
    %556 = vmatprep.subr.mxu0 0.0
    %557 = vmatpush1.msra.mxu0 %v31
    %558 = vmatprep.subr.mxu0 0.0
    %559 = vmatpush1.msra.mxu0 %v32
    %560 = vmatprep.subr.mxu0 0.0
    %561 = vmatpush1.msra.mxu0 %v33
    %562 = vmatprep.subr.mxu0 0.0
    %563 = vmatpush1.msra.mxu0 %v34
    %564 = vmatprep.subr.mxu0 0.0
    %565 = vmatpush1.msra.mxu0 0.0
    %566 = vmatprep.subr.mxu0 0.0
    %567 = vmatpush1.msra.mxu0 0.0
    %568 = vmatprep.subr.mxu0 0.0
    %569 = vmatpush1.msra.mxu0 0.0
    %570 = vmatprep.subr.mxu0 0.0
    %571 = vmatpush1.msra.mxu0 0.0
    %572 = vmatprep.subr.mxu0 0.0
    %573 = vmatpush1.msra.mxu0 0.0
    %574 = vmatprep.subr.mxu0 0.0
    %575 = vmatpush1.msra.mxu0 0.0
    %576 = vmatprep.subr.mxu0 0.0
    %577 = vmatpush1.msra.mxu0 0.0
    %578 = vmatprep.subr.mxu0 0.0
    %579 = vmatpush1.msra.mxu0 0.0
    %580 = vmatprep.subr.mxu0 0.0
    %581 = vmatpush1.msra.mxu0 0.0
    %582 = vmatprep.subr.mxu0 0.0
    %583 = vmatpush1.msra.mxu0 0.0
    %584 = vmatprep.subr.mxu0 0.0
    %585 = vmatpush1.msra.mxu0 0.0
    %586 = vmatprep.subr.mxu0 0.0
    %587 = vmatpush1.msra.mxu0 0.0
    %588 = vmatprep.subr.mxu0 0.0
    %589 = vmatpush1.msra.mxu0 0.0
    %590 = vmatprep.subr.mxu0 0.0
    %591 = vmatpush1.msra.mxu0 0.0
    %592 = vmatprep.subr.mxu0 0.0
    %593 = vmatpush1.msra.mxu0 0.0
    %594 = vmatprep.subr.mxu0 0.0
    %595 = vmatpush1.msra.mxu0 0.0
    %596 = vmatprep.subr.mxu0 0.0
    %597 = vmatpush1.msra.mxu0 0.0
    %598 = vmatprep.subr.mxu0 0.0
    %599 = vmatpush1.msra.mxu0 0.0
    %600 = vmatprep.subr.mxu0 0.0
    %601 = vmatpush1.msra.mxu0 0.0
    %602 = vmatprep.subr.mxu0 0.0
    %603 = vmatpush1.msra.mxu0 0.0
    %604 = vmatprep.subr.mxu0 0.0
    %605 = vmatpush1.msra.mxu0 0.0
    %606 = vmatprep.subr.mxu0 0.0
    %607 = vmatpush1.msra.mxu0 0.0
    %608 = vmatprep.subr.mxu0 0.0
    %609 = vmatpush1.msra.mxu0 0.0
    %610 = vmatprep.subr.mxu0 0.0
    %611 = vmatpush1.msra.mxu0 0.0
    %612 = vmatprep.subr.mxu0 0.0
    %613 = vmatpush1.msra.mxu0 0.0
    %614 = vmatprep.subr.mxu0 0.0
    %615 = vmatpush1.msra.mxu0 0.0
    %616 = vmatprep.subr.mxu0 0.0
    %617 = vmatpush1.msra.mxu0 0.0
    %618 = vmatprep.subr.mxu0 0.0
    %619 = vmatpush1.msra.mxu0 0.0
    %620 = vmatprep.mubr.f32.mxu0 0.0
    %621 = vmatmul.mubr.f32.gmra.mrb[0].mxu0 %v554
    %v622 = vpop.f32.mrb[0].mxu0
    %v623 = vadd.f32 0.0, %v622
    %v624 = vpop.f32.mrb[0].mxu0
    %625 = vdwg.mxu0
    %v626 = vadd.f32 %v550, %v623
    %v627 = vxor.u32 %v626, 2147483648
    %v628 = vmul.f32 %v627, 1.442695
    %v629 = vpow.pop %v628
    %v630 = vadd.f32 %v629, 1.0
    %v631 = vrcp.pop %v630
    %v632 = vmul.f32 1.0, %v631
    %v633 = vtanh.pop %v626
    %v634 = vmul.f32 %v632, %v542
    %636 = vrot.lane.b32.xlu0 %v633, 64
    %v637 = vpop.permute.xlu0 %636
    %v639 = vmul.f32 %v632, %v637
    %641 = vrot.lane.b32.xlu0 %v639, 32
    %v642 = vpop.permute.xlu0 %641
    %v644 = vadd.f32 %v634, %v642
    %v645 = vtanh.pop %v644
    %647 = vrot.lane.b32.xlu0 %v645, 64
    %v648 = vpop.permute.xlu0 %647
    %v650 = vmul.f32 %v632, %v648
    %s651 = scalar_lea.vmem %s0, 12
    %v652 = vld [vmem:[%s651] sm:$0x3]
    %654 = vrot.lane.b32.xlu0 %v650, 32
    %v655 = vpop.permute.xlu0 %654
    %v656 = vsel %vm38, %v655, 0
    %658 = vmatprep.subr.mxu0 0.0
    %659 = vmatpush1.msra.mxu0 %v31
    %660 = vmatprep.subr.mxu0 0.0
    %661 = vmatpush1.msra.mxu0 %v32
    %662 = vmatprep.subr.mxu0 0.0
    %663 = vmatpush1.msra.mxu0 %v33
    %664 = vmatprep.subr.mxu0 0.0
    %665 = vmatpush1.msra.mxu0 %v34
    %666 = vmatprep.subr.mxu0 0.0
    %667 = vmatpush1.msra.mxu0 0.0
    %668 = vmatprep.subr.mxu0 0.0
    %669 = vmatpush1.msra.mxu0 0.0
    %670 = vmatprep.subr.mxu0 0.0
    %671 = vmatpush1.msra.mxu0 0.0
    %672 = vmatprep.subr.mxu0 0.0
    %673 = vmatpush1.msra.mxu0 0.0
    %674 = vmatprep.subr.mxu0 0.0
    %675 = vmatpush1.msra.mxu0 0.0
    %676 = vmatprep.subr.mxu0 0.0
    %677 = vmatpush1.msra.mxu0 0.0
    %678 = vmatprep.subr.mxu0 0.0
    %679 = vmatpush1.msra.mxu0 0.0
    %680 = vmatprep.subr.mxu0 0.0
    %681 = vmatpush1.msra.mxu0 0.0
    %682 = vmatprep.subr.mxu0 0.0
    %683 = vmatpush1.msra.mxu0 0.0
    %684 = vmatprep.subr.mxu0 0.0
    %685 = vmatpush1.msra.mxu0 0.0
    %686 = vmatprep.subr.mxu0 0.0
    %687 = vmatpush1.msra.mxu0 0.0
    %688 = vmatprep.subr.mxu0 0.0
    %689 = vmatpush1.msra.mxu0 0.0
    %690 = vmatprep.subr.mxu0 0.0
    %691 = vmatpush1.msra.mxu0 0.0
    %692 = vmatprep.subr.mxu0 0.0
    %693 = vmatpush1.msra.mxu0 0.0
    %694 = vmatprep.subr.mxu0 0.0
    %695 = vmatpush1.msra.mxu0 0.0
    %696 = vmatprep.subr.mxu0 0.0
    %697 = vmatpush1.msra.mxu0 0.0
    %698 = vmatprep.subr.mxu0 0.0
    %699 = vmatpush1.msra.mxu0 0.0
    %700 = vmatprep.subr.mxu0 0.0
    %701 = vmatpush1.msra.mxu0 0.0
    %702 = vmatprep.subr.mxu0 0.0
    %703 = vmatpush1.msra.mxu0 0.0
    %704 = vmatprep.subr.mxu0 0.0
    %705 = vmatpush1.msra.mxu0 0.0
    %706 = vmatprep.subr.mxu0 0.0
    %707 = vmatpush1.msra.mxu0 0.0
    %708 = vmatprep.subr.mxu0 0.0
    %709 = vmatpush1.msra.mxu0 0.0
    %710 = vmatprep.subr.mxu0 0.0
    %711 = vmatpush1.msra.mxu0 0.0
    %712 = vmatprep.subr.mxu0 0.0
    %713 = vmatpush1.msra.mxu0 0.0
    %714 = vmatprep.subr.mxu0 0.0
    %715 = vmatpush1.msra.mxu0 0.0
    %716 = vmatprep.subr.mxu0 0.0
    %717 = vmatpush1.msra.mxu0 0.0
    %718 = vmatprep.subr.mxu0 0.0
    %719 = vmatpush1.msra.mxu0 0.0
    %720 = vmatprep.subr.mxu0 0.0
    %721 = vmatpush1.msra.mxu0 0.0
    %722 = vmatprep.mubr.f32.mxu0 0.0
    %723 = vmatmul.mubr.f32.gmra.mrb[0].mxu0 %v656
    %v724 = vpop.f32.mrb[0].mxu0
    %v725 = vadd.f32 0.0, %v724
    %v726 = vpop.f32.mrb[0].mxu0
    %727 = vdwg.mxu0
    %v728 = vadd.f32 %v652, %v725
    %v729 = vxor.u32 %v728, 2147483648
    %v730 = vmul.f32 %v729, 1.442695
    %v731 = vpow.pop %v730
    %v732 = vadd.f32 %v731, 1.0
    %v733 = vrcp.pop %v732
    %v734 = vmul.f32 1.0, %v733
    %v735 = vtanh.pop %v728
    %v736 = vmul.f32 %v734, %v644
    %738 = vrot.lane.b32.xlu0 %v735, 64
    %v739 = vpop.permute.xlu0 %738
    %v741 = vmul.f32 %v734, %v739
    %743 = vrot.lane.b32.xlu0 %v741, 32
    %v744 = vpop.permute.xlu0 %743
    %v746 = vadd.f32 %v736, %v744
    %v747 = vtanh.pop %v746
    %749 = vrot.lane.b32.xlu0 %v747, 64
    %v750 = vpop.permute.xlu0 %749
    %v752 = vmul.f32 %v734, %v750
    %s753 = scalar_lea.vmem %s0, 14
    %v754 = vld [vmem:[%s753] sm:$0x3]
    %756 = vrot.lane.b32.xlu0 %v752, 32
    %v757 = vpop.permute.xlu0 %756
    %v758 = vsel %vm38, %v757, 0
    %760 = vmatprep.subr.mxu0 0.0
    %761 = vmatpush1.msra.mxu0 %v31
    %762 = vmatprep.subr.mxu0 0.0
    %763 = vmatpush1.msra.mxu0 %v32
    %764 = vmatprep.subr.mxu0 0.0
    %765 = vmatpush1.msra.mxu0 %v33
    %766 = vmatprep.subr.mxu0 0.0
    %767 = vmatpush1.msra.mxu0 %v34
    %768 = vmatprep.subr.mxu0 0.0
    %769 = vmatpush1.msra.mxu0 0.0
    %770 = vmatprep.subr.mxu0 0.0
    %771 = vmatpush1.msra.mxu0 0.0
    %772 = vmatprep.subr.mxu0 0.0
    %773 = vmatpush1.msra.mxu0 0.0
    %774 = vmatprep.subr.mxu0 0.0
    %775 = vmatpush1.msra.mxu0 0.0
    %776 = vmatprep.subr.mxu0 0.0
    %777 = vmatpush1.msra.mxu0 0.0
    %778 = vmatprep.subr.mxu0 0.0
    %779 = vmatpush1.msra.mxu0 0.0
    %780 = vmatprep.subr.mxu0 0.0
    %781 = vmatpush1.msra.mxu0 0.0
    %782 = vmatprep.subr.mxu0 0.0
    %783 = vmatpush1.msra.mxu0 0.0
    %784 = vmatprep.subr.mxu0 0.0
    %785 = vmatpush1.msra.mxu0 0.0
    %786 = vmatprep.subr.mxu0 0.0
    %787 = vmatpush1.msra.mxu0 0.0
    %788 = vmatprep.subr.mxu0 0.0
    %789 = vmatpush1.msra.mxu0 0.0
    %790 = vmatprep.subr.mxu0 0.0
    %791 = vmatpush1.msra.mxu0 0.0
    %792 = vmatprep.subr.mxu0 0.0
    %793 = vmatpush1.msra.mxu0 0.0
    %794 = vmatprep.subr.mxu0 0.0
    %795 = vmatpush1.msra.mxu0 0.0
    %796 = vmatprep.subr.mxu0 0.0
    %797 = vmatpush1.msra.mxu0 0.0
    %798 = vmatprep.subr.mxu0 0.0
    %799 = vmatpush1.msra.mxu0 0.0
    %800 = vmatprep.subr.mxu0 0.0
    %801 = vmatpush1.msra.mxu0 0.0
    %802 = vmatprep.subr.mxu0 0.0
    %803 = vmatpush1.msra.mxu0 0.0
    %804 = vmatprep.subr.mxu0 0.0
    %805 = vmatpush1.msra.mxu0 0.0
    %806 = vmatprep.subr.mxu0 0.0
    %807 = vmatpush1.msra.mxu0 0.0
    %808 = vmatprep.subr.mxu0 0.0
    %809 = vmatpush1.msra.mxu0 0.0
    %810 = vmatprep.subr.mxu0 0.0
    %811 = vmatpush1.msra.mxu0 0.0
    %812 = vmatprep.subr.mxu0 0.0
    %813 = vmatpush1.msra.mxu0 0.0
    %814 = vmatprep.subr.mxu0 0.0
    %815 = vmatpush1.msra.mxu0 0.0
    %816 = vmatprep.subr.mxu0 0.0
    %817 = vmatpush1.msra.mxu0 0.0
    %818 = vmatprep.subr.mxu0 0.0
    %819 = vmatpush1.msra.mxu0 0.0
    %820 = vmatprep.subr.mxu0 0.0
    %821 = vmatpush1.msra.mxu0 0.0
    %822 = vmatprep.subr.mxu0 0.0
    %823 = vmatpush1.msra.mxu0 0.0
    %824 = vmatprep.mubr.f32.mxu0 0.0
    %825 = vmatmul.mubr.f32.gmra.mrb[0].mxu0 %v758
    %v826 = vpop.f32.mrb[0].mxu0
    %v827 = vadd.f32 0.0, %v826
    %v828 = vpop.f32.mrb[0].mxu0
    %829 = vdwg.mxu0
    %v830 = vadd.f32 %v754, %v827
    %v831 = vxor.u32 %v830, 2147483648
    %v832 = vmul.f32 %v831, 1.442695
    %v833 = vpow.pop %v832
    %v834 = vadd.f32 %v833, 1.0
    %v835 = vrcp.pop %v834
    %v836 = vmul.f32 1.0, %v835
    %v837 = vtanh.pop %v830
    %v838 = vmul.f32 %v836, %v746
    %840 = vrot.lane.b32.xlu0 %v837, 64
    %v841 = vpop.permute.xlu0 %840
    %v843 = vmul.f32 %v836, %v841
    %845 = vrot.lane.b32.xlu0 %v843, 32
    %v846 = vpop.permute.xlu0 %845
    %v848 = vadd.f32 %v838, %v846
    %v849 = vtanh.pop %v848
    %851 = vrot.lane.b32.xlu0 %v849, 64
    %v852 = vpop.permute.xlu0 %851
    %v854 = vmul.f32 %v836, %v852
    %856 = vrot.lane.b32.xlu0 %v854, 32
    %v857 = vpop.permute.xlu0 %856
    %vm859 = vcmask 254976
    %860 = vst.msk [vmem:[#allocation2] sm:$0x3] %vm859, %v857
    %862 = vrot.lane.b32.xlu0 %v848, 96
    %v863 = vpop.permute.xlu0 %862
    %865 = vst.msk [vmem:[#allocation3] sm:$0x3] %vm859, %v863
    // Predicated region
    $region30: #{bilstm_forward.7} parent=1 // pred_check
      %p866 = pneg %p24
    $region31: #{bilstm_forward.7} parent=1 // pred_check_branch
      %868 = sbr.rel (%p866) target = $region33
    $region32: #{bilstm_forward.7} parent=1 // pred_region
      %s869 = scalar_lea.vmem %s1, 14
      %v870 = vld [vmem:[%s869] sm:$0x3]
      %v871 = vxor.u32 %v870, 2147483648
      %v872 = vmul.f32 %v871, 1.442695
      %v873 = vpow.pop %v872
      %v874 = vadd.f32 %v873, 1.0
      %v875 = vrcp.pop %v874
      %v876 = vmul.f32 1.0, %v875
      %v877 = vtanh.pop %v870
      %879 = vrot.lane.b32.xlu0 %v877, 64
      %v880 = vpop.permute.xlu0 %879
      %v882 = vmul.f32 %v876, %v880
      %v883 = vtanh.pop %v882
      %885 = vrot.lane.b32.xlu0 %v883, 96
      %v886 = vpop.permute.xlu0 %885
      %v888 = vmul.f32 %v876, %v886
      %v889 = vld [vmem:[%s3] sm:$0xff]
      %v890 = vld [vmem:[%s3 + $0x8] sm:$0xff]
      %v891 = vld [vmem:[%s3 + $0x10] sm:$0xff]
      %v892 = vld [vmem:[%s3 + $0x18] sm:$0xff]
      %v893 = vld [vmem:[%s4] sm:$0xff]
      %v894 = vld [vmem:[%s4 + $0x8] sm:$0xff]
      %v895 = vld [vmem:[%s4 + $0x10] sm:$0xff]
      %v896 = vld [vmem:[%s4 + $0x18] sm:$0xff]
      %898 = vrot.lane.b32.xlu0 %v888, 32
      %v899 = vpop.permute.xlu0 %898
      %v900 = vsel %vm38, %v899, 0
      %902 = vmatprep.subr.mxu0 0.0
      %903 = vmatpush1.msra.mxu0 %v893
      %904 = vmatprep.subr.mxu0 0.0
      %905 = vmatpush1.msra.mxu0 %v894
      %906 = vmatprep.subr.mxu0 0.0
      %907 = vmatpush1.msra.mxu0 %v895
      %908 = vmatprep.subr.mxu0 0.0
      %909 = vmatpush1.msra.mxu0 %v896
      %910 = vmatprep.subr.mxu0 0.0
      %911 = vmatpush1.msra.mxu0 0.0
      %912 = vmatprep.subr.mxu0 0.0
      %913 = vmatpush1.msra.mxu0 0.0
      %914 = vmatprep.subr.mxu0 0.0
      %915 = vmatpush1.msra.mxu0 0.0
      %916 = vmatprep.subr.mxu0 0.0
      %917 = vmatpush1.msra.mxu0 0.0
      %918 = vmatprep.subr.mxu0 0.0
      %919 = vmatpush1.msra.mxu0 0.0
      %920 = vmatprep.subr.mxu0 0.0
      %921 = vmatpush1.msra.mxu0 0.0
      %922 = vmatprep.subr.mxu0 0.0
      %923 = vmatpush1.msra.mxu0 0.0
      %924 = vmatprep.subr.mxu0 0.0
      %925 = vmatpush1.msra.mxu0 0.0
      %926 = vmatprep.subr.mxu0 0.0
      %927 = vmatpush1.msra.mxu0 0.0
      %928 = vmatprep.subr.mxu0 0.0
      %929 = vmatpush1.msra.mxu0 0.0
      %930 = vmatprep.subr.mxu0 0.0
      %931 = vmatpush1.msra.mxu0 0.0
      %932 = vmatprep.subr.mxu0 0.0
      %933 = vmatpush1.msra.mxu0 0.0
      %934 = vmatprep.subr.mxu0 0.0
      %935 = vmatpush1.msra.mxu0 0.0
      %936 = vmatprep.subr.mxu0 0.0
      %937 = vmatpush1.msra.mxu0 0.0
      %938 = vmatprep.subr.mxu0 0.0
      %939 = vmatpush1.msra.mxu0 0.0
      %940 = vmatprep.subr.mxu0 0.0
      %941 = vmatpush1.msra.mxu0 0.0
      %942 = vmatprep.subr.mxu0 0.0
      %943 = vmatpush1.msra.mxu0 0.0
      %944 = vmatprep.subr.mxu0 0.0
      %945 = vmatpush1.msra.mxu0 0.0
      %946 = vmatprep.subr.mxu0 0.0
      %947 = vmatpush1.msra.mxu0 0.0
      %948 = vmatprep.subr.mxu0 0.0
      %949 = vmatpush1.msra.mxu0 0.0
      %950 = vmatprep.subr.mxu0 0.0
      %951 = vmatpush1.msra.mxu0 0.0
      %952 = vmatprep.subr.mxu0 0.0
      %953 = vmatpush1.msra.mxu0 0.0
      %954 = vmatprep.subr.mxu0 0.0
      %955 = vmatpush1.msra.mxu0 0.0
      %956 = vmatprep.subr.mxu0 0.0
      %957 = vmatpush1.msra.mxu0 0.0
      %958 = vmatprep.subr.mxu0 0.0
      %959 = vmatpush1.msra.mxu0 0.0
      %960 = vmatprep.subr.mxu0 0.0
      %961 = vmatpush1.msra.mxu0 0.0
      %962 = vmatprep.subr.mxu0 0.0
      %963 = vmatpush1.msra.mxu0 0.0
      %964 = vmatprep.subr.mxu0 0.0
      %965 = vmatpush1.msra.mxu0 0.0
      %966 = vmatprep.mubr.f32.mxu0 0.0
      %967 = vmatmul.mubr.f32.gmra.mrb[0].mxu0 %v900
      %v968 = vpop.f32.mrb[0].mxu0
      %v969 = vadd.f32 0.0, %v968
      %v970 = vpop.f32.mrb[0].mxu0
      %971 = vdwg.mxu0
      %v972 = vsel %vm38, %v857, 0
      %974 = vmatprep.subr.mxu0 0.0
      %975 = vmatpush1.msra.mxu0 %v889
      %976 = vmatprep.subr.mxu0 0.0
      %977 = vmatpush1.msra.mxu0 %v890
      %978 = vmatprep.subr.mxu0 0.0
      %979 = vmatpush1.msra.mxu0 %v891
      %980 = vmatprep.subr.mxu0 0.0
      %981 = vmatpush1.msra.mxu0 %v892
      %982 = vmatprep.subr.mxu0 0.0
      %983 = vmatpush1.msra.mxu0 0.0
      %984 = vmatprep.subr.mxu0 0.0
      %985 = vmatpush1.msra.mxu0 0.0
      %986 = vmatprep.subr.mxu0 0.0
      %987 = vmatpush1.msra.mxu0 0.0
      %988 = vmatprep.subr.mxu0 0.0
      %989 = vmatpush1.msra.mxu0 0.0
      %990 = vmatprep.subr.mxu0 0.0
      %991 = vmatpush1.msra.mxu0 0.0
      %992 = vmatprep.subr.mxu0 0.0
      %993 = vmatpush1.msra.mxu0 0.0
      %994 = vmatprep.subr.mxu0 0.0
      %995 = vmatpush1.msra.mxu0 0.0
      %996 = vmatprep.subr.mxu0 0.0
      %997 = vmatpush1.msra.mxu0 0.0
      %998 = vmatprep.subr.mxu0 0.0
      %999 = vmatpush1.msra.mxu0 0.0
      %1000 = vmatprep.subr.mxu0 0.0
      %1001 = vmatpush1.msra.mxu0 0.0
      %1002 = vmatprep.subr.mxu0 0.0
      %1003 = vmatpush1.msra.mxu0 0.0
      %1004 = vmatprep.subr.mxu0 0.0
      %1005 = vmatpush1.msra.mxu0 0.0
      %1006 = vmatprep.subr.mxu0 0.0
      %1007 = vmatpush1.msra.mxu0 0.0
      %1008 = vmatprep.subr.mxu0 0.0
      %1009 = vmatpush1.msra.mxu0 0.0
      %1010 = vmatprep.subr.mxu0 0.0
      %1011 = vmatpush1.msra.mxu0 0.0
      %1012 = vmatprep.subr.mxu0 0.0
      %1013 = vmatpush1.msra.mxu0 0.0
      %1014 = vmatprep.subr.mxu0 0.0
      %1015 = vmatpush1.msra.mxu0 0.0
      %1016 = vmatprep.subr.mxu0 0.0
      %1017 = vmatpush1.msra.mxu0 0.0
      %1018 = vmatprep.subr.mxu0 0.0
      %1019 = vmatpush1.msra.mxu0 0.0
      %1020 = vmatprep.subr.mxu0 0.0
      %1021 = vmatpush1.msra.mxu0 0.0
      %1022 = vmatprep.subr.mxu0 0.0
      %1023 = vmatpush1.msra.mxu0 0.0
      %1024 = vmatprep.subr.mxu0 0.0
      %1025 = vmatpush1.msra.mxu0 0.0
      %1026 = vmatprep.subr.mxu0 0.0
      %1027 = vmatpush1.msra.mxu0 0.0
      %1028 = vmatprep.subr.mxu0 0.0
      %1029 = vmatpush1.msra.mxu0 0.0
      %1030 = vmatprep.subr.mxu0 0.0
      %1031 = vmatpush1.msra.mxu0 0.0
      %1032 = vmatprep.subr.mxu0 0.0
      %1033 = vmatpush1.msra.mxu0 0.0
      %1034 = vmatprep.subr.mxu0 0.0
      %1035 = vmatpush1.msra.mxu0 0.0
      %1036 = vmatprep.subr.mxu0 0.0
      %1037 = vmatpush1.msra.mxu0 0.0
      %1038 = vmatprep.mubr.f32.mxu0 0.0
      %1039 = vmatmul.mubr.f32.gmra.mrb[0].mxu0 %v972
      %v1040 = vpop.f32.mrb[0].mxu0
      %v1041 = vadd.f32 %v969, %v1040
      %v1042 = vpop.f32.mrb[0].mxu0
      %1043 = vdwg.mxu0
      %v1044 = vld [vmem:[%s5] sm:$0x1]
      %v1046 = vlaneseq
      %v1047 = vshrl.u32 %v1046, 7
      %v1048 = vsub.s32 0, %v1047
      %v1049 = vrot.slane %v1044, %v1048
      %v1051 = vadd.f32 %v1041, %v1049
      %vm1052 = vcmask 58368
      %1053 = vst.msk [vmem:[#allocation4] sm:$0x3] %vm1052, %v1051
    $region33: #{bilstm_forward.7} parent=1 // pred_fallthru
      _
    // Predicated region
    $region34: #{bilstm_forward.7} parent=1 // pred_check
      _
    $region35: #{bilstm_forward.7} parent=1 // pred_check_branch
      %1055 = sbr.rel (0) target = $region37
    $region36: #{bilstm_forward.7} parent=1 // pred_region
      %s1057 = ssub.s32 32, 32
      %1058 = vsyncadd [#allocation5], %s1057
      %s1060 = sshll.u32 [#allocation4], 4
      %s1061 = int_to_ptr.vmem [resolvable:$true] %s1060
      %1063 = dma.vmem_to_hbm [thread:$0]  %s1061, 32, %s6, [#allocation5]
    $region37: #{bilstm_forward.7} parent=1 // pred_fallthru
      _
    // Predicated region
    $region38: #{bilstm_forward.7} parent=1 // pred_check
      _
    $region39: #{bilstm_forward.7} parent=1 // pred_check_branch
      %1065 = sbr.rel (0) target = $region41
    $region40: #{bilstm_forward.7} parent=1 // pred_region
      %1066 = dma.done [#allocation5], 32
    $region41: #{bilstm_forward.7} parent=1 // pred_fallthru
      _
    %1067 = vsyncpa [#allocation5], 1

</llo_original>
